<compile_context>
chip_gen: v7x
topology: tpu7x:2x2x1
jax: 0.10.0
libtpu: 0.0.40
codegen_flags: <defaults>
</compile_context>

<pallas_src>
import functools

import jax
import jax.numpy as jnp
from jax.experimental import pallas as pl
from jax.experimental.pallas import tpu as pltpu


def _cnn_block_kernel(x_ref, w_ref, bias_ref, o_ref, *,
                      ksize, stride, h_out, w_out, relu):
    """One batch-block per grid step.

    x_ref:    (NB, Hp, Wp, Cin)       padded input block (bf16, VMEM)
    w_ref:    (K*K, Cin, Cout_p)      BN-folded weights  (bf16, VMEM)
    bias_ref: (1, Cout_p)             folded conv-bias + BN shift (f32)
    o_ref:    (NB*Ho*Wo, Cout_p)      lane-dense output block
    """
    nb = x_ref.shape[0]
    c_in = x_ref.shape[-1]
    m = nb * h_out * w_out

    # No lane-axis im2col: contract each of the K*K taps with its own
    # (Cin, Cout_p) weight slab and sum the f32 partials.  The body is just
    # vmatmul pushes + a lane-dense f32 epilogue; no concat/reshape relayouts.
    acc = None
    for kh in range(ksize):
        for kw in range(ksize):
            if stride == 1:
                tap = x_ref[:, kh:kh + h_out, kw:kw + w_out, :]
            else:
                # Strided window read straight from the ref: no full-block
                # second materialization, no gather-after-full-load.
                tap = x_ref[:, pl.ds(kh, h_out, stride=stride),
                            pl.ds(kw, w_out, stride=stride), :]
            partial = jnp.dot(tap.reshape(m, c_in), w_ref[kh * ksize + kw],
                              preferred_element_type=jnp.float32)
            acc = partial if acc is None else acc + partial

    y = acc + bias_ref[...]              # f32 epilogue (v5e VPU has no bf16)
    if relu:
        y = jnp.maximum(y, 0.0)
    o_ref[...] = y.astype(o_ref.dtype)


def _device_budgets():
    """(per-step VMEM budget for block picking, explicit scoped-VMEM limit)."""
    try:
        kind = jax.devices()[0].device_kind.lower()
    except Exception:
        kind = ""
    if "v6" in kind:                   # v6e: 128 MiB VMEM (default scoped 32 MiB)
        return 22 << 20, 96 << 20
    if "v5" in kind:                   # v5e/v5p: 128 MiB VMEM (default scoped 16 MiB)
        return 14 << 20, 64 << 20
    if "v7" in kind or "7x" in kind:   # v7x: only 64 MiB VMEM per TensorCore
        return 16 << 20, 48 << 20
    return 8 << 20, None               # unknown chip: stay under the default limit


def _block_bytes(nb, *, hp, wp, c_in, h_out, w_out, c_out_p, ksize, out_bytes):
    """Real per-step VMEM footprint, including double-buffering + temps."""
    m = nb * h_out * w_out
    x_blk = nb * hp * wp * c_in * 2                 # bf16 input block
    o_blk = m * c_out_p * out_bytes                 # output block
    w_blk = ksize * ksize * c_in * c_out_p * 2      # bf16 folded weights
    b_blk = c_out_p * 4                             # f32 bias
    pipelined = 2 * (x_blk + o_blk + w_blk + b_blk)  # BlockSpec double-buffers
    # In-kernel intermediates: f32 accumulator + epilogue temp, a couple of
    # in-flight bf16 tap copies.
    interm = 2 * m * c_out_p * 4 + 2 * m * c_in * 2
    return pipelined + interm


def _pick_batch_block(n, rows_per_img, block_bytes_fn, budget, min_steps):
    """Largest batch block that fits the budget, keeping >= min_steps grid steps."""
    divisors = [d for d in range(1, n + 1) if n % d == 0]

    def legal(d):
        # Output block rows must be a multiple of 8 unless the block covers the
        # whole flattened output.
        return (n // d == 1) or (d * rows_per_img) % 8 == 0

    fitting = [d for d in divisors if legal(d) and block_bytes_fn(d) <= budget]
    preferred = [d for d in fitting if n // d >= min_steps]
    if preferred:
        return max(preferred)
    if fitting:
        return max(fitting)
    # Nothing fits the per-step budget: fall back to the smallest legal block
    # and rely on the explicit vmem_limit_bytes.
    # TODO(synk): row-halo tiling over h_out (with a (K-1)-row input halo) for
    # inputs whose single-image block exceeds VMEM (matters most on v7x's
    # 64 MiB/TC).
    legal_divs = [d for d in divisors if legal(d)]
    return min(legal_divs) if legal_divs else n


def _fold_bn(weight_hwio, conv_bias, gamma, beta, running_mean, running_var,
             *, bn, eps, c_out_p):
    """Fold BN(eval) + conv bias into (K*K, Cin, Cout_p) bf16 weights + f32 bias."""
    k = weight_hwio.shape[0]
    c_in = weight_hwio.shape[2]
    c_out = weight_hwio.shape[3]
    if bn:
        scale = gamma * jax.lax.rsqrt(running_var + eps)      # (Cout,)
        bias = beta + (conv_bias - running_mean) * scale      # (Cout,)
    else:
        scale = jnp.ones((c_out,), jnp.float32)
        bias = conv_bias.astype(jnp.float32)
    # conv(x, w) * scale == conv(x, w * scale): fold BN scale into the weights.
    w_folded = weight_hwio.astype(jnp.float32) * scale        # (K,K,Cin,Cout)
    w3d = w_folded.reshape(k * k, c_in, c_out)
    w3d = jnp.pad(w3d, ((0, 0), (0, 0), (0, c_out_p - c_out))).astype(jnp.bfloat16)
    bias_p = jnp.pad(bias.astype(jnp.float32),
                     (0, c_out_p - c_out)).reshape(1, c_out_p)
    return w3d, bias_p


def _cnn_block_nhwc(x_pad, w3d, bias_p, *, ksize, stride, h_out, w_out,
                    relu, out_dtype, c_out):
    """Padded-NHWC bf16 input -> (N, Ho, Wo, Cout_p) output (chain-friendly)."""
    n, hp, wp, c_in = x_pad.shape
    c_out_p = w3d.shape[-1]
    out_bytes = jnp.dtype(out_dtype).itemsize

    budget, vmem_limit = _device_budgets()
    block_bytes = functools.partial(
        _block_bytes, hp=hp, wp=wp, c_in=c_in, h_out=h_out, w_out=w_out,
        c_out_p=c_out_p, ksize=ksize, out_bytes=out_bytes)
    # Keep >= 2 grid steps on the 'parallel' batch axis so v7x's two
    # TensorCores both get work (harmless on single-TC v5e/v6e).
    nb = _pick_batch_block(n, h_out * w_out, block_bytes, budget,
                           min_steps=2 if n >= 2 else 1)
    grid = (n // nb,)

    kernel = functools.partial(
        _cnn_block_kernel, ksize=ksize, stride=stride,
        h_out=h_out, w_out=w_out, relu=relu)

    flops = 2 * n * h_out * w_out * ksize * ksize * c_in * c_out
    bytes_accessed = (x_pad.size * 2 + w3d.size * 2 + bias_p.size * 4
                      + n * h_out * w_out * c_out_p * out_bytes)

    compiler_kwargs = dict(dimension_semantics=("parallel",))
    if vmem_limit is not None:
        compiler_kwargs["vmem_limit_bytes"] = vmem_limit

    out2d = pl.pallas_call(
        kernel,
        out_shape=jax.ShapeDtypeStruct((n * h_out * w_out, c_out_p), out_dtype),
        grid_spec=pltpu.PrefetchScalarGridSpec(
            num_scalar_prefetch=0,
            grid=grid,
            in_specs=[
                pl.BlockSpec((nb, hp, wp, c_in), lambda b: (b, 0, 0, 0)),
                pl.BlockSpec((ksize * ksize, c_in, c_out_p),
                             lambda b: (0, 0, 0)),
                pl.BlockSpec((1, c_out_p), lambda b: (0, 0)),
            ],
            out_specs=pl.BlockSpec((nb * h_out * w_out, c_out_p),
                                   lambda b: (b, 0)),
        ),
        compiler_params=pltpu.CompilerParams(**compiler_kwargs),
        cost_estimate=pl.CostEstimate(
            flops=flops, transcendentals=0, bytes_accessed=bytes_accessed),
    )(x_pad, w3d, bias_p)

    return out2d.reshape(n, h_out, w_out, c_out_p)


def cnn_block_forward(x_nchw, weight_hwio, conv_bias, gamma, beta,
                      running_mean, running_var, *,
                      stride=1, relu=True, same_padding=False, bn=False,
                      eps=1e-3, out_dtype=None):
    """Forward pass matching the PyTorch CNNBlock (BN in eval mode, eps=1e-3).

    NOTE: when chaining CNNBlocks, call `_cnn_block_nhwc` directly on
    padded-NHWC bf16 activations with out_dtype=bf16 so the transpose / pad /
    channel-slice round trips below only happen at model boundaries.
    """
    n, c_in, h, w = x_nchw.shape
    k = weight_hwio.shape[0]
    c_out = weight_hwio.shape[-1]
    pad = (k - 1) // 2 if same_padding else 0
    h_out = (h + 2 * pad - k) // stride + 1
    w_out = (w + 2 * pad - k) // stride + 1
    # Lane-dense output: pad Cout to the next multiple of 128 (no further).
    c_out_p = ((c_out + 127) // 128) * 128
    out_dtype = x_nchw.dtype if out_dtype is None else out_dtype

    # ---- host-side glue: layout, spatial zero-pad, bf16 cast, BN folding ----
    x_nhwc = jnp.transpose(x_nchw, (0, 2, 3, 1))
    x_pad = jnp.pad(x_nhwc, ((0, 0), (pad, pad), (pad, pad), (0, 0)))
    x_pad = x_pad.astype(jnp.bfloat16)

    w3d, bias_p = _fold_bn(weight_hwio, conv_bias, gamma, beta,
                           running_mean, running_var,
                           bn=bn, eps=eps, c_out_p=c_out_p)

    out_nhwc = _cnn_block_nhwc(x_pad, w3d, bias_p, ksize=k, stride=stride,
                               h_out=h_out, w_out=w_out, relu=relu,
                               out_dtype=out_dtype, c_out=c_out)
    out_nhwc = out_nhwc[..., :c_out]
    return jnp.transpose(out_nhwc, (0, 3, 1, 2))


def _reference_forward(x_nchw, weight_hwio, conv_bias, gamma, beta,
                       running_mean, running_var, *,
                       stride=1, relu=True, same_padding=False, bn=False,
                       eps=1e-3):
    """Plain-JAX f32 reference with PyTorch CNNBlock semantics (BN eval)."""
    k = weight_hwio.shape[0]
    pad = (k - 1) // 2 if same_padding else 0
    x_nhwc = jnp.transpose(x_nchw, (0, 2, 3, 1))
    y = jax.lax.conv_general_dilated(
        x_nhwc, weight_hwio,
        window_strides=(stride, stride),
        padding=[(pad, pad), (pad, pad)],
        dimension_numbers=("NHWC", "HWIO", "NHWC"),
        precision=jax.lax.Precision.HIGHEST)
    y = y + conv_bias
    if bn:
        y = (y - running_mean) * jax.lax.rsqrt(running_var + eps) * gamma + beta
    if relu:
        y = jnp.maximum(y, 0.0)
    return jnp.transpose(y, (0, 3, 1, 2))


if __name__ == "__main__":
    N, C_IN, H, W = 2, 4, 16, 16
    C_OUT, K = 8, 3

    key = jax.random.PRNGKey(0)
    kx, kw, kb, kg, kbe, km, kv = jax.random.split(key, 7)

    x = jax.random.normal(kx, (N, C_IN, H, W), jnp.float32)
    weight = 0.1 * jax.random.normal(kw, (K, K, C_IN, C_OUT), jnp.float32)
    conv_bias = 0.1 * jax.random.normal(kb, (C_OUT,), jnp.float32)
    gamma = 1.0 + 0.1 * jax.random.normal(kg, (C_OUT,), jnp.float32)
    beta = 0.1 * jax.random.normal(kbe, (C_OUT,), jnp.float32)
    running_mean = 0.05 * jax.random.normal(km, (C_OUT,), jnp.float32)
    running_var = jax.random.uniform(kv, (C_OUT,), jnp.float32, 0.5, 1.5)

    # Config 1: CNNBlock(4, 8, 3, stride=1, relu=True, same_padding=True, bn=True)
    out = cnn_block_forward(x, weight, conv_bias, gamma, beta,
                            running_mean, running_var,
                            stride=1, relu=True, same_padding=True, bn=True,
                            eps=1e-3)
    out = jax.block_until_ready(out)
    ref = _reference_forward(x, weight, conv_bias, gamma, beta,
                             running_mean, running_var,
                             stride=1, relu=True, same_padding=True, bn=True,
                             eps=1e-3)
    assert out.shape == (N, C_OUT, H, W), out.shape
    # bf16 matmul operands (f32 accumulation) vs f32 reference -> bf16 tolerance.
    assert jnp.allclose(out, ref, atol=2e-2, rtol=2e-2), (
        float(jnp.max(jnp.abs(out - ref))))

    # Config 2 (module defaults): CNNBlock(4, 8, 3) -> no padding, no BN, ReLU.
    out2 = cnn_block_forward(x, weight, conv_bias, gamma, beta,
                             running_mean, running_var,
                             stride=1, relu=True, same_padding=False, bn=False)
    out2 = jax.block_until_ready(out2)
    ref2 = _reference_forward(x, weight, conv_bias, gamma, beta,
                              running_mean, running_var,
                              stride=1, relu=True, same_padding=False, bn=False)
    assert out2.shape == (N, C_OUT, H - K + 1, W - K + 1), out2.shape
    assert jnp.allclose(out2, ref2, atol=2e-2, rtol=2e-2), (
        float(jnp.max(jnp.abs(out2 - ref2))))

    print("KERNEL_OK")
</pallas_src>

<mosaic_0001>
module attributes {stable_mosaic.version = 11 : i64} {
  func.func @_cnn_block_kernel(%arg0: i32, %arg1: memref<1x18x18x4xbf16, #tpu.memory_space<vmem>>, %arg2: memref<9x4x128xbf16, #tpu.memory_space<vmem>>, %arg3: memref<1x128xf32, #tpu.memory_space<vmem>>, %arg4: memref<256x128xf32, #tpu.memory_space<vmem>>) attributes {dimension_semantics = [#tpu.dimension_semantics<parallel>], iteration_bounds = array<i64: 2>, scalar_prefetch = 0 : i64, scratch_operands = 0 : i64, tpu.core_type = #tpu.core_type<tc>, window_params = [{transform_indices = @transform_0, window_bounds = array<i64: 1, 18, 18, 4>}, {pipeline_mode = #tpu.pipeline_mode<synchronous>, transform_indices = @transform_1, window_bounds = array<i64: 9, 4, 128>}, {pipeline_mode = #tpu.pipeline_mode<synchronous>, transform_indices = @transform_2, window_bounds = array<i64: 1, 128>}, {transform_indices = @transform_3, window_bounds = array<i64: 256, 128>}]} {
    %c0 = arith.constant 0 : index
    %c0_0 = arith.constant 0 : index
    %c0_1 = arith.constant 0 : index
    %c0_2 = arith.constant 0 : index
    %0 = vector.load %arg1[%c0, %c0_0, %c0_1, %c0_2] : memref<1x18x18x4xbf16, #tpu.memory_space<vmem>>, vector<1x16x16x4xbf16>
    %1 = vector.shape_cast %0 : vector<1x16x16x4xbf16> to vector<256x4xbf16>
    %c0_3 = arith.constant 0 : index
    %c0_4 = arith.constant 0 : index
    %c0_5 = arith.constant 0 : index
    %2 = vector.load %arg2[%c0_3, %c0_4, %c0_5] : memref<9x4x128xbf16, #tpu.memory_space<vmem>>, vector<1x4x128xbf16>
    %3 = vector.shape_cast %2 : vector<1x4x128xbf16> to vector<4x128xbf16>
    %cst = arith.constant dense<0.000000e+00> : vector<256x128xf32>
    %4 = tpu.matmul %1, %3, %cst {dimension_numbers = #tpu.dot_dimension_numbers<[1], [0], [0], [1], [0, 0, 1, 1], [], []>} : vector<256x4xbf16>, vector<4x128xbf16>, vector<256x128xf32> -> vector<256x128xf32>
    %c0_6 = arith.constant 0 : index
    %c0_7 = arith.constant 0 : index
    %c1 = arith.constant 1 : index
    %c0_8 = arith.constant 0 : index
    %5 = vector.load %arg1[%c0_6, %c0_7, %c1, %c0_8] : memref<1x18x18x4xbf16, #tpu.memory_space<vmem>>, vector<1x16x16x4xbf16>
    %6 = vector.shape_cast %5 : vector<1x16x16x4xbf16> to vector<256x4xbf16>
    %c1_9 = arith.constant 1 : index
    %c0_10 = arith.constant 0 : index
    %c0_11 = arith.constant 0 : index
    %7 = vector.load %arg2[%c1_9, %c0_10, %c0_11] : memref<9x4x128xbf16, #tpu.memory_space<vmem>>, vector<1x4x128xbf16>
    %8 = vector.shape_cast %7 : vector<1x4x128xbf16> to vector<4x128xbf16>
    %cst_12 = arith.constant dense<0.000000e+00> : vector<256x128xf32>
    %9 = tpu.matmul %6, %8, %cst_12 {dimension_numbers = #tpu.dot_dimension_numbers<[1], [0], [0], [1], [0, 0, 1, 1], [], []>} : vector<256x4xbf16>, vector<4x128xbf16>, vector<256x128xf32> -> vector<256x128xf32>
    %10 = arith.addf %4, %9 : vector<256x128xf32>
    %c0_13 = arith.constant 0 : index
    %c0_14 = arith.constant 0 : index
    %c2 = arith.constant 2 : index
    %c0_15 = arith.constant 0 : index
    %11 = vector.load %arg1[%c0_13, %c0_14, %c2, %c0_15] : memref<1x18x18x4xbf16, #tpu.memory_space<vmem>>, vector<1x16x16x4xbf16>
    %12 = vector.shape_cast %11 : vector<1x16x16x4xbf16> to vector<256x4xbf16>
    %c2_16 = arith.constant 2 : index
    %c0_17 = arith.constant 0 : index
    %c0_18 = arith.constant 0 : index
    %13 = vector.load %arg2[%c2_16, %c0_17, %c0_18] : memref<9x4x128xbf16, #tpu.memory_space<vmem>>, vector<1x4x128xbf16>
    %14 = vector.shape_cast %13 : vector<1x4x128xbf16> to vector<4x128xbf16>
    %cst_19 = arith.constant dense<0.000000e+00> : vector<256x128xf32>
    %15 = tpu.matmul %12, %14, %cst_19 {dimension_numbers = #tpu.dot_dimension_numbers<[1], [0], [0], [1], [0, 0, 1, 1], [], []>} : vector<256x4xbf16>, vector<4x128xbf16>, vector<256x128xf32> -> vector<256x128xf32>
    %16 = arith.addf %10, %15 : vector<256x128xf32>
    %c0_20 = arith.constant 0 : index
    %c1_21 = arith.constant 1 : index
    %c0_22 = arith.constant 0 : index
    %c0_23 = arith.constant 0 : index
    %17 = vector.load %arg1[%c0_20, %c1_21, %c0_22, %c0_23] : memref<1x18x18x4xbf16, #tpu.memory_space<vmem>>, vector<1x16x16x4xbf16>
    %18 = vector.shape_cast %17 : vector<1x16x16x4xbf16> to vector<256x4xbf16>
    %c3 = arith.constant 3 : index
    %c0_24 = arith.constant 0 : index
    %c0_25 = arith.constant 0 : index
    %19 = vector.load %arg2[%c3, %c0_24, %c0_25] : memref<9x4x128xbf16, #tpu.memory_space<vmem>>, vector<1x4x128xbf16>
    %20 = vector.shape_cast %19 : vector<1x4x128xbf16> to vector<4x128xbf16>
    %cst_26 = arith.constant dense<0.000000e+00> : vector<256x128xf32>
    %21 = tpu.matmul %18, %20, %cst_26 {dimension_numbers = #tpu.dot_dimension_numbers<[1], [0], [0], [1], [0, 0, 1, 1], [], []>} : vector<256x4xbf16>, vector<4x128xbf16>, vector<256x128xf32> -> vector<256x128xf32>
    %22 = arith.addf %16, %21 : vector<256x128xf32>
    %c0_27 = arith.constant 0 : index
    %c1_28 = arith.constant 1 : index
    %c1_29 = arith.constant 1 : index
    %c0_30 = arith.constant 0 : index
    %23 = vector.load %arg1[%c0_27, %c1_28, %c1_29, %c0_30] : memref<1x18x18x4xbf16, #tpu.memory_space<vmem>>, vector<1x16x16x4xbf16>
    %24 = vector.shape_cast %23 : vector<1x16x16x4xbf16> to vector<256x4xbf16>
    %c4 = arith.constant 4 : index
    %c0_31 = arith.constant 0 : index
    %c0_32 = arith.constant 0 : index
    %25 = vector.load %arg2[%c4, %c0_31, %c0_32] : memref<9x4x128xbf16, #tpu.memory_space<vmem>>, vector<1x4x128xbf16>
    %26 = vector.shape_cast %25 : vector<1x4x128xbf16> to vector<4x128xbf16>
    %cst_33 = arith.constant dense<0.000000e+00> : vector<256x128xf32>
    %27 = tpu.matmul %24, %26, %cst_33 {dimension_numbers = #tpu.dot_dimension_numbers<[1], [0], [0], [1], [0, 0, 1, 1], [], []>} : vector<256x4xbf16>, vector<4x128xbf16>, vector<256x128xf32> -> vector<256x128xf32>
    %28 = arith.addf %22, %27 : vector<256x128xf32>
    %c0_34 = arith.constant 0 : index
    %c1_35 = arith.constant 1 : index
    %c2_36 = arith.constant 2 : index
    %c0_37 = arith.constant 0 : index
    %29 = vector.load %arg1[%c0_34, %c1_35, %c2_36, %c0_37] : memref<1x18x18x4xbf16, #tpu.memory_space<vmem>>, vector<1x16x16x4xbf16>
    %30 = vector.shape_cast %29 : vector<1x16x16x4xbf16> to vector<256x4xbf16>
    %c5 = arith.constant 5 : index
    %c0_38 = arith.constant 0 : index
    %c0_39 = arith.constant 0 : index
    %31 = vector.load %arg2[%c5, %c0_38, %c0_39] : memref<9x4x128xbf16, #tpu.memory_space<vmem>>, vector<1x4x128xbf16>
    %32 = vector.shape_cast %31 : vector<1x4x128xbf16> to vector<4x128xbf16>
    %cst_40 = arith.constant dense<0.000000e+00> : vector<256x128xf32>
    %33 = tpu.matmul %30, %32, %cst_40 {dimension_numbers = #tpu.dot_dimension_numbers<[1], [0], [0], [1], [0, 0, 1, 1], [], []>} : vector<256x4xbf16>, vector<4x128xbf16>, vector<256x128xf32> -> vector<256x128xf32>
    %34 = arith.addf %28, %33 : vector<256x128xf32>
    %c0_41 = arith.constant 0 : index
    %c2_42 = arith.constant 2 : index
    %c0_43 = arith.constant 0 : index
    %c0_44 = arith.constant 0 : index
    %35 = vector.load %arg1[%c0_41, %c2_42, %c0_43, %c0_44] : memref<1x18x18x4xbf16, #tpu.memory_space<vmem>>, vector<1x16x16x4xbf16>
    %36 = vector.shape_cast %35 : vector<1x16x16x4xbf16> to vector<256x4xbf16>
    %c6 = arith.constant 6 : index
    %c0_45 = arith.constant 0 : index
    %c0_46 = arith.constant 0 : index
    %37 = vector.load %arg2[%c6, %c0_45, %c0_46] : memref<9x4x128xbf16, #tpu.memory_space<vmem>>, vector<1x4x128xbf16>
    %38 = vector.shape_cast %37 : vector<1x4x128xbf16> to vector<4x128xbf16>
    %cst_47 = arith.constant dense<0.000000e+00> : vector<256x128xf32>
    %39 = tpu.matmul %36, %38, %cst_47 {dimension_numbers = #tpu.dot_dimension_numbers<[1], [0], [0], [1], [0, 0, 1, 1], [], []>} : vector<256x4xbf16>, vector<4x128xbf16>, vector<256x128xf32> -> vector<256x128xf32>
    %40 = arith.addf %34, %39 : vector<256x128xf32>
    %c0_48 = arith.constant 0 : index
    %c2_49 = arith.constant 2 : index
    %c1_50 = arith.constant 1 : index
    %c0_51 = arith.constant 0 : index
    %41 = vector.load %arg1[%c0_48, %c2_49, %c1_50, %c0_51] : memref<1x18x18x4xbf16, #tpu.memory_space<vmem>>, vector<1x16x16x4xbf16>
    %42 = vector.shape_cast %41 : vector<1x16x16x4xbf16> to vector<256x4xbf16>
    %c7 = arith.constant 7 : index
    %c0_52 = arith.constant 0 : index
    %c0_53 = arith.constant 0 : index
    %43 = vector.load %arg2[%c7, %c0_52, %c0_53] : memref<9x4x128xbf16, #tpu.memory_space<vmem>>, vector<1x4x128xbf16>
    %44 = vector.shape_cast %43 : vector<1x4x128xbf16> to vector<4x128xbf16>
    %cst_54 = arith.constant dense<0.000000e+00> : vector<256x128xf32>
    %45 = tpu.matmul %42, %44, %cst_54 {dimension_numbers = #tpu.dot_dimension_numbers<[1], [0], [0], [1], [0, 0, 1, 1], [], []>} : vector<256x4xbf16>, vector<4x128xbf16>, vector<256x128xf32> -> vector<256x128xf32>
    %46 = arith.addf %40, %45 : vector<256x128xf32>
    %c0_55 = arith.constant 0 : index
    %c2_56 = arith.constant 2 : index
    %c2_57 = arith.constant 2 : index
    %c0_58 = arith.constant 0 : index
    %47 = vector.load %arg1[%c0_55, %c2_56, %c2_57, %c0_58] : memref<1x18x18x4xbf16, #tpu.memory_space<vmem>>, vector<1x16x16x4xbf16>
    %48 = vector.shape_cast %47 : vector<1x16x16x4xbf16> to vector<256x4xbf16>
    %c8 = arith.constant 8 : index
    %c0_59 = arith.constant 0 : index
    %c0_60 = arith.constant 0 : index
    %49 = vector.load %arg2[%c8, %c0_59, %c0_60] : memref<9x4x128xbf16, #tpu.memory_space<vmem>>, vector<1x4x128xbf16>
    %50 = vector.shape_cast %49 : vector<1x4x128xbf16> to vector<4x128xbf16>
    %cst_61 = arith.constant dense<0.000000e+00> : vector<256x128xf32>
    %51 = tpu.matmul %48, %50, %cst_61 {dimension_numbers = #tpu.dot_dimension_numbers<[1], [0], [0], [1], [0, 0, 1, 1], [], []>} : vector<256x4xbf16>, vector<4x128xbf16>, vector<256x128xf32> -> vector<256x128xf32>
    %52 = arith.addf %46, %51 : vector<256x128xf32>
    %c0_62 = arith.constant 0 : index
    %c0_63 = arith.constant 0 : index
    %53 = vector.load %arg3[%c0_62, %c0_63] : memref<1x128xf32, #tpu.memory_space<vmem>>, vector<1x128xf32>
    %54 = vector.broadcast %53 : vector<1x128xf32> to vector<256x128xf32>
    %55 = arith.addf %52, %54 : vector<256x128xf32>
    %cst_64 = arith.constant 0.000000e+00 : f32
    %56 = vector.broadcast %cst_64 : f32 to vector<256x128xf32>
    %57 = arith.maximumf %55, %56 : vector<256x128xf32>
    %c0_65 = arith.constant 0 : index
    %c0_66 = arith.constant 0 : index
    %58 = vector.load %arg4[%c0_65, %c0_66] : memref<256x128xf32, #tpu.memory_space<vmem>>, vector<256x128xf32>
    tpu.vector_store %arg4[%c0_65, %c0_66], %57 {strides = array<i32>} : memref<256x128xf32, #tpu.memory_space<vmem>>, vector<256x128xf32>,
    return
  }
  func.func @transform_0(%arg0: i32) -> (i32, i32, i32, i32) {
    %c0_i32 = arith.constant 0 : i32
    %c0_i32_0 = arith.constant 0 : i32
    %c0_i32_1 = arith.constant 0 : i32
    %c0_i32_2 = arith.constant 0 : i32
    return %arg0, %c0_i32, %c0_i32_0, %c0_i32_1 : i32, i32, i32, i32
  }
  func.func @transform_1(%arg0: i32) -> (i32, i32, i32) {
    %c0_i32 = arith.constant 0 : i32
    %c0_i32_0 = arith.constant 0 : i32
    %c0_i32_1 = arith.constant 0 : i32
    %c0_i32_2 = arith.constant 0 : i32
    return %c0_i32, %c0_i32_0, %c0_i32_1 : i32, i32, i32
  }
  func.func @transform_2(%arg0: i32) -> (i32, i32) {
    %c0_i32 = arith.constant 0 : i32
    %c0_i32_0 = arith.constant 0 : i32
    %c0_i32_1 = arith.constant 0 : i32
    return %c0_i32, %c0_i32_0 : i32, i32
  }
  func.func @transform_3(%arg0: i32) -> (i32, i32) {
    %c0_i32 = arith.constant 0 : i32
    %c0_i32_0 = arith.constant 0 : i32
    return %arg0, %c0_i32 : i32, i32
  }
}

</mosaic_0001>

<llo_original>
// kernel: tpu_custom_call.1
$region0: #{tpu_custom_call.1}
  #allocation0 [shape = 'u32[]', space=smem, size = 0x4, offset = 0x4, fixed_abs, tag = 'smem constant byte address 0x4 - core index']
  #allocation1 [shape = 'u32[144,128]{1,0:T(1,128)}', space=vmem, size = 0x12000, scoped, tag = 'internal scratch']
  %s0 = inlined_call_operand.vmem [shape: bf16[2,18,18,4], index: 0, kind: input, shape index: {}]
  %s1 = inlined_call_operand.vmem [shape: bf16[9,4,128], index: 1, kind: input, shape index: {}]
  %s2 = inlined_call_operand.vmem [shape: f32[1,128], index: 2, kind: input, shape index: {}]
  %s3 = inlined_call_operand.hbm [shape: f32[512,128], index: 3, kind: output, shape index: {}]
  %s4 = sld [smem:[#allocation0]]
  $region45: #{tpu_custom_call.1} parent=0
    _
  %s6 = ssub.s32 1, %s4
  %s7 = scalar_select 0, %s6, %s4
  $region1: #{tpu_custom_call.1} parent=0
    #allocation2 [shape = 'u8[262144]{0}', space=vmem, size = 0x40000, scoped, tag = 'output window, operand 0']
    #allocation3 [shape = 's32[2]{0}', space=sflag, size = 0x8, scoped, tag = 'scoped memory for tpu_custom_call.1']
    %8 = vsyncpa [#allocation3], 0
    %s9 = scalar_lea.sflag [#allocation3], 1
    %10 = vsyncpa %s9, 0
    loop: start=0, step=1, limit=4
    $region2: #{tpu_custom_call.1} parent=1 // loop_pre_header
      _
    $region3: #{tpu_custom_call.1} parent=1 // loop_header
      %s12 = sphi 0, %s16
      %p13 = scmp.ge.s32.totalorder %s12, 4
      %s22 = sphi 0, %s24
      %s25 = sphi 0, %s22
      %s26 = sphi 0, %s25
      %s42 = sphi 0, %s26
      %s46 = sphi 0, %s46
      %s48 = sphi 0, %s46
      %s49 = sphi 0, %s48
      %s63 = sphi 0, %s49
      %s67 = sphi 0, %s67
      %s69 = sphi 0, %s67
      %s70 = sphi 0, %s69
      %s84 = sphi 0, %s70
      %s90 = sphi 0, %s92
      %s93 = sphi 0, %s90
      %s94 = sphi 0, %s93
      %s110 = sphi 0, %s94
    $region4: #{tpu_custom_call.1} parent=1 // loop_header_branch
      %15 = sbr.rel (%p13) target = $region8
    $region5: #{tpu_custom_call.1} parent=1 // loop_body
      %s17 = ssub.s32 %s12, 1
      %s18 = ssub.s32 %s12, 2
      %s19 = sadd.s32 %s12, 1
      %s20 = ssub.s32 %s12, %s19
      %p21 = scmp.eq.s32.totalorder %s20, 0
      %s23 = sadd.s32 %s22, 1
      %s24 = scalar_select %p21, %s22, %s23
      %p27 = pneg %p21
      %p28 = scmp.eq.s32.totalorder %s12, 1
      %p29 = por %p27, %p28
      %p30 = scmp.ne.s32.totalorder %s22, %s25
      %p31 = scmp.eq.s32.totalorder %s12, 0
      %p32 = por %p30, %p31
      %p33 = scmp.ne.s32.totalorder %s22, %s25
      %p34 = scmp.eq.s32.totalorder %s17, 1
      %p35 = por %p33, %p34
      %p36 = scmp.ne.s32.totalorder %s25, %s26
      %p37 = scmp.eq.s32.totalorder %s17, 0
      %p38 = por %p36, %p37
      %p39 = scmp.ne.s32.totalorder %s25, %s26
      %p40 = scmp.eq.s32.totalorder %s18, 1
      %p41 = por %p39, %p40
      %p43 = scmp.ne.s32.totalorder %s26, %s42
      %p44 = scmp.eq.s32.totalorder %s18, 0
      %p45 = por %p43, %p44
      %s47 = sadd.s32 %s46, 1
      %p50 = scmp.eq.s32.totalorder %s12, 1
      %p51 = scmp.ne.s32.totalorder %s46, %s48
      %p52 = scmp.eq.s32.totalorder %s12, 0
      %p53 = por %p51, %p52
      %p54 = scmp.ne.s32.totalorder %s46, %s48
      %p55 = scmp.eq.s32.totalorder %s17, 1
      %p56 = por %p54, %p55
      %p57 = scmp.ne.s32.totalorder %s48, %s49
      %p58 = scmp.eq.s32.totalorder %s17, 0
      %p59 = por %p57, %p58
      %p60 = scmp.ne.s32.totalorder %s48, %s49
      %p61 = scmp.eq.s32.totalorder %s18, 1
      %p62 = por %p60, %p61
      %p64 = scmp.ne.s32.totalorder %s49, %s63
      %p65 = scmp.eq.s32.totalorder %s18, 0
      %p66 = por %p64, %p65
      %s68 = sadd.s32 %s67, 1
      %p71 = scmp.eq.s32.totalorder %s12, 1
      %p72 = scmp.ne.s32.totalorder %s67, %s69
      %p73 = scmp.eq.s32.totalorder %s12, 0
      %p74 = por %p72, %p73
      %p75 = scmp.ne.s32.totalorder %s67, %s69
      %p76 = scmp.eq.s32.totalorder %s17, 1
      %p77 = por %p75, %p76
      %p78 = scmp.ne.s32.totalorder %s69, %s70
      %p79 = scmp.eq.s32.totalorder %s17, 0
      %p80 = por %p78, %p79
      %p81 = scmp.ne.s32.totalorder %s69, %s70
      %p82 = scmp.eq.s32.totalorder %s18, 1
      %p83 = por %p81, %p82
      %p85 = scmp.ne.s32.totalorder %s70, %s84
      %p86 = scmp.eq.s32.totalorder %s18, 0
      %p87 = por %p85, %p86
      %s88 = ssub.s32 %s12, %s19
      %p89 = scmp.eq.s32.totalorder %s88, 0
      %s91 = sadd.s32 %s90, 1
      %s92 = scalar_select %p89, %s90, %s91
      %p95 = pneg %p89
      %p96 = scmp.eq.s32.totalorder %s12, 1
      %p97 = por %p95, %p96
      %p98 = scmp.ne.s32.totalorder %s90, %s93
      %p99 = scmp.eq.s32.totalorder %s12, 0
      %p100 = por %p98, %p99
      %p101 = scmp.ne.s32.totalorder %s90, %s93
      %p102 = scmp.eq.s32.totalorder %s17, 1
      %p103 = por %p101, %p102
      %p104 = scmp.ne.s32.totalorder %s93, %s94
      %p105 = scmp.eq.s32.totalorder %s17, 0
      %p106 = por %p104, %p105
      %p107 = scmp.ne.s32.totalorder %s93, %s94
      %p108 = scmp.eq.s32.totalorder %s18, 1
      %p109 = por %p107, %p108
      %p111 = scmp.ne.s32.totalorder %s94, %s110
      %p112 = scmp.eq.s32.totalorder %s18, 0
      %p113 = por %p111, %p112
      %p114 = scmp.le.s32.totalorder 1, %s12
      %p115 = scmp.lt.s32.totalorder %s12, 3
      %p116 = pnand %p114, %p115
      %p117 = pneg %p116
      // Predicated region
      $region9: #{tpu_custom_call.1} parent=5 // pred_check
        _
      $region10: #{tpu_custom_call.1} parent=5 // pred_check_branch
        %119 = sbr.rel (%p116) target = $region12
      $region11: #{tpu_custom_call.1} parent=5 // pred_region
        %s120 = ssub.s32 %s12, 1
        // Predicated region
        $region13: #{tpu_custom_call.1} parent=11 // pred_check
          %p121 = pneg %p59
        $region14: #{tpu_custom_call.1} parent=11 // pred_check_branch
          %123 = sbr.rel (%p121) target = $region16
        $region15: #{tpu_custom_call.1} parent=11 // pred_region
          _
        $region16: #{tpu_custom_call.1} parent=11 // pred_fallthru
          _
        // Predicated region
        $region17: #{tpu_custom_call.1} parent=11 // pred_check
          %p124 = pneg %p80
        $region18: #{tpu_custom_call.1} parent=11 // pred_check_branch
          %126 = sbr.rel (%p124) target = $region20
        $region19: #{tpu_custom_call.1} parent=11 // pred_region
          _
        $region20: #{tpu_custom_call.1} parent=11 // pred_fallthru
          _
      $region12: #{tpu_custom_call.1} parent=5 // pred_fallthru
        _
      %p127 = scmp.lt.s32.totalorder %s12, 2
      // Predicated region
      $region21: #{tpu_custom_call.1} parent=5 // pred_check
        %p128 = pneg %p127
      $region22: #{tpu_custom_call.1} parent=5 // pred_check_branch
        %130 = sbr.rel (%p128) target = $region24
      $region23: #{tpu_custom_call.1} parent=5 // pred_region
        // Predicated region
        $region25: #{tpu_custom_call.1} parent=23 // pred_check
          %p131 = pneg %p32
        $region26: #{tpu_custom_call.1} parent=23 // pred_check_branch
          %133 = sbr.rel (%p131) target = $region28
        $region27: #{tpu_custom_call.1} parent=23 // pred_region
          %p134 = scmp.lt.s32.totalorder %s12, 1
          %s135 = scalar_select %p134, %s12, 1
          %s136 = smul.addr %s135, 54
          %s137 = smul.addr %s136, 4
          %s138 = scalar_lea.vmem %s0, %s137
        $region28: #{tpu_custom_call.1} parent=23 // pred_fallthru
          _
      $region24: #{tpu_custom_call.1} parent=5 // pred_fallthru
        _
      %p139 = scmp.le.s32.totalorder 1, %s12
      %p140 = scmp.lt.s32.totalorder %s12, 3
      %p141 = pnand %p139, %p140
      %p142 = pneg %p141
      // Predicated region
      $region29: #{tpu_custom_call.1} parent=5 // pred_check
        _
      $region30: #{tpu_custom_call.1} parent=5 // pred_check_branch
        %144 = sbr.rel (%p141) target = $region32
      $region31: #{tpu_custom_call.1} parent=5 // pred_region
        %s145 = ssub.s32 %s12, 1
        %p146 = scmp.lt.s32.totalorder %s17, 1
        %s147 = scalar_select %p146, %s17, 1
        %s148 = smul.addr %s147, 54
        %s149 = smul.addr %s148, 4
        %s150 = scalar_lea.vmem %s0, %s149
        %p151 = pneg %p38
        %p152 = pneg %p35
        %p153 = pneg %p59
        %p154 = pneg %p56
        %p155 = pneg %p80
        %p156 = pneg %p77
        %p157 = pneg %p106
        %p158 = pneg %p103
        %s159 = sand.u32 %s93, 1
        %s160 = scalar_lea.sflag [#allocation3], %s159
        %s161 = sand.u32 %s93, 1
        %s162 = smul.addr %s161, 256
        %s163 = scalar_lea.vmem [#allocation2], %s162
        %p164 = scmp.lt.s32.totalorder %s17, 1
        %s165 = scalar_select %p164, %s17, 1
        %s166 = smul.addr %s165, 54
        %s167 = smul.addr %s166, 4
        %s168 = scalar_lea.vmem %s0, %s167
        %s169 = smul.u32 32, %s17
        %v171 = vld [vmem:[%s168] sm:$0xf]
        %v172 = vld [vmem:[%s168 + $0x4] sm:$0xf]
        %v173 = vld [vmem:[%s168 + $0xc] sm:$0xf]
        %v174 = vld [vmem:[%s168 + $0x10] sm:$0xf]
        %v175 = vld [vmem:[%s168 + $0x18] sm:$0xf]
        %v176 = vld [vmem:[%s168 + $0x1c] sm:$0xf]
        %v177 = vld [vmem:[%s168 + $0x24] sm:$0xf]
        %v178 = vld [vmem:[%s168 + $0x28] sm:$0xf]
        %v179 = vld [vmem:[%s168 + $0x30] sm:$0xf]
        %v180 = vld [vmem:[%s168 + $0x34] sm:$0xf]
        %v181 = vld [vmem:[%s168 + $0x3c] sm:$0xf]
        %v182 = vld [vmem:[%s168 + $0x40] sm:$0xf]
        %v183 = vld [vmem:[%s168 + $0x48] sm:$0xf]
        %v184 = vld [vmem:[%s168 + $0x4c] sm:$0xf]
        %v185 = vld [vmem:[%s168 + $0x54] sm:$0xf]
        %v186 = vld [vmem:[%s168 + $0x58] sm:$0xf]
        %v187 = vld [vmem:[%s168 + $0x60] sm:$0xf]
        %v188 = vld [vmem:[%s168 + $0x64] sm:$0xf]
        %v189 = vld [vmem:[%s168 + $0x6c] sm:$0xf]
        %v190 = vld [vmem:[%s168 + $0x70] sm:$0xf]
        %v191 = vld [vmem:[%s168 + $0x78] sm:$0xf]
        %v192 = vld [vmem:[%s168 + $0x7c] sm:$0xf]
        %v193 = vld [vmem:[%s168 + $0x84] sm:$0xf]
        %v194 = vld [vmem:[%s168 + $0x88] sm:$0xf]
        %v195 = vld [vmem:[%s168 + $0x90] sm:$0xf]
        %v196 = vld [vmem:[%s168 + $0x94] sm:$0xf]
        %v197 = vld [vmem:[%s168 + $0x9c] sm:$0xf]
        %v198 = vld [vmem:[%s168 + $0xa0] sm:$0xf]
        %v199 = vld [vmem:[%s168 + $0xa8] sm:$0xf]
        %v200 = vld [vmem:[%s168 + $0xac] sm:$0xf]
        %v201 = vld [vmem:[%s168 + $0xb4] sm:$0xf]
        %v202 = vld [vmem:[%s168 + $0xb8] sm:$0xf]
        %v203 = vld [vmem:[%s1] sm:$0x3]
        %v204 = vld [vmem:[%s168 + $0x8] sm:$0x1]
        %v205 = vld [vmem:[%s168 + $0x14] sm:$0x1]
        %v206 = vld [vmem:[%s168 + $0x20] sm:$0x1]
        %v207 = vld [vmem:[%s168 + $0x2c] sm:$0x1]
        %v208 = vld [vmem:[%s168 + $0x38] sm:$0x1]
        %v209 = vld [vmem:[%s168 + $0x44] sm:$0x1]
        %v210 = vld [vmem:[%s168 + $0x50] sm:$0x1]
        %v211 = vld [vmem:[%s168 + $0x5c] sm:$0x1]
        %v212 = vld [vmem:[%s168 + $0x68] sm:$0x1]
        %v213 = vld [vmem:[%s168 + $0x74] sm:$0x1]
        %v214 = vld [vmem:[%s168 + $0x80] sm:$0x1]
        %v215 = vld [vmem:[%s168 + $0x8c] sm:$0x1]
        %v216 = vld [vmem:[%s168 + $0x98] sm:$0x1]
        %v217 = vld [vmem:[%s168 + $0xa4] sm:$0x1]
        %v218 = vld [vmem:[%s168 + $0xb0] sm:$0x1]
        %v219 = vld [vmem:[%s168 + $0xbc] sm:$0x1]
        %vm220 = vsmask.f32 3328
        %vm221 = vsmask.f32 7440
        %vm222 = vmor %vm220, %vm221
        %v224 = vshrl.u32 %v171, 16
        %v226 = vrot.slane %v224, 4
        %v227 = vshll.u32 %v171, 16
        %v229 = vrot.slane %v227, 5
        %v230 = vor.u32 %v226, %v229
        %v231 = vrot.slane %v230, 4
        %v233 = vshll.u32 %v172, 16
        %v235 = vrot.slane %v233, 5
        %v236 = vsel %vm222, %v231, %v235
        %v237 = vshrl.u32 %v172, 16
        %v239 = vrot.slane %v237, 4
        %v240 = vor.u32 %v239, %v235
        %v241 = vrot.slane %v240, 4
        %v243 = vshll.u32 %v204, 16
        %v245 = vrot.slane %v243, 5
        %v246 = vsel %vm222, %v241, %v245
        %v248 = vshrl.u32 %v173, 16
        %v250 = vrot.slane %v248, 4
        %v251 = vshll.u32 %v173, 16
        %v253 = vrot.slane %v251, 5
        %v254 = vor.u32 %v250, %v253
        %v255 = vrot.slane %v254, 4
        %v257 = vshll.u32 %v174, 16
        %v259 = vrot.slane %v257, 5
        %v260 = vsel %vm222, %v255, %v259
        %v261 = vshrl.u32 %v174, 16
        %v263 = vrot.slane %v261, 4
        %v264 = vor.u32 %v263, %v259
        %v265 = vrot.slane %v264, 4
        %v267 = vshll.u32 %v205, 16
        %v269 = vrot.slane %v267, 5
        %v270 = vsel %vm222, %v265, %v269
        %v272 = vshrl.u32 %v175, 16
        %v274 = vrot.slane %v272, 4
        %v275 = vshll.u32 %v175, 16
        %v277 = vrot.slane %v275, 5
        %v278 = vor.u32 %v274, %v277
        %v279 = vrot.slane %v278, 4
        %v281 = vshll.u32 %v176, 16
        %v283 = vrot.slane %v281, 5
        %v284 = vsel %vm222, %v279, %v283
        %v285 = vshrl.u32 %v176, 16
        %v287 = vrot.slane %v285, 4
        %v288 = vor.u32 %v287, %v283
        %v289 = vrot.slane %v288, 4
        %v291 = vshll.u32 %v206, 16
        %v293 = vrot.slane %v291, 5
        %v294 = vsel %vm222, %v289, %v293
        %v296 = vshrl.u32 %v177, 16
        %v298 = vrot.slane %v296, 4
        %v299 = vshll.u32 %v177, 16
        %v301 = vrot.slane %v299, 5
        %v302 = vor.u32 %v298, %v301
        %v303 = vrot.slane %v302, 4
        %v305 = vshll.u32 %v178, 16
        %v307 = vrot.slane %v305, 5
        %v308 = vsel %vm222, %v303, %v307
        %v309 = vshrl.u32 %v178, 16
        %v311 = vrot.slane %v309, 4
        %v312 = vor.u32 %v311, %v307
        %v313 = vrot.slane %v312, 4
        %v315 = vshll.u32 %v207, 16
        %v317 = vrot.slane %v315, 5
        %v318 = vsel %vm222, %v313, %v317
        %v320 = vshrl.u32 %v179, 16
        %v322 = vrot.slane %v320, 4
        %v323 = vshll.u32 %v179, 16
        %v325 = vrot.slane %v323, 5
        %v326 = vor.u32 %v322, %v325
        %v327 = vrot.slane %v326, 4
        %v329 = vshll.u32 %v180, 16
        %v331 = vrot.slane %v329, 5
        %v332 = vsel %vm222, %v327, %v331
        %v333 = vshrl.u32 %v180, 16
        %v335 = vrot.slane %v333, 4
        %v336 = vor.u32 %v335, %v331
        %v337 = vrot.slane %v336, 4
        %v339 = vshll.u32 %v208, 16
        %v341 = vrot.slane %v339, 5
        %v342 = vsel %vm222, %v337, %v341
        %v344 = vshrl.u32 %v181, 16
        %v346 = vrot.slane %v344, 4
        %v347 = vshll.u32 %v181, 16
        %v349 = vrot.slane %v347, 5
        %v350 = vor.u32 %v346, %v349
        %v351 = vrot.slane %v350, 4
        %v353 = vshll.u32 %v182, 16
        %v355 = vrot.slane %v353, 5
        %v356 = vsel %vm222, %v351, %v355
        %v357 = vshrl.u32 %v182, 16
        %v359 = vrot.slane %v357, 4
        %v360 = vor.u32 %v359, %v355
        %v361 = vrot.slane %v360, 4
        %v363 = vshll.u32 %v209, 16
        %v365 = vrot.slane %v363, 5
        %v366 = vsel %vm222, %v361, %v365
        %v368 = vshrl.u32 %v183, 16
        %v370 = vrot.slane %v368, 4
        %v371 = vshll.u32 %v183, 16
        %v373 = vrot.slane %v371, 5
        %v374 = vor.u32 %v370, %v373
        %v375 = vrot.slane %v374, 4
        %v377 = vshll.u32 %v184, 16
        %v379 = vrot.slane %v377, 5
        %v380 = vsel %vm222, %v375, %v379
        %v381 = vshrl.u32 %v184, 16
        %v383 = vrot.slane %v381, 4
        %v384 = vor.u32 %v383, %v379
        %v385 = vrot.slane %v384, 4
        %v387 = vshll.u32 %v210, 16
        %v389 = vrot.slane %v387, 5
        %v390 = vsel %vm222, %v385, %v389
        %v392 = vshrl.u32 %v185, 16
        %v394 = vrot.slane %v392, 4
        %v395 = vshll.u32 %v185, 16
        %v397 = vrot.slane %v395, 5
        %v398 = vor.u32 %v394, %v397
        %v399 = vrot.slane %v398, 4
        %v401 = vshll.u32 %v186, 16
        %v403 = vrot.slane %v401, 5
        %v404 = vsel %vm222, %v399, %v403
        %v405 = vshrl.u32 %v186, 16
        %v407 = vrot.slane %v405, 4
        %v408 = vor.u32 %v407, %v403
        %v409 = vrot.slane %v408, 4
        %v411 = vshll.u32 %v211, 16
        %v413 = vrot.slane %v411, 5
        %v414 = vsel %vm222, %v409, %v413
        %v416 = vshrl.u32 %v187, 16
        %v418 = vrot.slane %v416, 4
        %v419 = vshll.u32 %v187, 16
        %v421 = vrot.slane %v419, 5
        %v422 = vor.u32 %v418, %v421
        %v423 = vrot.slane %v422, 4
        %v425 = vshll.u32 %v188, 16
        %v427 = vrot.slane %v425, 5
        %v428 = vsel %vm222, %v423, %v427
        %v429 = vshrl.u32 %v188, 16
        %v431 = vrot.slane %v429, 4
        %v432 = vor.u32 %v431, %v427
        %v433 = vrot.slane %v432, 4
        %v435 = vshll.u32 %v212, 16
        %v437 = vrot.slane %v435, 5
        %v438 = vsel %vm222, %v433, %v437
        %v440 = vshrl.u32 %v189, 16
        %v442 = vrot.slane %v440, 4
        %v443 = vshll.u32 %v189, 16
        %v445 = vrot.slane %v443, 5
        %v446 = vor.u32 %v442, %v445
        %v447 = vrot.slane %v446, 4
        %v449 = vshll.u32 %v190, 16
        %v451 = vrot.slane %v449, 5
        %v452 = vsel %vm222, %v447, %v451
        %v453 = vshrl.u32 %v190, 16
        %v455 = vrot.slane %v453, 4
        %v456 = vor.u32 %v455, %v451
        %v457 = vrot.slane %v456, 4
        %v459 = vshll.u32 %v213, 16
        %v461 = vrot.slane %v459, 5
        %v462 = vsel %vm222, %v457, %v461
        %v464 = vshrl.u32 %v191, 16
        %v466 = vrot.slane %v464, 4
        %v467 = vshll.u32 %v191, 16
        %v469 = vrot.slane %v467, 5
        %v470 = vor.u32 %v466, %v469
        %v471 = vrot.slane %v470, 4
        %v473 = vshll.u32 %v192, 16
        %v475 = vrot.slane %v473, 5
        %v476 = vsel %vm222, %v471, %v475
        %v477 = vshrl.u32 %v192, 16
        %v479 = vrot.slane %v477, 4
        %v480 = vor.u32 %v479, %v475
        %v481 = vrot.slane %v480, 4
        %v483 = vshll.u32 %v214, 16
        %v485 = vrot.slane %v483, 5
        %v486 = vsel %vm222, %v481, %v485
        %v488 = vshrl.u32 %v193, 16
        %v490 = vrot.slane %v488, 4
        %v491 = vshll.u32 %v193, 16
        %v493 = vrot.slane %v491, 5
        %v494 = vor.u32 %v490, %v493
        %v495 = vrot.slane %v494, 4
        %v497 = vshll.u32 %v194, 16
        %v499 = vrot.slane %v497, 5
        %v500 = vsel %vm222, %v495, %v499
        %v501 = vshrl.u32 %v194, 16
        %v503 = vrot.slane %v501, 4
        %v504 = vor.u32 %v503, %v499
        %v505 = vrot.slane %v504, 4
        %v507 = vshll.u32 %v215, 16
        %v509 = vrot.slane %v507, 5
        %v510 = vsel %vm222, %v505, %v509
        %v512 = vshrl.u32 %v195, 16
        %v514 = vrot.slane %v512, 4
        %v515 = vshll.u32 %v195, 16
        %v517 = vrot.slane %v515, 5
        %v518 = vor.u32 %v514, %v517
        %v519 = vrot.slane %v518, 4
        %v521 = vshll.u32 %v196, 16
        %v523 = vrot.slane %v521, 5
        %v524 = vsel %vm222, %v519, %v523
        %v525 = vshrl.u32 %v196, 16
        %v527 = vrot.slane %v525, 4
        %v528 = vor.u32 %v527, %v523
        %v529 = vrot.slane %v528, 4
        %v531 = vshll.u32 %v216, 16
        %v533 = vrot.slane %v531, 5
        %v534 = vsel %vm222, %v529, %v533
        %v536 = vshrl.u32 %v197, 16
        %v538 = vrot.slane %v536, 4
        %v539 = vshll.u32 %v197, 16
        %v541 = vrot.slane %v539, 5
        %v542 = vor.u32 %v538, %v541
        %v543 = vrot.slane %v542, 4
        %v545 = vshll.u32 %v198, 16
        %v547 = vrot.slane %v545, 5
        %v548 = vsel %vm222, %v543, %v547
        %v549 = vshrl.u32 %v198, 16
        %v551 = vrot.slane %v549, 4
        %v552 = vor.u32 %v551, %v547
        %v553 = vrot.slane %v552, 4
        %v555 = vshll.u32 %v217, 16
        %v557 = vrot.slane %v555, 5
        %v558 = vsel %vm222, %v553, %v557
        %v560 = vshrl.u32 %v199, 16
        %v562 = vrot.slane %v560, 4
        %v563 = vshll.u32 %v199, 16
        %v565 = vrot.slane %v563, 5
        %v566 = vor.u32 %v562, %v565
        %v567 = vrot.slane %v566, 4
        %v569 = vshll.u32 %v200, 16
        %v571 = vrot.slane %v569, 5
        %v572 = vsel %vm222, %v567, %v571
        %v573 = vshrl.u32 %v200, 16
        %v575 = vrot.slane %v573, 4
        %v576 = vor.u32 %v575, %v571
        %v577 = vrot.slane %v576, 4
        %v579 = vshll.u32 %v218, 16
        %v581 = vrot.slane %v579, 5
        %v582 = vsel %vm222, %v577, %v581
        %v584 = vshrl.u32 %v201, 16
        %v586 = vrot.slane %v584, 4
        %v587 = vshll.u32 %v201, 16
        %v589 = vrot.slane %v587, 5
        %v590 = vor.u32 %v586, %v589
        %v591 = vrot.slane %v590, 4
        %v593 = vshll.u32 %v202, 16
        %v595 = vrot.slane %v593, 5
        %v596 = vsel %vm222, %v591, %v595
        %v597 = vshrl.u32 %v202, 16
        %v599 = vrot.slane %v597, 4
        %v600 = vor.u32 %v599, %v595
        %v601 = vrot.slane %v600, 4
        %v603 = vshll.u32 %v219, 16
        %v605 = vrot.slane %v603, 5
        %v606 = vsel %vm222, %v601, %v605
        %s607 = scalar_lea.vmem %s1, 2
        %v608 = vld [vmem:[%s607] sm:$0x3]
        %v609 = vunpack.c.l.b16 %v236
        %v610 = vunpack.c.l.b16 %v246
        %v611 = vunpack.c.l.b16 %v260
        %v612 = vunpack.c.l.b16 %v270
        %v613 = vunpack.c.l.b16 %v284
        %v614 = vunpack.c.l.b16 %v294
        %v615 = vunpack.c.l.b16 %v308
        %v616 = vunpack.c.l.b16 %v318
        %v617 = vunpack.c.l.b16 %v332
        %v618 = vunpack.c.l.b16 %v342
        %v619 = vunpack.c.l.b16 %v356
        %v620 = vunpack.c.l.b16 %v366
        %v621 = vunpack.c.l.b16 %v380
        %v622 = vunpack.c.l.b16 %v390
        %v623 = vunpack.c.l.b16 %v404
        %v624 = vunpack.c.l.b16 %v414
        %v625 = vunpack.c.l.b16 %v428
        %v626 = vunpack.c.l.b16 %v438
        %v627 = vunpack.c.l.b16 %v452
        %v628 = vunpack.c.l.b16 %v462
        %v629 = vunpack.c.l.b16 %v476
        %v630 = vunpack.c.l.b16 %v486
        %v631 = vunpack.c.l.b16 %v500
        %v632 = vunpack.c.l.b16 %v510
        %v633 = vunpack.c.l.b16 %v524
        %v634 = vunpack.c.l.b16 %v534
        %v635 = vunpack.c.l.b16 %v548
        %v636 = vunpack.c.l.b16 %v558
        %v637 = vunpack.c.l.b16 %v572
        %v638 = vunpack.c.l.b16 %v582
        %v639 = vunpack.c.l.b16 %v596
        %v640 = vunpack.c.l.b16 %v606
        %v641 = vpack.c.b16 %v610, %v609
        %v642 = vpack.c.b16 %v612, %v611
        %v643 = vpack.c.b16 %v614, %v613
        %v644 = vpack.c.b16 %v616, %v615
        %v645 = vpack.c.b16 %v618, %v617
        %v646 = vpack.c.b16 %v620, %v619
        %v647 = vpack.c.b16 %v622, %v621
        %v648 = vpack.c.b16 %v624, %v623
        %v649 = vpack.c.b16 %v626, %v625
        %v650 = vpack.c.b16 %v628, %v627
        %v651 = vpack.c.b16 %v630, %v629
        %v652 = vpack.c.b16 %v632, %v631
        %v653 = vpack.c.b16 %v634, %v633
        %v654 = vpack.c.b16 %v636, %v635
        %v655 = vpack.c.b16 %v638, %v637
        %v656 = vpack.c.b16 %v640, %v639
        %vm657 = vcmask 31744
        %v659 = vsel %vm657, %v641, 0
        %v662 = vsel %vm657, %v642, 0
        %v665 = vsel %vm657, %v643, 0
        %v668 = vsel %vm657, %v644, 0
        %v671 = vsel %vm657, %v645, 0
        %v674 = vsel %vm657, %v646, 0
        %v677 = vsel %vm657, %v647, 0
        %v680 = vsel %vm657, %v648, 0
        %v683 = vsel %vm657, %v649, 0
        %v686 = vsel %vm657, %v650, 0
        %v689 = vsel %vm657, %v651, 0
        %v692 = vsel %vm657, %v652, 0
        %v695 = vsel %vm657, %v653, 0
        %v698 = vsel %vm657, %v654, 0
        %v701 = vsel %vm657, %v655, 0
        %v704 = vsel %vm657, %v656, 0
        %vm706 = vcmask 1041408
        %v708 = vsel %vm706, %v608, 0
        %710 = vmatprep.subr.bf16.mxu0 0
        %711 = vmatpush1.bf16.msra.mxu0 %v708
        %712 = vmatprep.subr.bf16.mxu0 0
        %713 = vmatpush1.bf16.msra.mxu0 0
        %714 = vmatprep.subr.bf16.mxu0 0
        %715 = vmatpush1.bf16.msra.mxu0 0
        %716 = vmatprep.subr.bf16.mxu0 0
        %717 = vmatpush1.bf16.msra.mxu0 0
        %718 = vmatprep.subr.bf16.mxu0 0
        %719 = vmatpush1.bf16.msra.mxu0 0
        %720 = vmatprep.subr.bf16.mxu0 0
        %721 = vmatpush1.bf16.msra.mxu0 0
        %722 = vmatprep.subr.bf16.mxu0 0
        %723 = vmatpush1.bf16.msra.mxu0 0
        %724 = vmatprep.subr.bf16.mxu0 0
        %725 = vmatpush1.bf16.msra.mxu0 0
        %726 = vmatprep.subr.bf16.mxu0 0
        %727 = vmatpush1.bf16.msra.mxu0 0
        %728 = vmatprep.subr.bf16.mxu0 0
        %729 = vmatpush1.bf16.msra.mxu0 0
        %730 = vmatprep.subr.bf16.mxu0 0
        %731 = vmatpush1.bf16.msra.mxu0 0
        %732 = vmatprep.subr.bf16.mxu0 0
        %733 = vmatpush1.bf16.msra.mxu0 0
        %734 = vmatprep.subr.bf16.mxu0 0
        %735 = vmatpush1.bf16.msra.mxu0 0
        %736 = vmatprep.subr.bf16.mxu0 0
        %737 = vmatpush1.bf16.msra.mxu0 0
        %738 = vmatprep.subr.bf16.mxu0 0
        %739 = vmatpush1.bf16.msra.mxu0 0
        %740 = vmatprep.subr.bf16.mxu0 0
        %741 = vmatpush1.bf16.msra.mxu0 0
        %742 = vmatprep.mubr.bf16.mxu0 0
        %743 = vmatmul.mubr.bf16.gmra.mrb[0].mxu0 %v659
        %v744 = vpop.f32.mrb[0].mxu0
        %v745 = vadd.f32 0.0, %v744
        %v746 = vpop.f32.mrb[0].mxu0
        %v747 = vpop.f32.mrb[0].mxu0
        %v748 = vadd.f32 0.0, %v747
        %v749 = vpop.f32.mrb[0].mxu0
        %750 = vmatprep.mubr.bf16.mxu0 0
        %751 = vmatmul.mubr.bf16.gmra.mrb[0].mxu0 %v662
        %v752 = vpop.f32.mrb[0].mxu0
        %v753 = vadd.f32 0.0, %v752
        %v754 = vpop.f32.mrb[0].mxu0
        %v755 = vpop.f32.mrb[0].mxu0
        %v756 = vadd.f32 0.0, %v755
        %v757 = vpop.f32.mrb[0].mxu0
        %758 = vmatprep.mubr.bf16.mxu0 0
        %759 = vmatmul.mubr.bf16.gmra.mrb[0].mxu0 %v665
        %v760 = vpop.f32.mrb[0].mxu0
        %v761 = vadd.f32 0.0, %v760
        %v762 = vpop.f32.mrb[0].mxu0
        %v763 = vpop.f32.mrb[0].mxu0
        %v764 = vadd.f32 0.0, %v763
        %v765 = vpop.f32.mrb[0].mxu0
        %766 = vmatprep.mubr.bf16.mxu0 0
        %767 = vmatmul.mubr.bf16.gmra.mrb[0].mxu0 %v668
        %v768 = vpop.f32.mrb[0].mxu0
        %v769 = vadd.f32 0.0, %v768
        %v770 = vpop.f32.mrb[0].mxu0
        %v771 = vpop.f32.mrb[0].mxu0
        %v772 = vadd.f32 0.0, %v771
        %v773 = vpop.f32.mrb[0].mxu0
        %774 = vmatprep.mubr.bf16.mxu0 0
        %775 = vmatmul.mubr.bf16.gmra.mrb[0].mxu0 %v671
        %v776 = vpop.f32.mrb[0].mxu0
        %v777 = vadd.f32 0.0, %v776
        %v778 = vpop.f32.mrb[0].mxu0
        %v779 = vpop.f32.mrb[0].mxu0
        %v780 = vadd.f32 0.0, %v779
        %v781 = vpop.f32.mrb[0].mxu0
        %782 = vmatprep.mubr.bf16.mxu0 0
        %783 = vmatmul.mubr.bf16.gmra.mrb[0].mxu0 %v674
        %v784 = vpop.f32.mrb[0].mxu0
        %v785 = vadd.f32 0.0, %v784
        %v786 = vpop.f32.mrb[0].mxu0
        %v787 = vpop.f32.mrb[0].mxu0
        %v788 = vadd.f32 0.0, %v787
        %v789 = vpop.f32.mrb[0].mxu0
        %790 = vmatprep.mubr.bf16.mxu0 0
        %791 = vmatmul.mubr.bf16.gmra.mrb[0].mxu0 %v677
        %v792 = vpop.f32.mrb[0].mxu0
        %v793 = vadd.f32 0.0, %v792
        %v794 = vpop.f32.mrb[0].mxu0
        %v795 = vpop.f32.mrb[0].mxu0
        %v796 = vadd.f32 0.0, %v795
        %v797 = vpop.f32.mrb[0].mxu0
        %798 = vmatprep.mubr.bf16.mxu0 0
        %799 = vmatmul.mubr.bf16.gmra.mrb[0].mxu0 %v680
        %v800 = vpop.f32.mrb[0].mxu0
        %v801 = vadd.f32 0.0, %v800
        %v802 = vpop.f32.mrb[0].mxu0
        %v803 = vpop.f32.mrb[0].mxu0
        %v804 = vadd.f32 0.0, %v803
        %v805 = vpop.f32.mrb[0].mxu0
        %806 = vmatprep.mubr.bf16.mxu0 0
        %807 = vmatmul.mubr.bf16.gmra.mrb[0].mxu0 %v683
        %v808 = vpop.f32.mrb[0].mxu0
        %v809 = vadd.f32 0.0, %v808
        %v810 = vpop.f32.mrb[0].mxu0
        %v811 = vpop.f32.mrb[0].mxu0
        %v812 = vadd.f32 0.0, %v811
        %v813 = vpop.f32.mrb[0].mxu0
        %814 = vmatprep.mubr.bf16.mxu0 0
        %815 = vmatmul.mubr.bf16.gmra.mrb[0].mxu0 %v686
        %v816 = vpop.f32.mrb[0].mxu0
        %v817 = vadd.f32 0.0, %v816
        %v818 = vpop.f32.mrb[0].mxu0
        %v819 = vpop.f32.mrb[0].mxu0
        %v820 = vadd.f32 0.0, %v819
        %v821 = vpop.f32.mrb[0].mxu0
        %822 = vmatprep.mubr.bf16.mxu0 0
        %823 = vmatmul.mubr.bf16.gmra.mrb[0].mxu0 %v689
        %v824 = vpop.f32.mrb[0].mxu0
        %v825 = vadd.f32 0.0, %v824
        %v826 = vpop.f32.mrb[0].mxu0
        %v827 = vpop.f32.mrb[0].mxu0
        %v828 = vadd.f32 0.0, %v827
        %v829 = vpop.f32.mrb[0].mxu0
        %830 = vmatprep.mubr.bf16.mxu0 0
        %831 = vmatmul.mubr.bf16.gmra.mrb[0].mxu0 %v692
        %v832 = vpop.f32.mrb[0].mxu0
        %v833 = vadd.f32 0.0, %v832
        %v834 = vpop.f32.mrb[0].mxu0
        %v835 = vpop.f32.mrb[0].mxu0
        %v836 = vadd.f32 0.0, %v835
        %v837 = vpop.f32.mrb[0].mxu0
        %838 = vmatprep.mubr.bf16.mxu0 0
        %839 = vmatmul.mubr.bf16.gmra.mrb[0].mxu0 %v695
        %v840 = vpop.f32.mrb[0].mxu0
        %v841 = vadd.f32 0.0, %v840
        %v842 = vpop.f32.mrb[0].mxu0
        %v843 = vpop.f32.mrb[0].mxu0
        %v844 = vadd.f32 0.0, %v843
        %v845 = vpop.f32.mrb[0].mxu0
        %846 = vmatprep.mubr.bf16.mxu0 0
        %847 = vmatmul.mubr.bf16.gmra.mrb[0].mxu0 %v698
        %v848 = vpop.f32.mrb[0].mxu0
        %v849 = vadd.f32 0.0, %v848
        %v850 = vpop.f32.mrb[0].mxu0
        %v851 = vpop.f32.mrb[0].mxu0
        %v852 = vadd.f32 0.0, %v851
        %v853 = vpop.f32.mrb[0].mxu0
        %854 = vmatprep.mubr.bf16.mxu0 0
        %855 = vmatmul.mubr.bf16.gmra.mrb[0].mxu0 %v701
        %v856 = vpop.f32.mrb[0].mxu0
        %v857 = vadd.f32 0.0, %v856
        %v858 = vpop.f32.mrb[0].mxu0
        %v859 = vpop.f32.mrb[0].mxu0
        %v860 = vadd.f32 0.0, %v859
        %v861 = vpop.f32.mrb[0].mxu0
        %862 = vmatprep.mubr.bf16.mxu0 0
        %863 = vmatmul.mubr.bf16.gmra.mrb[0].mxu0 %v704
        %v864 = vpop.f32.mrb[0].mxu0
        %v865 = vadd.f32 0.0, %v864
        %v866 = vpop.f32.mrb[0].mxu0
        %v867 = vpop.f32.mrb[0].mxu0
        %v868 = vadd.f32 0.0, %v867
        %v869 = vpop.f32.mrb[0].mxu0
        %870 = vdwg.mxu0
        %v903 = vunpack.c.l.b16 %v171
        %v904 = vunpack.c.l.b16 %v172
        %v905 = vunpack.c.l.b16 %v173
        %v906 = vunpack.c.l.b16 %v174
        %v907 = vunpack.c.l.b16 %v175
        %v908 = vunpack.c.l.b16 %v176
        %v909 = vunpack.c.l.b16 %v177
        %v910 = vunpack.c.l.b16 %v178
        %v911 = vunpack.c.l.b16 %v179
        %v912 = vunpack.c.l.b16 %v180
        %v913 = vunpack.c.l.b16 %v181
        %v914 = vunpack.c.l.b16 %v182
        %v915 = vunpack.c.l.b16 %v183
        %v916 = vunpack.c.l.b16 %v184
        %v917 = vunpack.c.l.b16 %v185
        %v918 = vunpack.c.l.b16 %v186
        %v919 = vunpack.c.l.b16 %v187
        %v920 = vunpack.c.l.b16 %v188
        %v921 = vunpack.c.l.b16 %v189
        %v922 = vunpack.c.l.b16 %v190
        %v923 = vunpack.c.l.b16 %v191
        %v924 = vunpack.c.l.b16 %v192
        %v925 = vunpack.c.l.b16 %v193
        %v926 = vunpack.c.l.b16 %v194
        %v927 = vunpack.c.l.b16 %v195
        %v928 = vunpack.c.l.b16 %v196
        %v929 = vunpack.c.l.b16 %v197
        %v930 = vunpack.c.l.b16 %v198
        %v931 = vunpack.c.l.b16 %v199
        %v932 = vunpack.c.l.b16 %v200
        %v933 = vunpack.c.l.b16 %v201
        %v934 = vunpack.c.l.b16 %v202
        %v935 = vpack.c.b16 %v904, %v903
        %v936 = vpack.c.b16 %v906, %v905
        %v937 = vpack.c.b16 %v908, %v907
        %v938 = vpack.c.b16 %v910, %v909
        %v939 = vpack.c.b16 %v912, %v911
        %v940 = vpack.c.b16 %v914, %v913
        %v941 = vpack.c.b16 %v916, %v915
        %v942 = vpack.c.b16 %v918, %v917
        %v943 = vpack.c.b16 %v920, %v919
        %v944 = vpack.c.b16 %v922, %v921
        %v945 = vpack.c.b16 %v924, %v923
        %v946 = vpack.c.b16 %v926, %v925
        %v947 = vpack.c.b16 %v928, %v927
        %v948 = vpack.c.b16 %v930, %v929
        %v949 = vpack.c.b16 %v932, %v931
        %v950 = vpack.c.b16 %v934, %v933
        %v952 = vsel %vm657, %v935, 0
        %v955 = vsel %vm657, %v936, 0
        %v958 = vsel %vm657, %v937, 0
        %v961 = vsel %vm657, %v938, 0
        %v964 = vsel %vm657, %v939, 0
        %v967 = vsel %vm657, %v940, 0
        %v970 = vsel %vm657, %v941, 0
        %v973 = vsel %vm657, %v942, 0
        %v976 = vsel %vm657, %v943, 0
        %v979 = vsel %vm657, %v944, 0
        %v982 = vsel %vm657, %v945, 0
        %v985 = vsel %vm657, %v946, 0
        %v988 = vsel %vm657, %v947, 0
        %v991 = vsel %vm657, %v948, 0
        %v994 = vsel %vm657, %v949, 0
        %v997 = vsel %vm657, %v950, 0
        %v1000 = vsel %vm706, %v203, 0
        %1002 = vmatprep.subr.bf16.mxu0 0
        %1003 = vmatpush1.bf16.msra.mxu0 %v1000
        %1004 = vmatprep.subr.bf16.mxu0 0
        %1005 = vmatpush1.bf16.msra.mxu0 0
        %1006 = vmatprep.subr.bf16.mxu0 0
        %1007 = vmatpush1.bf16.msra.mxu0 0
        %1008 = vmatprep.subr.bf16.mxu0 0
        %1009 = vmatpush1.bf16.msra.mxu0 0
        %1010 = vmatprep.subr.bf16.mxu0 0
        %1011 = vmatpush1.bf16.msra.mxu0 0
        %1012 = vmatprep.subr.bf16.mxu0 0
        %1013 = vmatpush1.bf16.msra.mxu0 0
        %1014 = vmatprep.subr.bf16.mxu0 0
        %1015 = vmatpush1.bf16.msra.mxu0 0
        %1016 = vmatprep.subr.bf16.mxu0 0
        %1017 = vmatpush1.bf16.msra.mxu0 0
        %1018 = vmatprep.subr.bf16.mxu0 0
        %1019 = vmatpush1.bf16.msra.mxu0 0
        %1020 = vmatprep.subr.bf16.mxu0 0
        %1021 = vmatpush1.bf16.msra.mxu0 0
        %1022 = vmatprep.subr.bf16.mxu0 0
        %1023 = vmatpush1.bf16.msra.mxu0 0
        %1024 = vmatprep.subr.bf16.mxu0 0
        %1025 = vmatpush1.bf16.msra.mxu0 0
        %1026 = vmatprep.subr.bf16.mxu0 0
        %1027 = vmatpush1.bf16.msra.mxu0 0
        %1028 = vmatprep.subr.bf16.mxu0 0
        %1029 = vmatpush1.bf16.msra.mxu0 0
        %1030 = vmatprep.subr.bf16.mxu0 0
        %1031 = vmatpush1.bf16.msra.mxu0 0
        %1032 = vmatprep.subr.bf16.mxu0 0
        %1033 = vmatpush1.bf16.msra.mxu0 0
        %1034 = vmatprep.mubr.bf16.mxu0 0
        %1035 = vmatmul.mubr.bf16.gmra.mrb[0].mxu0 %v952
        %v1036 = vpop.f32.mrb[0].mxu0
        %v1037 = vadd.f32 %v745, %v1036
        %v1038 = vpop.f32.mrb[0].mxu0
        %v1039 = vpop.f32.mrb[0].mxu0
        %v1040 = vadd.f32 %v748, %v1039
        %v1041 = vpop.f32.mrb[0].mxu0
        %1042 = vmatprep.mubr.bf16.mxu0 0
        %1043 = vmatmul.mubr.bf16.gmra.mrb[0].mxu0 %v955
        %v1044 = vpop.f32.mrb[0].mxu0
        %v1045 = vadd.f32 %v753, %v1044
        %v1046 = vpop.f32.mrb[0].mxu0
        %v1047 = vpop.f32.mrb[0].mxu0
        %v1048 = vadd.f32 %v756, %v1047
        %v1049 = vpop.f32.mrb[0].mxu0
        %1050 = vmatprep.mubr.bf16.mxu0 0
        %1051 = vmatmul.mubr.bf16.gmra.mrb[0].mxu0 %v958
        %v1052 = vpop.f32.mrb[0].mxu0
        %v1053 = vadd.f32 %v761, %v1052
        %v1054 = vpop.f32.mrb[0].mxu0
        %v1055 = vpop.f32.mrb[0].mxu0
        %v1056 = vadd.f32 %v764, %v1055
        %v1057 = vpop.f32.mrb[0].mxu0
        %1058 = vmatprep.mubr.bf16.mxu0 0
        %1059 = vmatmul.mubr.bf16.gmra.mrb[0].mxu0 %v961
        %v1060 = vpop.f32.mrb[0].mxu0
        %v1061 = vadd.f32 %v769, %v1060
        %v1062 = vpop.f32.mrb[0].mxu0
        %v1063 = vpop.f32.mrb[0].mxu0
        %v1064 = vadd.f32 %v772, %v1063
        %v1065 = vpop.f32.mrb[0].mxu0
        %1066 = vmatprep.mubr.bf16.mxu0 0
        %1067 = vmatmul.mubr.bf16.gmra.mrb[0].mxu0 %v964
        %v1068 = vpop.f32.mrb[0].mxu0
        %v1069 = vadd.f32 %v777, %v1068
        %v1070 = vpop.f32.mrb[0].mxu0
        %v1071 = vpop.f32.mrb[0].mxu0
        %v1072 = vadd.f32 %v780, %v1071
        %v1073 = vpop.f32.mrb[0].mxu0
        %1074 = vmatprep.mubr.bf16.mxu0 0
        %1075 = vmatmul.mubr.bf16.gmra.mrb[0].mxu0 %v967
        %v1076 = vpop.f32.mrb[0].mxu0
        %v1077 = vadd.f32 %v785, %v1076
        %v1078 = vpop.f32.mrb[0].mxu0
        %v1079 = vpop.f32.mrb[0].mxu0
        %v1080 = vadd.f32 %v788, %v1079
        %v1081 = vpop.f32.mrb[0].mxu0
        %1082 = vmatprep.mubr.bf16.mxu0 0
        %1083 = vmatmul.mubr.bf16.gmra.mrb[0].mxu0 %v970
        %v1084 = vpop.f32.mrb[0].mxu0
        %v1085 = vadd.f32 %v793, %v1084
        %v1086 = vpop.f32.mrb[0].mxu0
        %v1087 = vpop.f32.mrb[0].mxu0
        %v1088 = vadd.f32 %v796, %v1087
        %v1089 = vpop.f32.mrb[0].mxu0
        %1090 = vmatprep.mubr.bf16.mxu0 0
        %1091 = vmatmul.mubr.bf16.gmra.mrb[0].mxu0 %v973
        %v1092 = vpop.f32.mrb[0].mxu0
        %v1093 = vadd.f32 %v801, %v1092
        %v1094 = vpop.f32.mrb[0].mxu0
        %v1095 = vpop.f32.mrb[0].mxu0
        %v1096 = vadd.f32 %v804, %v1095
        %v1097 = vpop.f32.mrb[0].mxu0
        %1098 = vmatprep.mubr.bf16.mxu0 0
        %1099 = vmatmul.mubr.bf16.gmra.mrb[0].mxu0 %v976
        %v1100 = vpop.f32.mrb[0].mxu0
        %v1101 = vadd.f32 %v809, %v1100
        %v1102 = vpop.f32.mrb[0].mxu0
        %v1103 = vpop.f32.mrb[0].mxu0
        %v1104 = vadd.f32 %v812, %v1103
        %v1105 = vpop.f32.mrb[0].mxu0
        %1106 = vmatprep.mubr.bf16.mxu0 0
        %1107 = vmatmul.mubr.bf16.gmra.mrb[0].mxu0 %v979
        %v1108 = vpop.f32.mrb[0].mxu0
        %v1109 = vadd.f32 %v817, %v1108
        %v1110 = vpop.f32.mrb[0].mxu0
        %v1111 = vpop.f32.mrb[0].mxu0
        %v1112 = vadd.f32 %v820, %v1111
        %v1113 = vpop.f32.mrb[0].mxu0
        %1114 = vmatprep.mubr.bf16.mxu0 0
        %1115 = vmatmul.mubr.bf16.gmra.mrb[0].mxu0 %v982
        %v1116 = vpop.f32.mrb[0].mxu0
        %v1117 = vadd.f32 %v825, %v1116
        %v1118 = vpop.f32.mrb[0].mxu0
        %v1119 = vpop.f32.mrb[0].mxu0
        %v1120 = vadd.f32 %v828, %v1119
        %v1121 = vpop.f32.mrb[0].mxu0
        %1122 = vmatprep.mubr.bf16.mxu0 0
        %1123 = vmatmul.mubr.bf16.gmra.mrb[0].mxu0 %v985
        %v1124 = vpop.f32.mrb[0].mxu0
        %v1125 = vadd.f32 %v833, %v1124
        %v1126 = vpop.f32.mrb[0].mxu0
        %v1127 = vpop.f32.mrb[0].mxu0
        %v1128 = vadd.f32 %v836, %v1127
        %v1129 = vpop.f32.mrb[0].mxu0
        %1130 = vmatprep.mubr.bf16.mxu0 0
        %1131 = vmatmul.mubr.bf16.gmra.mrb[0].mxu0 %v988
        %v1132 = vpop.f32.mrb[0].mxu0
        %v1133 = vadd.f32 %v841, %v1132
        %v1134 = vpop.f32.mrb[0].mxu0
        %v1135 = vpop.f32.mrb[0].mxu0
        %v1136 = vadd.f32 %v844, %v1135
        %v1137 = vpop.f32.mrb[0].mxu0
        %1138 = vmatprep.mubr.bf16.mxu0 0
        %1139 = vmatmul.mubr.bf16.gmra.mrb[0].mxu0 %v991
        %v1140 = vpop.f32.mrb[0].mxu0
        %v1141 = vadd.f32 %v849, %v1140
        %v1142 = vpop.f32.mrb[0].mxu0
        %v1143 = vpop.f32.mrb[0].mxu0
        %v1144 = vadd.f32 %v852, %v1143
        %v1145 = vpop.f32.mrb[0].mxu0
        %1146 = vmatprep.mubr.bf16.mxu0 0
        %1147 = vmatmul.mubr.bf16.gmra.mrb[0].mxu0 %v994
        %v1148 = vpop.f32.mrb[0].mxu0
        %v1149 = vadd.f32 %v857, %v1148
        %v1150 = vpop.f32.mrb[0].mxu0
        %v1151 = vpop.f32.mrb[0].mxu0
        %v1152 = vadd.f32 %v860, %v1151
        %v1153 = vpop.f32.mrb[0].mxu0
        %1154 = vmatprep.mubr.bf16.mxu0 0
        %1155 = vmatmul.mubr.bf16.gmra.mrb[0].mxu0 %v997
        %v1156 = vpop.f32.mrb[0].mxu0
        %v1157 = vadd.f32 %v865, %v1156
        %v1158 = vpop.f32.mrb[0].mxu0
        %v1159 = vpop.f32.mrb[0].mxu0
        %v1160 = vadd.f32 %v868, %v1159
        %v1161 = vpop.f32.mrb[0].mxu0
        %1162 = vdwg.mxu0
        %v1163 = vld [vmem:[%s168] sm:$0xe]
        %v1164 = vld [vmem:[%s168 + $0xc] sm:$0xe]
        %v1165 = vld [vmem:[%s168 + $0x18] sm:$0xe]
        %v1166 = vld [vmem:[%s168 + $0x24] sm:$0xe]
        %v1167 = vld [vmem:[%s168 + $0x30] sm:$0xe]
        %v1168 = vld [vmem:[%s168 + $0x3c] sm:$0xe]
        %v1169 = vld [vmem:[%s168 + $0x48] sm:$0xe]
        %v1170 = vld [vmem:[%s168 + $0x54] sm:$0xe]
        %v1171 = vld [vmem:[%s168 + $0x60] sm:$0xe]
        %v1172 = vld [vmem:[%s168 + $0x6c] sm:$0xe]
        %v1173 = vld [vmem:[%s168 + $0x78] sm:$0xe]
        %v1174 = vld [vmem:[%s168 + $0x84] sm:$0xe]
        %v1175 = vld [vmem:[%s168 + $0x90] sm:$0xe]
        %v1176 = vld [vmem:[%s168 + $0x9c] sm:$0xe]
        %v1177 = vld [vmem:[%s168 + $0xa8] sm:$0xe]
        %v1178 = vld [vmem:[%s168 + $0xb4] sm:$0xe]
        %vm1211 = vcmask 1042432
        %vm1212 = vcmask 1046532
        %vm1213 = vmor %vm1211, %vm1212
        %v1214 = vrot.slane %v1163, 5
        %v1215 = vrot.slane %v1214, 4
        %v1216 = vrot.slane %v172, 5
        %v1217 = vsel %vm1213, %v1215, %v1216
        %v1218 = vrot.slane %v1216, 4
        %v1219 = vrot.slane %v204, 5
        %v1220 = vsel %vm1213, %v1218, %v1219
        %v1221 = vrot.slane %v1164, 5
        %v1222 = vrot.slane %v1221, 4
        %v1223 = vrot.slane %v174, 5
        %v1224 = vsel %vm1213, %v1222, %v1223
        %v1225 = vrot.slane %v1223, 4
        %v1226 = vrot.slane %v205, 5
        %v1227 = vsel %vm1213, %v1225, %v1226
        %v1228 = vrot.slane %v1165, 5
        %v1229 = vrot.slane %v1228, 4
        %v1230 = vrot.slane %v176, 5
        %v1231 = vsel %vm1213, %v1229, %v1230
        %v1232 = vrot.slane %v1230, 4
        %v1233 = vrot.slane %v206, 5
        %v1234 = vsel %vm1213, %v1232, %v1233
        %v1235 = vrot.slane %v1166, 5
        %v1236 = vrot.slane %v1235, 4
        %v1237 = vrot.slane %v178, 5
        %v1238 = vsel %vm1213, %v1236, %v1237
        %v1239 = vrot.slane %v1237, 4
        %v1240 = vrot.slane %v207, 5
        %v1241 = vsel %vm1213, %v1239, %v1240
        %v1242 = vrot.slane %v1167, 5
        %v1243 = vrot.slane %v1242, 4
        %v1244 = vrot.slane %v180, 5
        %v1245 = vsel %vm1213, %v1243, %v1244
        %v1246 = vrot.slane %v1244, 4
        %v1247 = vrot.slane %v208, 5
        %v1248 = vsel %vm1213, %v1246, %v1247
        %v1249 = vrot.slane %v1168, 5
        %v1250 = vrot.slane %v1249, 4
        %v1251 = vrot.slane %v182, 5
        %v1252 = vsel %vm1213, %v1250, %v1251
        %v1253 = vrot.slane %v1251, 4
        %v1254 = vrot.slane %v209, 5
        %v1255 = vsel %vm1213, %v1253, %v1254
        %v1256 = vrot.slane %v1169, 5
        %v1257 = vrot.slane %v1256, 4
        %v1258 = vrot.slane %v184, 5
        %v1259 = vsel %vm1213, %v1257, %v1258
        %v1260 = vrot.slane %v1258, 4
        %v1261 = vrot.slane %v210, 5
        %v1262 = vsel %vm1213, %v1260, %v1261
        %v1263 = vrot.slane %v1170, 5
        %v1264 = vrot.slane %v1263, 4
        %v1265 = vrot.slane %v186, 5
        %v1266 = vsel %vm1213, %v1264, %v1265
        %v1267 = vrot.slane %v1265, 4
        %v1268 = vrot.slane %v211, 5
        %v1269 = vsel %vm1213, %v1267, %v1268
        %v1270 = vrot.slane %v1171, 5
        %v1271 = vrot.slane %v1270, 4
        %v1272 = vrot.slane %v188, 5
        %v1273 = vsel %vm1213, %v1271, %v1272
        %v1274 = vrot.slane %v1272, 4
        %v1275 = vrot.slane %v212, 5
        %v1276 = vsel %vm1213, %v1274, %v1275
        %v1277 = vrot.slane %v1172, 5
        %v1278 = vrot.slane %v1277, 4
        %v1279 = vrot.slane %v190, 5
        %v1280 = vsel %vm1213, %v1278, %v1279
        %v1281 = vrot.slane %v1279, 4
        %v1282 = vrot.slane %v213, 5
        %v1283 = vsel %vm1213, %v1281, %v1282
        %v1284 = vrot.slane %v1173, 5
        %v1285 = vrot.slane %v1284, 4
        %v1286 = vrot.slane %v192, 5
        %v1287 = vsel %vm1213, %v1285, %v1286
        %v1288 = vrot.slane %v1286, 4
        %v1289 = vrot.slane %v214, 5
        %v1290 = vsel %vm1213, %v1288, %v1289
        %v1291 = vrot.slane %v1174, 5
        %v1292 = vrot.slane %v1291, 4
        %v1293 = vrot.slane %v194, 5
        %v1294 = vsel %vm1213, %v1292, %v1293
        %v1295 = vrot.slane %v1293, 4
        %v1296 = vrot.slane %v215, 5
        %v1297 = vsel %vm1213, %v1295, %v1296
        %v1298 = vrot.slane %v1175, 5
        %v1299 = vrot.slane %v1298, 4
        %v1300 = vrot.slane %v196, 5
        %v1301 = vsel %vm1213, %v1299, %v1300
        %v1302 = vrot.slane %v1300, 4
        %v1303 = vrot.slane %v216, 5
        %v1304 = vsel %vm1213, %v1302, %v1303
        %v1305 = vrot.slane %v1176, 5
        %v1306 = vrot.slane %v1305, 4
        %v1307 = vrot.slane %v198, 5
        %v1308 = vsel %vm1213, %v1306, %v1307
        %v1309 = vrot.slane %v1307, 4
        %v1310 = vrot.slane %v217, 5
        %v1311 = vsel %vm1213, %v1309, %v1310
        %v1312 = vrot.slane %v1177, 5
        %v1313 = vrot.slane %v1312, 4
        %v1314 = vrot.slane %v200, 5
        %v1315 = vsel %vm1213, %v1313, %v1314
        %v1316 = vrot.slane %v1314, 4
        %v1317 = vrot.slane %v218, 5
        %v1318 = vsel %vm1213, %v1316, %v1317
        %v1319 = vrot.slane %v1178, 5
        %v1320 = vrot.slane %v1319, 4
        %v1321 = vrot.slane %v202, 5
        %v1322 = vsel %vm1213, %v1320, %v1321
        %v1323 = vrot.slane %v1321, 4
        %v1324 = vrot.slane %v219, 5
        %v1325 = vsel %vm1213, %v1323, %v1324
        %s1326 = scalar_lea.vmem %s1, 4
        %v1327 = vld [vmem:[%s1326] sm:$0x3]
        %v1328 = vunpack.c.l.b16 %v1217
        %v1329 = vunpack.c.l.b16 %v1220
        %v1330 = vunpack.c.l.b16 %v1224
        %v1331 = vunpack.c.l.b16 %v1227
        %v1332 = vunpack.c.l.b16 %v1231
        %v1333 = vunpack.c.l.b16 %v1234
        %v1334 = vunpack.c.l.b16 %v1238
        %v1335 = vunpack.c.l.b16 %v1241
        %v1336 = vunpack.c.l.b16 %v1245
        %v1337 = vunpack.c.l.b16 %v1248
        %v1338 = vunpack.c.l.b16 %v1252
        %v1339 = vunpack.c.l.b16 %v1255
        %v1340 = vunpack.c.l.b16 %v1259
        %v1341 = vunpack.c.l.b16 %v1262
        %v1342 = vunpack.c.l.b16 %v1266
        %v1343 = vunpack.c.l.b16 %v1269
        %v1344 = vunpack.c.l.b16 %v1273
        %v1345 = vunpack.c.l.b16 %v1276
        %v1346 = vunpack.c.l.b16 %v1280
        %v1347 = vunpack.c.l.b16 %v1283
        %v1348 = vunpack.c.l.b16 %v1287
        %v1349 = vunpack.c.l.b16 %v1290
        %v1350 = vunpack.c.l.b16 %v1294
        %v1351 = vunpack.c.l.b16 %v1297
        %v1352 = vunpack.c.l.b16 %v1301
        %v1353 = vunpack.c.l.b16 %v1304
        %v1354 = vunpack.c.l.b16 %v1308
        %v1355 = vunpack.c.l.b16 %v1311
        %v1356 = vunpack.c.l.b16 %v1315
        %v1357 = vunpack.c.l.b16 %v1318
        %v1358 = vunpack.c.l.b16 %v1322
        %v1359 = vunpack.c.l.b16 %v1325
        %v1360 = vpack.c.b16 %v1329, %v1328
        %v1361 = vpack.c.b16 %v1331, %v1330
        %v1362 = vpack.c.b16 %v1333, %v1332
        %v1363 = vpack.c.b16 %v1335, %v1334
        %v1364 = vpack.c.b16 %v1337, %v1336
        %v1365 = vpack.c.b16 %v1339, %v1338
        %v1366 = vpack.c.b16 %v1341, %v1340
        %v1367 = vpack.c.b16 %v1343, %v1342
        %v1368 = vpack.c.b16 %v1345, %v1344
        %v1369 = vpack.c.b16 %v1347, %v1346
        %v1370 = vpack.c.b16 %v1349, %v1348
        %v1371 = vpack.c.b16 %v1351, %v1350
        %v1372 = vpack.c.b16 %v1353, %v1352
        %v1373 = vpack.c.b16 %v1355, %v1354
        %v1374 = vpack.c.b16 %v1357, %v1356
        %v1375 = vpack.c.b16 %v1359, %v1358
        %v1377 = vsel %vm657, %v1360, 0
        %v1380 = vsel %vm657, %v1361, 0
        %v1383 = vsel %vm657, %v1362, 0
        %v1386 = vsel %vm657, %v1363, 0
        %v1389 = vsel %vm657, %v1364, 0
        %v1392 = vsel %vm657, %v1365, 0
        %v1395 = vsel %vm657, %v1366, 0
        %v1398 = vsel %vm657, %v1367, 0
        %v1401 = vsel %vm657, %v1368, 0
        %v1404 = vsel %vm657, %v1369, 0
        %v1407 = vsel %vm657, %v1370, 0
        %v1410 = vsel %vm657, %v1371, 0
        %v1413 = vsel %vm657, %v1372, 0
        %v1416 = vsel %vm657, %v1373, 0
        %v1419 = vsel %vm657, %v1374, 0
        %v1422 = vsel %vm657, %v1375, 0
        %v1425 = vsel %vm706, %v1327, 0
        %1427 = vmatprep.subr.bf16.mxu0 0
        %1428 = vmatpush1.bf16.msra.mxu0 %v1425
        %1429 = vmatprep.subr.bf16.mxu0 0
        %1430 = vmatpush1.bf16.msra.mxu0 0
        %1431 = vmatprep.subr.bf16.mxu0 0
        %1432 = vmatpush1.bf16.msra.mxu0 0
        %1433 = vmatprep.subr.bf16.mxu0 0
        %1434 = vmatpush1.bf16.msra.mxu0 0
        %1435 = vmatprep.subr.bf16.mxu0 0
        %1436 = vmatpush1.bf16.msra.mxu0 0
        %1437 = vmatprep.subr.bf16.mxu0 0
        %1438 = vmatpush1.bf16.msra.mxu0 0
        %1439 = vmatprep.subr.bf16.mxu0 0
        %1440 = vmatpush1.bf16.msra.mxu0 0
        %1441 = vmatprep.subr.bf16.mxu0 0
        %1442 = vmatpush1.bf16.msra.mxu0 0
        %1443 = vmatprep.subr.bf16.mxu0 0
        %1444 = vmatpush1.bf16.msra.mxu0 0
        %1445 = vmatprep.subr.bf16.mxu0 0
        %1446 = vmatpush1.bf16.msra.mxu0 0
        %1447 = vmatprep.subr.bf16.mxu0 0
        %1448 = vmatpush1.bf16.msra.mxu0 0
        %1449 = vmatprep.subr.bf16.mxu0 0
        %1450 = vmatpush1.bf16.msra.mxu0 0
        %1451 = vmatprep.subr.bf16.mxu0 0
        %1452 = vmatpush1.bf16.msra.mxu0 0
        %1453 = vmatprep.subr.bf16.mxu0 0
        %1454 = vmatpush1.bf16.msra.mxu0 0
        %1455 = vmatprep.subr.bf16.mxu0 0
        %1456 = vmatpush1.bf16.msra.mxu0 0
        %1457 = vmatprep.subr.bf16.mxu0 0
        %1458 = vmatpush1.bf16.msra.mxu0 0
        %1459 = vmatprep.mubr.bf16.mxu0 0
        %1460 = vmatmul.mubr.bf16.gmra.mrb[0].mxu0 %v1377
        %v1461 = vpop.f32.mrb[0].mxu0
        %v1462 = vadd.f32 0.0, %v1461
        %v1463 = vpop.f32.mrb[0].mxu0
        %v1464 = vpop.f32.mrb[0].mxu0
        %v1465 = vadd.f32 0.0, %v1464
        %v1466 = vpop.f32.mrb[0].mxu0
        %1467 = vmatprep.mubr.bf16.mxu0 0
        %1468 = vmatmul.mubr.bf16.gmra.mrb[0].mxu0 %v1380
        %v1469 = vpop.f32.mrb[0].mxu0
        %v1470 = vadd.f32 0.0, %v1469
        %v1471 = vpop.f32.mrb[0].mxu0
        %v1472 = vpop.f32.mrb[0].mxu0
        %v1473 = vadd.f32 0.0, %v1472
        %v1474 = vpop.f32.mrb[0].mxu0
        %1475 = vmatprep.mubr.bf16.mxu0 0
        %1476 = vmatmul.mubr.bf16.gmra.mrb[0].mxu0 %v1383
        %v1477 = vpop.f32.mrb[0].mxu0
        %v1478 = vadd.f32 0.0, %v1477
        %v1479 = vpop.f32.mrb[0].mxu0
        %v1480 = vpop.f32.mrb[0].mxu0
        %v1481 = vadd.f32 0.0, %v1480
        %v1482 = vpop.f32.mrb[0].mxu0
        %1483 = vmatprep.mubr.bf16.mxu0 0
        %1484 = vmatmul.mubr.bf16.gmra.mrb[0].mxu0 %v1386
        %v1485 = vpop.f32.mrb[0].mxu0
        %v1486 = vadd.f32 0.0, %v1485
        %v1487 = vpop.f32.mrb[0].mxu0
        %v1488 = vpop.f32.mrb[0].mxu0
        %v1489 = vadd.f32 0.0, %v1488
        %v1490 = vpop.f32.mrb[0].mxu0
        %1491 = vmatprep.mubr.bf16.mxu0 0
        %1492 = vmatmul.mubr.bf16.gmra.mrb[0].mxu0 %v1389
        %v1493 = vpop.f32.mrb[0].mxu0
        %v1494 = vadd.f32 0.0, %v1493
        %v1495 = vpop.f32.mrb[0].mxu0
        %v1496 = vpop.f32.mrb[0].mxu0
        %v1497 = vadd.f32 0.0, %v1496
        %v1498 = vpop.f32.mrb[0].mxu0
        %1499 = vmatprep.mubr.bf16.mxu0 0
        %1500 = vmatmul.mubr.bf16.gmra.mrb[0].mxu0 %v1392
        %v1501 = vpop.f32.mrb[0].mxu0
        %v1502 = vadd.f32 0.0, %v1501
        %v1503 = vpop.f32.mrb[0].mxu0
        %v1504 = vpop.f32.mrb[0].mxu0
        %v1505 = vadd.f32 0.0, %v1504
        %v1506 = vpop.f32.mrb[0].mxu0
        %1507 = vmatprep.mubr.bf16.mxu0 0
        %1508 = vmatmul.mubr.bf16.gmra.mrb[0].mxu0 %v1395
        %v1509 = vpop.f32.mrb[0].mxu0
        %v1510 = vadd.f32 0.0, %v1509
        %v1511 = vpop.f32.mrb[0].mxu0
        %v1512 = vpop.f32.mrb[0].mxu0
        %v1513 = vadd.f32 0.0, %v1512
        %v1514 = vpop.f32.mrb[0].mxu0
        %1515 = vmatprep.mubr.bf16.mxu0 0
        %1516 = vmatmul.mubr.bf16.gmra.mrb[0].mxu0 %v1398
        %v1517 = vpop.f32.mrb[0].mxu0
        %v1518 = vadd.f32 0.0, %v1517
        %v1519 = vpop.f32.mrb[0].mxu0
        %v1520 = vpop.f32.mrb[0].mxu0
        %v1521 = vadd.f32 0.0, %v1520
        %v1522 = vpop.f32.mrb[0].mxu0
        %1523 = vmatprep.mubr.bf16.mxu0 0
        %1524 = vmatmul.mubr.bf16.gmra.mrb[0].mxu0 %v1401
        %v1525 = vpop.f32.mrb[0].mxu0
        %v1526 = vadd.f32 0.0, %v1525
        %v1527 = vpop.f32.mrb[0].mxu0
        %v1528 = vpop.f32.mrb[0].mxu0
        %v1529 = vadd.f32 0.0, %v1528
        %v1530 = vpop.f32.mrb[0].mxu0
        %1531 = vmatprep.mubr.bf16.mxu0 0
        %1532 = vmatmul.mubr.bf16.gmra.mrb[0].mxu0 %v1404
        %v1533 = vpop.f32.mrb[0].mxu0
        %v1534 = vadd.f32 0.0, %v1533
        %v1535 = vpop.f32.mrb[0].mxu0
        %v1536 = vpop.f32.mrb[0].mxu0
        %v1537 = vadd.f32 0.0, %v1536
        %v1538 = vpop.f32.mrb[0].mxu0
        %1539 = vmatprep.mubr.bf16.mxu0 0
        %1540 = vmatmul.mubr.bf16.gmra.mrb[0].mxu0 %v1407
        %v1541 = vpop.f32.mrb[0].mxu0
        %v1542 = vadd.f32 0.0, %v1541
        %v1543 = vpop.f32.mrb[0].mxu0
        %v1544 = vpop.f32.mrb[0].mxu0
        %v1545 = vadd.f32 0.0, %v1544
        %v1546 = vpop.f32.mrb[0].mxu0
        %1547 = vmatprep.mubr.bf16.mxu0 0
        %1548 = vmatmul.mubr.bf16.gmra.mrb[0].mxu0 %v1410
        %v1549 = vpop.f32.mrb[0].mxu0
        %v1550 = vadd.f32 0.0, %v1549
        %v1551 = vpop.f32.mrb[0].mxu0
        %v1552 = vpop.f32.mrb[0].mxu0
        %v1553 = vadd.f32 0.0, %v1552
        %v1554 = vpop.f32.mrb[0].mxu0
        %1555 = vmatprep.mubr.bf16.mxu0 0
        %1556 = vmatmul.mubr.bf16.gmra.mrb[0].mxu0 %v1413
        %v1557 = vpop.f32.mrb[0].mxu0
        %v1558 = vadd.f32 0.0, %v1557
        %v1559 = vpop.f32.mrb[0].mxu0
        %v1560 = vpop.f32.mrb[0].mxu0
        %v1561 = vadd.f32 0.0, %v1560
        %v1562 = vpop.f32.mrb[0].mxu0
        %1563 = vmatprep.mubr.bf16.mxu0 0
        %1564 = vmatmul.mubr.bf16.gmra.mrb[0].mxu0 %v1416
        %v1565 = vpop.f32.mrb[0].mxu0
        %v1566 = vadd.f32 0.0, %v1565
        %v1567 = vpop.f32.mrb[0].mxu0
        %v1568 = vpop.f32.mrb[0].mxu0
        %v1569 = vadd.f32 0.0, %v1568
        %v1570 = vpop.f32.mrb[0].mxu0
        %1571 = vmatprep.mubr.bf16.mxu0 0
        %1572 = vmatmul.mubr.bf16.gmra.mrb[0].mxu0 %v1419
        %v1573 = vpop.f32.mrb[0].mxu0
        %v1574 = vadd.f32 0.0, %v1573
        %v1575 = vpop.f32.mrb[0].mxu0
        %v1576 = vpop.f32.mrb[0].mxu0
        %v1577 = vadd.f32 0.0, %v1576
        %v1578 = vpop.f32.mrb[0].mxu0
        %1579 = vmatprep.mubr.bf16.mxu0 0
        %1580 = vmatmul.mubr.bf16.gmra.mrb[0].mxu0 %v1422
        %v1581 = vpop.f32.mrb[0].mxu0
        %v1582 = vadd.f32 0.0, %v1581
        %v1583 = vpop.f32.mrb[0].mxu0
        %v1584 = vpop.f32.mrb[0].mxu0
        %v1585 = vadd.f32 0.0, %v1584
        %v1586 = vpop.f32.mrb[0].mxu0
        %1587 = vdwg.mxu0
        %v1588 = vadd.f32 %v1037, %v1462
        %v1589 = vadd.f32 %v1040, %v1465
        %v1590 = vadd.f32 %v1045, %v1470
        %v1591 = vadd.f32 %v1048, %v1473
        %v1592 = vadd.f32 %v1053, %v1478
        %v1593 = vadd.f32 %v1056, %v1481
        %v1594 = vadd.f32 %v1061, %v1486
        %v1595 = vadd.f32 %v1064, %v1489
        %v1596 = vadd.f32 %v1069, %v1494
        %v1597 = vadd.f32 %v1072, %v1497
        %v1598 = vadd.f32 %v1077, %v1502
        %v1599 = vadd.f32 %v1080, %v1505
        %v1600 = vadd.f32 %v1085, %v1510
        %v1601 = vadd.f32 %v1088, %v1513
        %v1602 = vadd.f32 %v1093, %v1518
        %v1603 = vadd.f32 %v1096, %v1521
        %v1604 = vadd.f32 %v1101, %v1526
        %v1605 = vadd.f32 %v1104, %v1529
        %v1606 = vadd.f32 %v1109, %v1534
        %v1607 = vadd.f32 %v1112, %v1537
        %v1608 = vadd.f32 %v1117, %v1542
        %v1609 = vadd.f32 %v1120, %v1545
        %v1610 = vadd.f32 %v1125, %v1550
        %v1611 = vadd.f32 %v1128, %v1553
        %v1612 = vadd.f32 %v1133, %v1558
        %v1613 = vadd.f32 %v1136, %v1561
        %v1614 = vadd.f32 %v1141, %v1566
        %v1615 = vadd.f32 %v1144, %v1569
        %v1616 = vadd.f32 %v1149, %v1574
        %v1617 = vadd.f32 %v1152, %v1577
        %v1618 = vadd.f32 %v1157, %v1582
        %v1619 = vadd.f32 %v1160, %v1585
        %s1620 = scalar_lea.vmem %s168, 12
        %v1621 = vld [vmem:[%s1620] sm:$0xf]
        %v1622 = vld [vmem:[%s1620 + $0x4] sm:$0xf]
        %v1623 = vld [vmem:[%s1620 + $0xc] sm:$0xf]
        %v1624 = vld [vmem:[%s1620 + $0x10] sm:$0xf]
        %v1625 = vld [vmem:[%s1620 + $0x18] sm:$0xf]
        %v1626 = vld [vmem:[%s1620 + $0x1c] sm:$0xf]
        %v1627 = vld [vmem:[%s1620 + $0x24] sm:$0xf]
        %v1628 = vld [vmem:[%s1620 + $0x28] sm:$0xf]
        %v1629 = vld [vmem:[%s1620 + $0x30] sm:$0xf]
        %v1630 = vld [vmem:[%s1620 + $0x34] sm:$0xf]
        %v1631 = vld [vmem:[%s1620 + $0x3c] sm:$0xf]
        %v1632 = vld [vmem:[%s1620 + $0x40] sm:$0xf]
        %v1633 = vld [vmem:[%s1620 + $0x48] sm:$0xf]
        %v1634 = vld [vmem:[%s1620 + $0x4c] sm:$0xf]
        %v1635 = vld [vmem:[%s1620 + $0x54] sm:$0xf]
        %v1636 = vld [vmem:[%s1620 + $0x58] sm:$0xf]
        %v1637 = vld [vmem:[%s1620 + $0x60] sm:$0xf]
        %v1638 = vld [vmem:[%s1620 + $0x64] sm:$0xf]
        %v1639 = vld [vmem:[%s1620 + $0x6c] sm:$0xf]
        %v1640 = vld [vmem:[%s1620 + $0x70] sm:$0xf]
        %v1641 = vld [vmem:[%s1620 + $0x78] sm:$0xf]
        %v1642 = vld [vmem:[%s1620 + $0x7c] sm:$0xf]
        %v1643 = vld [vmem:[%s1620 + $0x84] sm:$0xf]
        %v1644 = vld [vmem:[%s1620 + $0x88] sm:$0xf]
        %v1645 = vld [vmem:[%s1620 + $0x90] sm:$0xf]
        %v1646 = vld [vmem:[%s1620 + $0x94] sm:$0xf]
        %v1647 = vld [vmem:[%s1620 + $0x9c] sm:$0xf]
        %v1648 = vld [vmem:[%s1620 + $0xa0] sm:$0xf]
        %v1649 = vld [vmem:[%s1620 + $0xa8] sm:$0xf]
        %v1650 = vld [vmem:[%s1620 + $0xac] sm:$0xf]
        %v1651 = vld [vmem:[%s1620 + $0xb4] sm:$0xf]
        %v1652 = vld [vmem:[%s1620 + $0xb8] sm:$0xf]
        %s1653 = scalar_lea.vmem %s1, 6
        %v1654 = vld [vmem:[%s1653] sm:$0x3]
        %v1687 = vunpack.c.l.b16 %v1621
        %v1688 = vunpack.c.l.b16 %v1622
        %v1689 = vunpack.c.l.b16 %v1623
        %v1690 = vunpack.c.l.b16 %v1624
        %v1691 = vunpack.c.l.b16 %v1625
        %v1692 = vunpack.c.l.b16 %v1626
        %v1693 = vunpack.c.l.b16 %v1627
        %v1694 = vunpack.c.l.b16 %v1628
        %v1695 = vunpack.c.l.b16 %v1629
        %v1696 = vunpack.c.l.b16 %v1630
        %v1697 = vunpack.c.l.b16 %v1631
        %v1698 = vunpack.c.l.b16 %v1632
        %v1699 = vunpack.c.l.b16 %v1633
        %v1700 = vunpack.c.l.b16 %v1634
        %v1701 = vunpack.c.l.b16 %v1635
        %v1702 = vunpack.c.l.b16 %v1636
        %v1703 = vunpack.c.l.b16 %v1637
        %v1704 = vunpack.c.l.b16 %v1638
        %v1705 = vunpack.c.l.b16 %v1639
        %v1706 = vunpack.c.l.b16 %v1640
        %v1707 = vunpack.c.l.b16 %v1641
        %v1708 = vunpack.c.l.b16 %v1642
        %v1709 = vunpack.c.l.b16 %v1643
        %v1710 = vunpack.c.l.b16 %v1644
        %v1711 = vunpack.c.l.b16 %v1645
        %v1712 = vunpack.c.l.b16 %v1646
        %v1713 = vunpack.c.l.b16 %v1647
        %v1714 = vunpack.c.l.b16 %v1648
        %v1715 = vunpack.c.l.b16 %v1649
        %v1716 = vunpack.c.l.b16 %v1650
        %v1717 = vunpack.c.l.b16 %v1651
        %v1718 = vunpack.c.l.b16 %v1652
        %v1719 = vpack.c.b16 %v1688, %v1687
        %v1720 = vpack.c.b16 %v1690, %v1689
        %v1721 = vpack.c.b16 %v1692, %v1691
        %v1722 = vpack.c.b16 %v1694, %v1693
        %v1723 = vpack.c.b16 %v1696, %v1695
        %v1724 = vpack.c.b16 %v1698, %v1697
        %v1725 = vpack.c.b16 %v1700, %v1699
        %v1726 = vpack.c.b16 %v1702, %v1701
        %v1727 = vpack.c.b16 %v1704, %v1703
        %v1728 = vpack.c.b16 %v1706, %v1705
        %v1729 = vpack.c.b16 %v1708, %v1707
        %v1730 = vpack.c.b16 %v1710, %v1709
        %v1731 = vpack.c.b16 %v1712, %v1711
        %v1732 = vpack.c.b16 %v1714, %v1713
        %v1733 = vpack.c.b16 %v1716, %v1715
        %v1734 = vpack.c.b16 %v1718, %v1717
        %v1736 = vsel %vm657, %v1719, 0
        %v1739 = vsel %vm657, %v1720, 0
        %v1742 = vsel %vm657, %v1721, 0
        %v1745 = vsel %vm657, %v1722, 0
        %v1748 = vsel %vm657, %v1723, 0
        %v1751 = vsel %vm657, %v1724, 0
        %v1754 = vsel %vm657, %v1725, 0
        %v1757 = vsel %vm657, %v1726, 0
        %v1760 = vsel %vm657, %v1727, 0
        %v1763 = vsel %vm657, %v1728, 0
        %v1766 = vsel %vm657, %v1729, 0
        %v1769 = vsel %vm657, %v1730, 0
        %v1772 = vsel %vm657, %v1731, 0
        %v1775 = vsel %vm657, %v1732, 0
        %v1778 = vsel %vm657, %v1733, 0
        %v1781 = vsel %vm657, %v1734, 0
        %v1784 = vsel %vm706, %v1654, 0
        %1786 = vmatprep.subr.bf16.mxu0 0
        %1787 = vmatpush1.bf16.msra.mxu0 %v1784
        %1788 = vmatprep.subr.bf16.mxu0 0
        %1789 = vmatpush1.bf16.msra.mxu0 0
        %1790 = vmatprep.subr.bf16.mxu0 0
        %1791 = vmatpush1.bf16.msra.mxu0 0
        %1792 = vmatprep.subr.bf16.mxu0 0
        %1793 = vmatpush1.bf16.msra.mxu0 0
        %1794 = vmatprep.subr.bf16.mxu0 0
        %1795 = vmatpush1.bf16.msra.mxu0 0
        %1796 = vmatprep.subr.bf16.mxu0 0
        %1797 = vmatpush1.bf16.msra.mxu0 0
        %1798 = vmatprep.subr.bf16.mxu0 0
        %1799 = vmatpush1.bf16.msra.mxu0 0
        %1800 = vmatprep.subr.bf16.mxu0 0
        %1801 = vmatpush1.bf16.msra.mxu0 0
        %1802 = vmatprep.subr.bf16.mxu0 0
        %1803 = vmatpush1.bf16.msra.mxu0 0
        %1804 = vmatprep.subr.bf16.mxu0 0
        %1805 = vmatpush1.bf16.msra.mxu0 0
        %1806 = vmatprep.subr.bf16.mxu0 0
        %1807 = vmatpush1.bf16.msra.mxu0 0
        %1808 = vmatprep.subr.bf16.mxu0 0
        %1809 = vmatpush1.bf16.msra.mxu0 0
        %1810 = vmatprep.subr.bf16.mxu0 0
        %1811 = vmatpush1.bf16.msra.mxu0 0
        %1812 = vmatprep.subr.bf16.mxu0 0
        %1813 = vmatpush1.bf16.msra.mxu0 0
        %1814 = vmatprep.subr.bf16.mxu0 0
        %1815 = vmatpush1.bf16.msra.mxu0 0
        %1816 = vmatprep.subr.bf16.mxu0 0
        %1817 = vmatpush1.bf16.msra.mxu0 0
        %1818 = vmatprep.mubr.bf16.mxu0 0
        %1819 = vmatmul.mubr.bf16.gmra.mrb[0].mxu0 %v1736
        %v1820 = vpop.f32.mrb[0].mxu0
        %v1821 = vadd.f32 0.0, %v1820
        %v1822 = vpop.f32.mrb[0].mxu0
        %v1823 = vpop.f32.mrb[0].mxu0
        %v1824 = vadd.f32 0.0, %v1823
        %v1825 = vpop.f32.mrb[0].mxu0
        %1826 = vmatprep.mubr.bf16.mxu0 0
        %1827 = vmatmul.mubr.bf16.gmra.mrb[0].mxu0 %v1739
        %v1828 = vpop.f32.mrb[0].mxu0
        %v1829 = vadd.f32 0.0, %v1828
        %v1830 = vpop.f32.mrb[0].mxu0
        %v1831 = vpop.f32.mrb[0].mxu0
        %v1832 = vadd.f32 0.0, %v1831
        %v1833 = vpop.f32.mrb[0].mxu0
        %1834 = vmatprep.mubr.bf16.mxu0 0
        %1835 = vmatmul.mubr.bf16.gmra.mrb[0].mxu0 %v1742
        %v1836 = vpop.f32.mrb[0].mxu0
        %v1837 = vadd.f32 0.0, %v1836
        %v1838 = vpop.f32.mrb[0].mxu0
        %v1839 = vpop.f32.mrb[0].mxu0
        %v1840 = vadd.f32 0.0, %v1839
        %v1841 = vpop.f32.mrb[0].mxu0
        %1842 = vmatprep.mubr.bf16.mxu0 0
        %1843 = vmatmul.mubr.bf16.gmra.mrb[0].mxu0 %v1745
        %v1844 = vpop.f32.mrb[0].mxu0
        %v1845 = vadd.f32 0.0, %v1844
        %v1846 = vpop.f32.mrb[0].mxu0
        %v1847 = vpop.f32.mrb[0].mxu0
        %v1848 = vadd.f32 0.0, %v1847
        %v1849 = vpop.f32.mrb[0].mxu0
        %1850 = vmatprep.mubr.bf16.mxu0 0
        %1851 = vmatmul.mubr.bf16.gmra.mrb[0].mxu0 %v1748
        %v1852 = vpop.f32.mrb[0].mxu0
        %v1853 = vadd.f32 0.0, %v1852
        %v1854 = vpop.f32.mrb[0].mxu0
        %v1855 = vpop.f32.mrb[0].mxu0
        %v1856 = vadd.f32 0.0, %v1855
        %v1857 = vpop.f32.mrb[0].mxu0
        %1858 = vmatprep.mubr.bf16.mxu0 0
        %1859 = vmatmul.mubr.bf16.gmra.mrb[0].mxu0 %v1751
        %v1860 = vpop.f32.mrb[0].mxu0
        %v1861 = vadd.f32 0.0, %v1860
        %v1862 = vpop.f32.mrb[0].mxu0
        %v1863 = vpop.f32.mrb[0].mxu0
        %v1864 = vadd.f32 0.0, %v1863
        %v1865 = vpop.f32.mrb[0].mxu0
        %1866 = vmatprep.mubr.bf16.mxu0 0
        %1867 = vmatmul.mubr.bf16.gmra.mrb[0].mxu0 %v1754
        %v1868 = vpop.f32.mrb[0].mxu0
        %v1869 = vadd.f32 0.0, %v1868
        %v1870 = vpop.f32.mrb[0].mxu0
        %v1871 = vpop.f32.mrb[0].mxu0
        %v1872 = vadd.f32 0.0, %v1871
        %v1873 = vpop.f32.mrb[0].mxu0
        %1874 = vmatprep.mubr.bf16.mxu0 0
        %1875 = vmatmul.mubr.bf16.gmra.mrb[0].mxu0 %v1757
        %v1876 = vpop.f32.mrb[0].mxu0
        %v1877 = vadd.f32 0.0, %v1876
        %v1878 = vpop.f32.mrb[0].mxu0
        %v1879 = vpop.f32.mrb[0].mxu0
        %v1880 = vadd.f32 0.0, %v1879
        %v1881 = vpop.f32.mrb[0].mxu0
        %1882 = vmatprep.mubr.bf16.mxu0 0
        %1883 = vmatmul.mubr.bf16.gmra.mrb[0].mxu0 %v1760
        %v1884 = vpop.f32.mrb[0].mxu0
        %v1885 = vadd.f32 0.0, %v1884
        %v1886 = vpop.f32.mrb[0].mxu0
        %v1887 = vpop.f32.mrb[0].mxu0
        %v1888 = vadd.f32 0.0, %v1887
        %v1889 = vpop.f32.mrb[0].mxu0
        %1890 = vmatprep.mubr.bf16.mxu0 0
        %1891 = vmatmul.mubr.bf16.gmra.mrb[0].mxu0 %v1763
        %v1892 = vpop.f32.mrb[0].mxu0
        %v1893 = vadd.f32 0.0, %v1892
        %v1894 = vpop.f32.mrb[0].mxu0
        %v1895 = vpop.f32.mrb[0].mxu0
        %v1896 = vadd.f32 0.0, %v1895
        %v1897 = vpop.f32.mrb[0].mxu0
        %1898 = vmatprep.mubr.bf16.mxu0 0
        %1899 = vmatmul.mubr.bf16.gmra.mrb[0].mxu0 %v1766
        %v1900 = vpop.f32.mrb[0].mxu0
        %v1901 = vadd.f32 0.0, %v1900
        %v1902 = vpop.f32.mrb[0].mxu0
        %v1903 = vpop.f32.mrb[0].mxu0
        %v1904 = vadd.f32 0.0, %v1903
        %v1905 = vpop.f32.mrb[0].mxu0
        %1906 = vmatprep.mubr.bf16.mxu0 0
        %1907 = vmatmul.mubr.bf16.gmra.mrb[0].mxu0 %v1769
        %v1908 = vpop.f32.mrb[0].mxu0
        %v1909 = vadd.f32 0.0, %v1908
        %v1910 = vpop.f32.mrb[0].mxu0
        %v1911 = vpop.f32.mrb[0].mxu0
        %v1912 = vadd.f32 0.0, %v1911
        %v1913 = vpop.f32.mrb[0].mxu0
        %1914 = vmatprep.mubr.bf16.mxu0 0
        %1915 = vmatmul.mubr.bf16.gmra.mrb[0].mxu0 %v1772
        %v1916 = vpop.f32.mrb[0].mxu0
        %v1917 = vadd.f32 0.0, %v1916
        %v1918 = vpop.f32.mrb[0].mxu0
        %v1919 = vpop.f32.mrb[0].mxu0
        %v1920 = vadd.f32 0.0, %v1919
        %v1921 = vpop.f32.mrb[0].mxu0
        %1922 = vmatprep.mubr.bf16.mxu0 0
        %1923 = vmatmul.mubr.bf16.gmra.mrb[0].mxu0 %v1775
        %v1924 = vpop.f32.mrb[0].mxu0
        %v1925 = vadd.f32 0.0, %v1924
        %v1926 = vpop.f32.mrb[0].mxu0
        %v1927 = vpop.f32.mrb[0].mxu0
        %v1928 = vadd.f32 0.0, %v1927
        %v1929 = vpop.f32.mrb[0].mxu0
        %1930 = vmatprep.mubr.bf16.mxu0 0
        %1931 = vmatmul.mubr.bf16.gmra.mrb[0].mxu0 %v1778
        %v1932 = vpop.f32.mrb[0].mxu0
        %v1933 = vadd.f32 0.0, %v1932
        %v1934 = vpop.f32.mrb[0].mxu0
        %v1935 = vpop.f32.mrb[0].mxu0
        %v1936 = vadd.f32 0.0, %v1935
        %v1937 = vpop.f32.mrb[0].mxu0
        %1938 = vmatprep.mubr.bf16.mxu0 0
        %1939 = vmatmul.mubr.bf16.gmra.mrb[0].mxu0 %v1781
        %v1940 = vpop.f32.mrb[0].mxu0
        %v1941 = vadd.f32 0.0, %v1940
        %v1942 = vpop.f32.mrb[0].mxu0
        %v1943 = vpop.f32.mrb[0].mxu0
        %v1944 = vadd.f32 0.0, %v1943
        %v1945 = vpop.f32.mrb[0].mxu0
        %1946 = vdwg.mxu0
        %v1947 = vadd.f32 %v1588, %v1821
        %v1948 = vadd.f32 %v1589, %v1824
        %v1949 = vadd.f32 %v1590, %v1829
        %v1950 = vadd.f32 %v1591, %v1832
        %v1951 = vadd.f32 %v1592, %v1837
        %v1952 = vadd.f32 %v1593, %v1840
        %v1953 = vadd.f32 %v1594, %v1845
        %v1954 = vadd.f32 %v1595, %v1848
        %v1955 = vadd.f32 %v1596, %v1853
        %v1956 = vadd.f32 %v1597, %v1856
        %v1957 = vadd.f32 %v1598, %v1861
        %v1958 = vadd.f32 %v1599, %v1864
        %v1959 = vadd.f32 %v1600, %v1869
        %v1960 = vadd.f32 %v1601, %v1872
        %v1961 = vadd.f32 %v1602, %v1877
        %v1962 = vadd.f32 %v1603, %v1880
        %v1963 = vadd.f32 %v1604, %v1885
        %v1964 = vadd.f32 %v1605, %v1888
        %v1965 = vadd.f32 %v1606, %v1893
        %v1966 = vadd.f32 %v1607, %v1896
        %v1967 = vadd.f32 %v1608, %v1901
        %v1968 = vadd.f32 %v1609, %v1904
        %v1969 = vadd.f32 %v1610, %v1909
        %v1970 = vadd.f32 %v1611, %v1912
        %v1971 = vadd.f32 %v1612, %v1917
        %v1972 = vadd.f32 %v1613, %v1920
        %v1973 = vadd.f32 %v1614, %v1925
        %v1974 = vadd.f32 %v1615, %v1928
        %v1975 = vadd.f32 %v1616, %v1933
        %v1976 = vadd.f32 %v1617, %v1936
        %v1977 = vadd.f32 %v1618, %v1941
        %v1978 = vadd.f32 %v1619, %v1944
        %v1979 = vld [vmem:[%s1620] sm:$0xf]
        %v1980 = vld [vmem:[%s1620 + $0x4] sm:$0xf]
        %v1981 = vld [vmem:[%s1620 + $0x8] sm:$0x1]
        %v1982 = vld [vmem:[%s1620 + $0xc] sm:$0xf]
        %v1983 = vld [vmem:[%s1620 + $0x10] sm:$0xf]
        %v1984 = vld [vmem:[%s1620 + $0x14] sm:$0x1]
        %v1985 = vld [vmem:[%s1620 + $0x18] sm:$0xf]
        %v1986 = vld [vmem:[%s1620 + $0x1c] sm:$0xf]
        %v1987 = vld [vmem:[%s1620 + $0x20] sm:$0x1]
        %v1988 = vld [vmem:[%s1620 + $0x24] sm:$0xf]
        %v1989 = vld [vmem:[%s1620 + $0x28] sm:$0xf]
        %v1990 = vld [vmem:[%s1620 + $0x2c] sm:$0x1]
        %v1991 = vld [vmem:[%s1620 + $0x30] sm:$0xf]
        %v1992 = vld [vmem:[%s1620 + $0x34] sm:$0xf]
        %v1993 = vld [vmem:[%s1620 + $0x38] sm:$0x1]
        %v1994 = vld [vmem:[%s1620 + $0x3c] sm:$0xf]
        %v1995 = vld [vmem:[%s1620 + $0x40] sm:$0xf]
        %v1996 = vld [vmem:[%s1620 + $0x44] sm:$0x1]
        %v1997 = vld [vmem:[%s1620 + $0x48] sm:$0xf]
        %v1998 = vld [vmem:[%s1620 + $0x4c] sm:$0xf]
        %v1999 = vld [vmem:[%s1620 + $0x50] sm:$0x1]
        %v2000 = vld [vmem:[%s1620 + $0x54] sm:$0xf]
        %v2001 = vld [vmem:[%s1620 + $0x58] sm:$0xf]
        %v2002 = vld [vmem:[%s1620 + $0x5c] sm:$0x1]
        %v2003 = vld [vmem:[%s1620 + $0x60] sm:$0xf]
        %v2004 = vld [vmem:[%s1620 + $0x64] sm:$0xf]
        %v2005 = vld [vmem:[%s1620 + $0x68] sm:$0x1]
        %v2006 = vld [vmem:[%s1620 + $0x6c] sm:$0xf]
        %v2007 = vld [vmem:[%s1620 + $0x70] sm:$0xf]
        %v2008 = vld [vmem:[%s1620 + $0x74] sm:$0x1]
        %v2009 = vld [vmem:[%s1620 + $0x78] sm:$0xf]
        %v2010 = vld [vmem:[%s1620 + $0x7c] sm:$0xf]
        %v2011 = vld [vmem:[%s1620 + $0x80] sm:$0x1]
        %v2012 = vld [vmem:[%s1620 + $0x84] sm:$0xf]
        %v2013 = vld [vmem:[%s1620 + $0x88] sm:$0xf]
        %v2014 = vld [vmem:[%s1620 + $0x8c] sm:$0x1]
        %v2015 = vld [vmem:[%s1620 + $0x90] sm:$0xf]
        %v2016 = vld [vmem:[%s1620 + $0x94] sm:$0xf]
        %v2017 = vld [vmem:[%s1620 + $0x98] sm:$0x1]
        %v2018 = vld [vmem:[%s1620 + $0x9c] sm:$0xf]
        %v2019 = vld [vmem:[%s1620 + $0xa0] sm:$0xf]
        %v2020 = vld [vmem:[%s1620 + $0xa4] sm:$0x1]
        %v2021 = vld [vmem:[%s1620 + $0xa8] sm:$0xf]
        %v2022 = vld [vmem:[%s1620 + $0xac] sm:$0xf]
        %v2023 = vld [vmem:[%s1620 + $0xb0] sm:$0x1]
        %v2024 = vld [vmem:[%s1620 + $0xb4] sm:$0xf]
        %v2025 = vld [vmem:[%s1620 + $0xb8] sm:$0xf]
        %v2026 = vld [vmem:[%s1620 + $0xbc] sm:$0x1]
        %v2028 = vshrl.u32 %v1979, 16
        %v2030 = vrot.slane %v2028, 4
        %v2031 = vshll.u32 %v1979, 16
        %v2033 = vrot.slane %v2031, 5
        %v2034 = vor.u32 %v2030, %v2033
        %v2035 = vrot.slane %v2034, 4
        %v2037 = vshll.u32 %v1980, 16
        %v2039 = vrot.slane %v2037, 5
        %v2040 = vsel %vm222, %v2035, %v2039
        %v2041 = vshrl.u32 %v1980, 16
        %v2043 = vrot.slane %v2041, 4
        %v2044 = vor.u32 %v2043, %v2039
        %v2045 = vrot.slane %v2044, 4
        %v2047 = vshll.u32 %v1981, 16
        %v2049 = vrot.slane %v2047, 5
        %v2050 = vsel %vm222, %v2045, %v2049
        %v2052 = vshrl.u32 %v1982, 16
        %v2054 = vrot.slane %v2052, 4
        %v2055 = vshll.u32 %v1982, 16
        %v2057 = vrot.slane %v2055, 5
        %v2058 = vor.u32 %v2054, %v2057
        %v2059 = vrot.slane %v2058, 4
        %v2061 = vshll.u32 %v1983, 16
        %v2063 = vrot.slane %v2061, 5
        %v2064 = vsel %vm222, %v2059, %v2063
        %v2065 = vshrl.u32 %v1983, 16
        %v2067 = vrot.slane %v2065, 4
        %v2068 = vor.u32 %v2067, %v2063
        %v2069 = vrot.slane %v2068, 4
        %v2071 = vshll.u32 %v1984, 16
        %v2073 = vrot.slane %v2071, 5
        %v2074 = vsel %vm222, %v2069, %v2073
        %v2076 = vshrl.u32 %v1985, 16
        %v2078 = vrot.slane %v2076, 4
        %v2079 = vshll.u32 %v1985, 16
        %v2081 = vrot.slane %v2079, 5
        %v2082 = vor.u32 %v2078, %v2081
        %v2083 = vrot.slane %v2082, 4
        %v2085 = vshll.u32 %v1986, 16
        %v2087 = vrot.slane %v2085, 5
        %v2088 = vsel %vm222, %v2083, %v2087
        %v2089 = vshrl.u32 %v1986, 16
        %v2091 = vrot.slane %v2089, 4
        %v2092 = vor.u32 %v2091, %v2087
        %v2093 = vrot.slane %v2092, 4
        %v2095 = vshll.u32 %v1987, 16
        %v2097 = vrot.slane %v2095, 5
        %v2098 = vsel %vm222, %v2093, %v2097
        %v2100 = vshrl.u32 %v1988, 16
        %v2102 = vrot.slane %v2100, 4
        %v2103 = vshll.u32 %v1988, 16
        %v2105 = vrot.slane %v2103, 5
        %v2106 = vor.u32 %v2102, %v2105
        %v2107 = vrot.slane %v2106, 4
        %v2109 = vshll.u32 %v1989, 16
        %v2111 = vrot.slane %v2109, 5
        %v2112 = vsel %vm222, %v2107, %v2111
        %v2113 = vshrl.u32 %v1989, 16
        %v2115 = vrot.slane %v2113, 4
        %v2116 = vor.u32 %v2115, %v2111
        %v2117 = vrot.slane %v2116, 4
        %v2119 = vshll.u32 %v1990, 16
        %v2121 = vrot.slane %v2119, 5
        %v2122 = vsel %vm222, %v2117, %v2121
        %v2124 = vshrl.u32 %v1991, 16
        %v2126 = vrot.slane %v2124, 4
        %v2127 = vshll.u32 %v1991, 16
        %v2129 = vrot.slane %v2127, 5
        %v2130 = vor.u32 %v2126, %v2129
        %v2131 = vrot.slane %v2130, 4
        %v2133 = vshll.u32 %v1992, 16
        %v2135 = vrot.slane %v2133, 5
        %v2136 = vsel %vm222, %v2131, %v2135
        %v2137 = vshrl.u32 %v1992, 16
        %v2139 = vrot.slane %v2137, 4
        %v2140 = vor.u32 %v2139, %v2135
        %v2141 = vrot.slane %v2140, 4
        %v2143 = vshll.u32 %v1993, 16
        %v2145 = vrot.slane %v2143, 5
        %v2146 = vsel %vm222, %v2141, %v2145
        %v2148 = vshrl.u32 %v1994, 16
        %v2150 = vrot.slane %v2148, 4
        %v2151 = vshll.u32 %v1994, 16
        %v2153 = vrot.slane %v2151, 5
        %v2154 = vor.u32 %v2150, %v2153
        %v2155 = vrot.slane %v2154, 4
        %v2157 = vshll.u32 %v1995, 16
        %v2159 = vrot.slane %v2157, 5
        %v2160 = vsel %vm222, %v2155, %v2159
        %v2161 = vshrl.u32 %v1995, 16
        %v2163 = vrot.slane %v2161, 4
        %v2164 = vor.u32 %v2163, %v2159
        %v2165 = vrot.slane %v2164, 4
        %v2167 = vshll.u32 %v1996, 16
        %v2169 = vrot.slane %v2167, 5
        %v2170 = vsel %vm222, %v2165, %v2169
        %v2172 = vshrl.u32 %v1997, 16
        %v2174 = vrot.slane %v2172, 4
        %v2175 = vshll.u32 %v1997, 16
        %v2177 = vrot.slane %v2175, 5
        %v2178 = vor.u32 %v2174, %v2177
        %v2179 = vrot.slane %v2178, 4
        %v2181 = vshll.u32 %v1998, 16
        %v2183 = vrot.slane %v2181, 5
        %v2184 = vsel %vm222, %v2179, %v2183
        %v2185 = vshrl.u32 %v1998, 16
        %v2187 = vrot.slane %v2185, 4
        %v2188 = vor.u32 %v2187, %v2183
        %v2189 = vrot.slane %v2188, 4
        %v2191 = vshll.u32 %v1999, 16
        %v2193 = vrot.slane %v2191, 5
        %v2194 = vsel %vm222, %v2189, %v2193
        %v2196 = vshrl.u32 %v2000, 16
        %v2198 = vrot.slane %v2196, 4
        %v2199 = vshll.u32 %v2000, 16
        %v2201 = vrot.slane %v2199, 5
        %v2202 = vor.u32 %v2198, %v2201
        %v2203 = vrot.slane %v2202, 4
        %v2205 = vshll.u32 %v2001, 16
        %v2207 = vrot.slane %v2205, 5
        %v2208 = vsel %vm222, %v2203, %v2207
        %v2209 = vshrl.u32 %v2001, 16
        %v2211 = vrot.slane %v2209, 4
        %v2212 = vor.u32 %v2211, %v2207
        %v2213 = vrot.slane %v2212, 4
        %v2215 = vshll.u32 %v2002, 16
        %v2217 = vrot.slane %v2215, 5
        %v2218 = vsel %vm222, %v2213, %v2217
        %v2220 = vshrl.u32 %v2003, 16
        %v2222 = vrot.slane %v2220, 4
        %v2223 = vshll.u32 %v2003, 16
        %v2225 = vrot.slane %v2223, 5
        %v2226 = vor.u32 %v2222, %v2225
        %v2227 = vrot.slane %v2226, 4
        %v2229 = vshll.u32 %v2004, 16
        %v2231 = vrot.slane %v2229, 5
        %v2232 = vsel %vm222, %v2227, %v2231
        %v2233 = vshrl.u32 %v2004, 16
        %v2235 = vrot.slane %v2233, 4
        %v2236 = vor.u32 %v2235, %v2231
        %v2237 = vrot.slane %v2236, 4
        %v2239 = vshll.u32 %v2005, 16
        %v2241 = vrot.slane %v2239, 5
        %v2242 = vsel %vm222, %v2237, %v2241
        %v2244 = vshrl.u32 %v2006, 16
        %v2246 = vrot.slane %v2244, 4
        %v2247 = vshll.u32 %v2006, 16
        %v2249 = vrot.slane %v2247, 5
        %v2250 = vor.u32 %v2246, %v2249
        %v2251 = vrot.slane %v2250, 4
        %v2253 = vshll.u32 %v2007, 16
        %v2255 = vrot.slane %v2253, 5
        %v2256 = vsel %vm222, %v2251, %v2255
        %v2257 = vshrl.u32 %v2007, 16
        %v2259 = vrot.slane %v2257, 4
        %v2260 = vor.u32 %v2259, %v2255
        %v2261 = vrot.slane %v2260, 4
        %v2263 = vshll.u32 %v2008, 16
        %v2265 = vrot.slane %v2263, 5
        %v2266 = vsel %vm222, %v2261, %v2265
        %v2268 = vshrl.u32 %v2009, 16
        %v2270 = vrot.slane %v2268, 4
        %v2271 = vshll.u32 %v2009, 16
        %v2273 = vrot.slane %v2271, 5
        %v2274 = vor.u32 %v2270, %v2273
        %v2275 = vrot.slane %v2274, 4
        %v2277 = vshll.u32 %v2010, 16
        %v2279 = vrot.slane %v2277, 5
        %v2280 = vsel %vm222, %v2275, %v2279
        %v2281 = vshrl.u32 %v2010, 16
        %v2283 = vrot.slane %v2281, 4
        %v2284 = vor.u32 %v2283, %v2279
        %v2285 = vrot.slane %v2284, 4
        %v2287 = vshll.u32 %v2011, 16
        %v2289 = vrot.slane %v2287, 5
        %v2290 = vsel %vm222, %v2285, %v2289
        %v2292 = vshrl.u32 %v2012, 16
        %v2294 = vrot.slane %v2292, 4
        %v2295 = vshll.u32 %v2012, 16
        %v2297 = vrot.slane %v2295, 5
        %v2298 = vor.u32 %v2294, %v2297
        %v2299 = vrot.slane %v2298, 4
        %v2301 = vshll.u32 %v2013, 16
        %v2303 = vrot.slane %v2301, 5
        %v2304 = vsel %vm222, %v2299, %v2303
        %v2305 = vshrl.u32 %v2013, 16
        %v2307 = vrot.slane %v2305, 4
        %v2308 = vor.u32 %v2307, %v2303
        %v2309 = vrot.slane %v2308, 4
        %v2311 = vshll.u32 %v2014, 16
        %v2313 = vrot.slane %v2311, 5
        %v2314 = vsel %vm222, %v2309, %v2313
        %v2316 = vshrl.u32 %v2015, 16
        %v2318 = vrot.slane %v2316, 4
        %v2319 = vshll.u32 %v2015, 16
        %v2321 = vrot.slane %v2319, 5
        %v2322 = vor.u32 %v2318, %v2321
        %v2323 = vrot.slane %v2322, 4
        %v2325 = vshll.u32 %v2016, 16
        %v2327 = vrot.slane %v2325, 5
        %v2328 = vsel %vm222, %v2323, %v2327
        %v2329 = vshrl.u32 %v2016, 16
        %v2331 = vrot.slane %v2329, 4
        %v2332 = vor.u32 %v2331, %v2327
        %v2333 = vrot.slane %v2332, 4
        %v2335 = vshll.u32 %v2017, 16
        %v2337 = vrot.slane %v2335, 5
        %v2338 = vsel %vm222, %v2333, %v2337
        %v2340 = vshrl.u32 %v2018, 16
        %v2342 = vrot.slane %v2340, 4
        %v2343 = vshll.u32 %v2018, 16
        %v2345 = vrot.slane %v2343, 5
        %v2346 = vor.u32 %v2342, %v2345
        %v2347 = vrot.slane %v2346, 4
        %v2349 = vshll.u32 %v2019, 16
        %v2351 = vrot.slane %v2349, 5
        %v2352 = vsel %vm222, %v2347, %v2351
        %v2353 = vshrl.u32 %v2019, 16
        %v2355 = vrot.slane %v2353, 4
        %v2356 = vor.u32 %v2355, %v2351
        %v2357 = vrot.slane %v2356, 4
        %v2359 = vshll.u32 %v2020, 16
        %v2361 = vrot.slane %v2359, 5
        %v2362 = vsel %vm222, %v2357, %v2361
        %v2364 = vshrl.u32 %v2021, 16
        %v2366 = vrot.slane %v2364, 4
        %v2367 = vshll.u32 %v2021, 16
        %v2369 = vrot.slane %v2367, 5
        %v2370 = vor.u32 %v2366, %v2369
        %v2371 = vrot.slane %v2370, 4
        %v2373 = vshll.u32 %v2022, 16
        %v2375 = vrot.slane %v2373, 5
        %v2376 = vsel %vm222, %v2371, %v2375
        %v2377 = vshrl.u32 %v2022, 16
        %v2379 = vrot.slane %v2377, 4
        %v2380 = vor.u32 %v2379, %v2375
        %v2381 = vrot.slane %v2380, 4
        %v2383 = vshll.u32 %v2023, 16
        %v2385 = vrot.slane %v2383, 5
        %v2386 = vsel %vm222, %v2381, %v2385
        %v2388 = vshrl.u32 %v2024, 16
        %v2390 = vrot.slane %v2388, 4
        %v2391 = vshll.u32 %v2024, 16
        %v2393 = vrot.slane %v2391, 5
        %v2394 = vor.u32 %v2390, %v2393
        %v2395 = vrot.slane %v2394, 4
        %v2397 = vshll.u32 %v2025, 16
        %v2399 = vrot.slane %v2397, 5
        %v2400 = vsel %vm222, %v2395, %v2399
        %v2401 = vshrl.u32 %v2025, 16
        %v2403 = vrot.slane %v2401, 4
        %v2404 = vor.u32 %v2403, %v2399
        %v2405 = vrot.slane %v2404, 4
        %v2407 = vshll.u32 %v2026, 16
        %v2409 = vrot.slane %v2407, 5
        %v2410 = vsel %vm222, %v2405, %v2409
        %s2411 = scalar_lea.vmem %s1, 8
        %v2412 = vld [vmem:[%s2411] sm:$0x3]
        %v2413 = vunpack.c.l.b16 %v2040
        %v2414 = vunpack.c.l.b16 %v2050
        %v2415 = vunpack.c.l.b16 %v2064
        %v2416 = vunpack.c.l.b16 %v2074
        %v2417 = vunpack.c.l.b16 %v2088
        %v2418 = vunpack.c.l.b16 %v2098
        %v2419 = vunpack.c.l.b16 %v2112
        %v2420 = vunpack.c.l.b16 %v2122
        %v2421 = vunpack.c.l.b16 %v2136
        %v2422 = vunpack.c.l.b16 %v2146
        %v2423 = vunpack.c.l.b16 %v2160
        %v2424 = vunpack.c.l.b16 %v2170
        %v2425 = vunpack.c.l.b16 %v2184
        %v2426 = vunpack.c.l.b16 %v2194
        %v2427 = vunpack.c.l.b16 %v2208
        %v2428 = vunpack.c.l.b16 %v2218
        %v2429 = vunpack.c.l.b16 %v2232
        %v2430 = vunpack.c.l.b16 %v2242
        %v2431 = vunpack.c.l.b16 %v2256
        %v2432 = vunpack.c.l.b16 %v2266
        %v2433 = vunpack.c.l.b16 %v2280
        %v2434 = vunpack.c.l.b16 %v2290
        %v2435 = vunpack.c.l.b16 %v2304
        %v2436 = vunpack.c.l.b16 %v2314
        %v2437 = vunpack.c.l.b16 %v2328
        %v2438 = vunpack.c.l.b16 %v2338
        %v2439 = vunpack.c.l.b16 %v2352
        %v2440 = vunpack.c.l.b16 %v2362
        %v2441 = vunpack.c.l.b16 %v2376
        %v2442 = vunpack.c.l.b16 %v2386
        %v2443 = vunpack.c.l.b16 %v2400
        %v2444 = vunpack.c.l.b16 %v2410
        %v2445 = vpack.c.b16 %v2414, %v2413
        %v2446 = vpack.c.b16 %v2416, %v2415
        %v2447 = vpack.c.b16 %v2418, %v2417
        %v2448 = vpack.c.b16 %v2420, %v2419
        %v2449 = vpack.c.b16 %v2422, %v2421
        %v2450 = vpack.c.b16 %v2424, %v2423
        %v2451 = vpack.c.b16 %v2426, %v2425
        %v2452 = vpack.c.b16 %v2428, %v2427
        %v2453 = vpack.c.b16 %v2430, %v2429
        %v2454 = vpack.c.b16 %v2432, %v2431
        %v2455 = vpack.c.b16 %v2434, %v2433
        %v2456 = vpack.c.b16 %v2436, %v2435
        %v2457 = vpack.c.b16 %v2438, %v2437
        %v2458 = vpack.c.b16 %v2440, %v2439
        %v2459 = vpack.c.b16 %v2442, %v2441
        %v2460 = vpack.c.b16 %v2444, %v2443
        %v2462 = vsel %vm657, %v2445, 0
        %v2465 = vsel %vm657, %v2446, 0
        %v2468 = vsel %vm657, %v2447, 0
        %v2471 = vsel %vm657, %v2448, 0
        %v2474 = vsel %vm657, %v2449, 0
        %v2477 = vsel %vm657, %v2450, 0
        %v2480 = vsel %vm657, %v2451, 0
        %v2483 = vsel %vm657, %v2452, 0
        %v2486 = vsel %vm657, %v2453, 0
        %v2489 = vsel %vm657, %v2454, 0
        %v2492 = vsel %vm657, %v2455, 0
        %v2495 = vsel %vm657, %v2456, 0
        %v2498 = vsel %vm657, %v2457, 0
        %v2501 = vsel %vm657, %v2458, 0
        %v2504 = vsel %vm657, %v2459, 0
        %v2507 = vsel %vm657, %v2460, 0
        %v2510 = vsel %vm706, %v2412, 0
        %2512 = vmatprep.subr.bf16.mxu0 0
        %2513 = vmatpush1.bf16.msra.mxu0 %v2510
        %2514 = vmatprep.subr.bf16.mxu0 0
        %2515 = vmatpush1.bf16.msra.mxu0 0
        %2516 = vmatprep.subr.bf16.mxu0 0
        %2517 = vmatpush1.bf16.msra.mxu0 0
        %2518 = vmatprep.subr.bf16.mxu0 0
        %2519 = vmatpush1.bf16.msra.mxu0 0
        %2520 = vmatprep.subr.bf16.mxu0 0
        %2521 = vmatpush1.bf16.msra.mxu0 0
        %2522 = vmatprep.subr.bf16.mxu0 0
        %2523 = vmatpush1.bf16.msra.mxu0 0
        %2524 = vmatprep.subr.bf16.mxu0 0
        %2525 = vmatpush1.bf16.msra.mxu0 0
        %2526 = vmatprep.subr.bf16.mxu0 0
        %2527 = vmatpush1.bf16.msra.mxu0 0
        %2528 = vmatprep.subr.bf16.mxu0 0
        %2529 = vmatpush1.bf16.msra.mxu0 0
        %2530 = vmatprep.subr.bf16.mxu0 0
        %2531 = vmatpush1.bf16.msra.mxu0 0
        %2532 = vmatprep.subr.bf16.mxu0 0
        %2533 = vmatpush1.bf16.msra.mxu0 0
        %2534 = vmatprep.subr.bf16.mxu0 0
        %2535 = vmatpush1.bf16.msra.mxu0 0
        %2536 = vmatprep.subr.bf16.mxu0 0
        %2537 = vmatpush1.bf16.msra.mxu0 0
        %2538 = vmatprep.subr.bf16.mxu0 0
        %2539 = vmatpush1.bf16.msra.mxu0 0
        %2540 = vmatprep.subr.bf16.mxu0 0
        %2541 = vmatpush1.bf16.msra.mxu0 0
        %2542 = vmatprep.subr.bf16.mxu0 0
        %2543 = vmatpush1.bf16.msra.mxu0 0
        %2544 = vmatprep.mubr.bf16.mxu0 0
        %2545 = vmatmul.mubr.bf16.gmra.mrb[0].mxu0 %v2462
        %v2546 = vpop.f32.mrb[0].mxu0
        %v2547 = vadd.f32 0.0, %v2546
        %v2548 = vpop.f32.mrb[0].mxu0
        %v2549 = vpop.f32.mrb[0].mxu0
        %v2550 = vadd.f32 0.0, %v2549
        %v2551 = vpop.f32.mrb[0].mxu0
        %2552 = vmatprep.mubr.bf16.mxu0 0
        %2553 = vmatmul.mubr.bf16.gmra.mrb[0].mxu0 %v2465
        %v2554 = vpop.f32.mrb[0].mxu0
        %v2555 = vadd.f32 0.0, %v2554
        %v2556 = vpop.f32.mrb[0].mxu0
        %v2557 = vpop.f32.mrb[0].mxu0
        %v2558 = vadd.f32 0.0, %v2557
        %v2559 = vpop.f32.mrb[0].mxu0
        %2560 = vmatprep.mubr.bf16.mxu0 0
        %2561 = vmatmul.mubr.bf16.gmra.mrb[0].mxu0 %v2468
        %v2562 = vpop.f32.mrb[0].mxu0
        %v2563 = vadd.f32 0.0, %v2562
        %v2564 = vpop.f32.mrb[0].mxu0
        %v2565 = vpop.f32.mrb[0].mxu0
        %v2566 = vadd.f32 0.0, %v2565
        %v2567 = vpop.f32.mrb[0].mxu0
        %2568 = vmatprep.mubr.bf16.mxu0 0
        %2569 = vmatmul.mubr.bf16.gmra.mrb[0].mxu0 %v2471
        %v2570 = vpop.f32.mrb[0].mxu0
        %v2571 = vadd.f32 0.0, %v2570
        %v2572 = vpop.f32.mrb[0].mxu0
        %v2573 = vpop.f32.mrb[0].mxu0
        %v2574 = vadd.f32 0.0, %v2573
        %v2575 = vpop.f32.mrb[0].mxu0
        %2576 = vmatprep.mubr.bf16.mxu0 0
        %2577 = vmatmul.mubr.bf16.gmra.mrb[0].mxu0 %v2474
        %v2578 = vpop.f32.mrb[0].mxu0
        %v2579 = vadd.f32 0.0, %v2578
        %v2580 = vpop.f32.mrb[0].mxu0
        %v2581 = vpop.f32.mrb[0].mxu0
        %v2582 = vadd.f32 0.0, %v2581
        %v2583 = vpop.f32.mrb[0].mxu0
        %2584 = vmatprep.mubr.bf16.mxu0 0
        %2585 = vmatmul.mubr.bf16.gmra.mrb[0].mxu0 %v2477
        %v2586 = vpop.f32.mrb[0].mxu0
        %v2587 = vadd.f32 0.0, %v2586
        %v2588 = vpop.f32.mrb[0].mxu0
        %v2589 = vpop.f32.mrb[0].mxu0
        %v2590 = vadd.f32 0.0, %v2589
        %v2591 = vpop.f32.mrb[0].mxu0
        %2592 = vmatprep.mubr.bf16.mxu0 0
        %2593 = vmatmul.mubr.bf16.gmra.mrb[0].mxu0 %v2480
        %v2594 = vpop.f32.mrb[0].mxu0
        %v2595 = vadd.f32 0.0, %v2594
        %v2596 = vpop.f32.mrb[0].mxu0
        %v2597 = vpop.f32.mrb[0].mxu0
        %v2598 = vadd.f32 0.0, %v2597
        %v2599 = vpop.f32.mrb[0].mxu0
        %2600 = vmatprep.mubr.bf16.mxu0 0
        %2601 = vmatmul.mubr.bf16.gmra.mrb[0].mxu0 %v2483
        %v2602 = vpop.f32.mrb[0].mxu0
        %v2603 = vadd.f32 0.0, %v2602
        %v2604 = vpop.f32.mrb[0].mxu0
        %v2605 = vpop.f32.mrb[0].mxu0
        %v2606 = vadd.f32 0.0, %v2605
        %v2607 = vpop.f32.mrb[0].mxu0
        %2608 = vmatprep.mubr.bf16.mxu0 0
        %2609 = vmatmul.mubr.bf16.gmra.mrb[0].mxu0 %v2486
        %v2610 = vpop.f32.mrb[0].mxu0
        %v2611 = vadd.f32 0.0, %v2610
        %v2612 = vpop.f32.mrb[0].mxu0
        %v2613 = vpop.f32.mrb[0].mxu0
        %v2614 = vadd.f32 0.0, %v2613
        %v2615 = vpop.f32.mrb[0].mxu0
        %2616 = vmatprep.mubr.bf16.mxu0 0
        %2617 = vmatmul.mubr.bf16.gmra.mrb[0].mxu0 %v2489
        %v2618 = vpop.f32.mrb[0].mxu0
        %v2619 = vadd.f32 0.0, %v2618
        %v2620 = vpop.f32.mrb[0].mxu0
        %v2621 = vpop.f32.mrb[0].mxu0
        %v2622 = vadd.f32 0.0, %v2621
        %v2623 = vpop.f32.mrb[0].mxu0
        %2624 = vmatprep.mubr.bf16.mxu0 0
        %2625 = vmatmul.mubr.bf16.gmra.mrb[0].mxu0 %v2492
        %v2626 = vpop.f32.mrb[0].mxu0
        %v2627 = vadd.f32 0.0, %v2626
        %v2628 = vpop.f32.mrb[0].mxu0
        %v2629 = vpop.f32.mrb[0].mxu0
        %v2630 = vadd.f32 0.0, %v2629
        %v2631 = vpop.f32.mrb[0].mxu0
        %2632 = vmatprep.mubr.bf16.mxu0 0
        %2633 = vmatmul.mubr.bf16.gmra.mrb[0].mxu0 %v2495
        %v2634 = vpop.f32.mrb[0].mxu0
        %v2635 = vadd.f32 0.0, %v2634
        %v2636 = vpop.f32.mrb[0].mxu0
        %v2637 = vpop.f32.mrb[0].mxu0
        %v2638 = vadd.f32 0.0, %v2637
        %v2639 = vpop.f32.mrb[0].mxu0
        %2640 = vmatprep.mubr.bf16.mxu0 0
        %2641 = vmatmul.mubr.bf16.gmra.mrb[0].mxu0 %v2498
        %v2642 = vpop.f32.mrb[0].mxu0
        %v2643 = vadd.f32 0.0, %v2642
        %v2644 = vpop.f32.mrb[0].mxu0
        %v2645 = vpop.f32.mrb[0].mxu0
        %v2646 = vadd.f32 0.0, %v2645
        %v2647 = vpop.f32.mrb[0].mxu0
        %2648 = vmatprep.mubr.bf16.mxu0 0
        %2649 = vmatmul.mubr.bf16.gmra.mrb[0].mxu0 %v2501
        %v2650 = vpop.f32.mrb[0].mxu0
        %v2651 = vadd.f32 0.0, %v2650
        %v2652 = vpop.f32.mrb[0].mxu0
        %v2653 = vpop.f32.mrb[0].mxu0
        %v2654 = vadd.f32 0.0, %v2653
        %v2655 = vpop.f32.mrb[0].mxu0
        %2656 = vmatprep.mubr.bf16.mxu0 0
        %2657 = vmatmul.mubr.bf16.gmra.mrb[0].mxu0 %v2504
        %v2658 = vpop.f32.mrb[0].mxu0
        %v2659 = vadd.f32 0.0, %v2658
        %v2660 = vpop.f32.mrb[0].mxu0
        %v2661 = vpop.f32.mrb[0].mxu0
        %v2662 = vadd.f32 0.0, %v2661
        %v2663 = vpop.f32.mrb[0].mxu0
        %2664 = vmatprep.mubr.bf16.mxu0 0
        %2665 = vmatmul.mubr.bf16.gmra.mrb[0].mxu0 %v2507
        %v2666 = vpop.f32.mrb[0].mxu0
        %v2667 = vadd.f32 0.0, %v2666
        %v2668 = vpop.f32.mrb[0].mxu0
        %v2669 = vpop.f32.mrb[0].mxu0
        %v2670 = vadd.f32 0.0, %v2669
        %v2671 = vpop.f32.mrb[0].mxu0
        %2672 = vdwg.mxu0
        %v2673 = vadd.f32 %v1947, %v2547
        %v2674 = vadd.f32 %v1948, %v2550
        %v2675 = vadd.f32 %v1949, %v2555
        %v2676 = vadd.f32 %v1950, %v2558
        %v2677 = vadd.f32 %v1951, %v2563
        %v2678 = vadd.f32 %v1952, %v2566
        %v2679 = vadd.f32 %v1953, %v2571
        %v2680 = vadd.f32 %v1954, %v2574
        %v2681 = vadd.f32 %v1955, %v2579
        %v2682 = vadd.f32 %v1956, %v2582
        %v2683 = vadd.f32 %v1957, %v2587
        %v2684 = vadd.f32 %v1958, %v2590
        %v2685 = vadd.f32 %v1959, %v2595
        %v2686 = vadd.f32 %v1960, %v2598
        %v2687 = vadd.f32 %v1961, %v2603
        %v2688 = vadd.f32 %v1962, %v2606
        %v2689 = vadd.f32 %v1963, %v2611
        %v2690 = vadd.f32 %v1964, %v2614
        %v2691 = vadd.f32 %v1965, %v2619
        %v2692 = vadd.f32 %v1966, %v2622
        %v2693 = vadd.f32 %v1967, %v2627
        %v2694 = vadd.f32 %v1968, %v2630
        %v2695 = vadd.f32 %v1969, %v2635
        %v2696 = vadd.f32 %v1970, %v2638
        %v2697 = vadd.f32 %v1971, %v2643
        %v2698 = vadd.f32 %v1972, %v2646
        %v2699 = vadd.f32 %v1973, %v2651
        %v2700 = vadd.f32 %v1974, %v2654
        %v2701 = vadd.f32 %v1975, %v2659
        %v2702 = vadd.f32 %v1976, %v2662
        %v2703 = vadd.f32 %v1977, %v2667
        %v2704 = vadd.f32 %v1978, %v2670
        %v2705 = vld [vmem:[%s1620] sm:$0xe]
        %v2706 = vld [vmem:[%s1620 + $0xc] sm:$0xe]
        %v2707 = vld [vmem:[%s1620 + $0x18] sm:$0xe]
        %v2708 = vld [vmem:[%s1620 + $0x24] sm:$0xe]
        %v2709 = vld [vmem:[%s1620 + $0x30] sm:$0xe]
        %v2710 = vld [vmem:[%s1620 + $0x3c] sm:$0xe]
        %v2711 = vld [vmem:[%s1620 + $0x48] sm:$0xe]
        %v2712 = vld [vmem:[%s1620 + $0x54] sm:$0xe]
        %v2713 = vld [vmem:[%s1620 + $0x60] sm:$0xe]
        %v2714 = vld [vmem:[%s1620 + $0x6c] sm:$0xe]
        %v2715 = vld [vmem:[%s1620 + $0x78] sm:$0xe]
        %v2716 = vld [vmem:[%s1620 + $0x84] sm:$0xe]
        %v2717 = vld [vmem:[%s1620 + $0x90] sm:$0xe]
        %v2718 = vld [vmem:[%s1620 + $0x9c] sm:$0xe]
        %v2719 = vld [vmem:[%s1620 + $0xa8] sm:$0xe]
        %v2720 = vld [vmem:[%s1620 + $0xb4] sm:$0xe]
        %v2769 = vrot.slane %v2705, 5
        %v2770 = vrot.slane %v2769, 4
        %v2771 = vrot.slane %v1980, 5
        %v2772 = vsel %vm1213, %v2770, %v2771
        %v2773 = vrot.slane %v2771, 4
        %v2774 = vrot.slane %v1981, 5
        %v2775 = vsel %vm1213, %v2773, %v2774
        %v2776 = vrot.slane %v2706, 5
        %v2777 = vrot.slane %v2776, 4
        %v2778 = vrot.slane %v1983, 5
        %v2779 = vsel %vm1213, %v2777, %v2778
        %v2780 = vrot.slane %v2778, 4
        %v2781 = vrot.slane %v1984, 5
        %v2782 = vsel %vm1213, %v2780, %v2781
        %v2783 = vrot.slane %v2707, 5
        %v2784 = vrot.slane %v2783, 4
        %v2785 = vrot.slane %v1986, 5
        %v2786 = vsel %vm1213, %v2784, %v2785
        %v2787 = vrot.slane %v2785, 4
        %v2788 = vrot.slane %v1987, 5
        %v2789 = vsel %vm1213, %v2787, %v2788
        %v2790 = vrot.slane %v2708, 5
        %v2791 = vrot.slane %v2790, 4
        %v2792 = vrot.slane %v1989, 5
        %v2793 = vsel %vm1213, %v2791, %v2792
        %v2794 = vrot.slane %v2792, 4
        %v2795 = vrot.slane %v1990, 5
        %v2796 = vsel %vm1213, %v2794, %v2795
        %v2797 = vrot.slane %v2709, 5
        %v2798 = vrot.slane %v2797, 4
        %v2799 = vrot.slane %v1992, 5
        %v2800 = vsel %vm1213, %v2798, %v2799
        %v2801 = vrot.slane %v2799, 4
        %v2802 = vrot.slane %v1993, 5
        %v2803 = vsel %vm1213, %v2801, %v2802
        %v2804 = vrot.slane %v2710, 5
        %v2805 = vrot.slane %v2804, 4
        %v2806 = vrot.slane %v1995, 5
        %v2807 = vsel %vm1213, %v2805, %v2806
        %v2808 = vrot.slane %v2806, 4
        %v2809 = vrot.slane %v1996, 5
        %v2810 = vsel %vm1213, %v2808, %v2809
        %v2811 = vrot.slane %v2711, 5
        %v2812 = vrot.slane %v2811, 4
        %v2813 = vrot.slane %v1998, 5
        %v2814 = vsel %vm1213, %v2812, %v2813
        %v2815 = vrot.slane %v2813, 4
        %v2816 = vrot.slane %v1999, 5
        %v2817 = vsel %vm1213, %v2815, %v2816
        %v2818 = vrot.slane %v2712, 5
        %v2819 = vrot.slane %v2818, 4
        %v2820 = vrot.slane %v2001, 5
        %v2821 = vsel %vm1213, %v2819, %v2820
        %v2822 = vrot.slane %v2820, 4
        %v2823 = vrot.slane %v2002, 5
        %v2824 = vsel %vm1213, %v2822, %v2823
        %v2825 = vrot.slane %v2713, 5
        %v2826 = vrot.slane %v2825, 4
        %v2827 = vrot.slane %v2004, 5
        %v2828 = vsel %vm1213, %v2826, %v2827
        %v2829 = vrot.slane %v2827, 4
        %v2830 = vrot.slane %v2005, 5
        %v2831 = vsel %vm1213, %v2829, %v2830
        %v2832 = vrot.slane %v2714, 5
        %v2833 = vrot.slane %v2832, 4
        %v2834 = vrot.slane %v2007, 5
        %v2835 = vsel %vm1213, %v2833, %v2834
        %v2836 = vrot.slane %v2834, 4
        %v2837 = vrot.slane %v2008, 5
        %v2838 = vsel %vm1213, %v2836, %v2837
        %v2839 = vrot.slane %v2715, 5
        %v2840 = vrot.slane %v2839, 4
        %v2841 = vrot.slane %v2010, 5
        %v2842 = vsel %vm1213, %v2840, %v2841
        %v2843 = vrot.slane %v2841, 4
        %v2844 = vrot.slane %v2011, 5
        %v2845 = vsel %vm1213, %v2843, %v2844
        %v2846 = vrot.slane %v2716, 5
        %v2847 = vrot.slane %v2846, 4
        %v2848 = vrot.slane %v2013, 5
        %v2849 = vsel %vm1213, %v2847, %v2848
        %v2850 = vrot.slane %v2848, 4
        %v2851 = vrot.slane %v2014, 5
        %v2852 = vsel %vm1213, %v2850, %v2851
        %v2853 = vrot.slane %v2717, 5
        %v2854 = vrot.slane %v2853, 4
        %v2855 = vrot.slane %v2016, 5
        %v2856 = vsel %vm1213, %v2854, %v2855
        %v2857 = vrot.slane %v2855, 4
        %v2858 = vrot.slane %v2017, 5
        %v2859 = vsel %vm1213, %v2857, %v2858
        %v2860 = vrot.slane %v2718, 5
        %v2861 = vrot.slane %v2860, 4
        %v2862 = vrot.slane %v2019, 5
        %v2863 = vsel %vm1213, %v2861, %v2862
        %v2864 = vrot.slane %v2862, 4
        %v2865 = vrot.slane %v2020, 5
        %v2866 = vsel %vm1213, %v2864, %v2865
        %v2867 = vrot.slane %v2719, 5
        %v2868 = vrot.slane %v2867, 4
        %v2869 = vrot.slane %v2022, 5
        %v2870 = vsel %vm1213, %v2868, %v2869
        %v2871 = vrot.slane %v2869, 4
        %v2872 = vrot.slane %v2023, 5
        %v2873 = vsel %vm1213, %v2871, %v2872
        %v2874 = vrot.slane %v2720, 5
        %v2875 = vrot.slane %v2874, 4
        %v2876 = vrot.slane %v2025, 5
        %v2877 = vsel %vm1213, %v2875, %v2876
        %v2878 = vrot.slane %v2876, 4
        %v2879 = vrot.slane %v2026, 5
        %v2880 = vsel %vm1213, %v2878, %v2879
        %s2881 = scalar_lea.vmem %s1, 10
        %v2882 = vld [vmem:[%s2881] sm:$0x3]
        %v2883 = vunpack.c.l.b16 %v2772
        %v2884 = vunpack.c.l.b16 %v2775
        %v2885 = vunpack.c.l.b16 %v2779
        %v2886 = vunpack.c.l.b16 %v2782
        %v2887 = vunpack.c.l.b16 %v2786
        %v2888 = vunpack.c.l.b16 %v2789
        %v2889 = vunpack.c.l.b16 %v2793
        %v2890 = vunpack.c.l.b16 %v2796
        %v2891 = vunpack.c.l.b16 %v2800
        %v2892 = vunpack.c.l.b16 %v2803
        %v2893 = vunpack.c.l.b16 %v2807
        %v2894 = vunpack.c.l.b16 %v2810
        %v2895 = vunpack.c.l.b16 %v2814
        %v2896 = vunpack.c.l.b16 %v2817
        %v2897 = vunpack.c.l.b16 %v2821
        %v2898 = vunpack.c.l.b16 %v2824
        %v2899 = vunpack.c.l.b16 %v2828
        %v2900 = vunpack.c.l.b16 %v2831
        %v2901 = vunpack.c.l.b16 %v2835
        %v2902 = vunpack.c.l.b16 %v2838
        %v2903 = vunpack.c.l.b16 %v2842
        %v2904 = vunpack.c.l.b16 %v2845
        %v2905 = vunpack.c.l.b16 %v2849
        %v2906 = vunpack.c.l.b16 %v2852
        %v2907 = vunpack.c.l.b16 %v2856
        %v2908 = vunpack.c.l.b16 %v2859
        %v2909 = vunpack.c.l.b16 %v2863
        %v2910 = vunpack.c.l.b16 %v2866
        %v2911 = vunpack.c.l.b16 %v2870
        %v2912 = vunpack.c.l.b16 %v2873
        %v2913 = vunpack.c.l.b16 %v2877
        %v2914 = vunpack.c.l.b16 %v2880
        %v2915 = vpack.c.b16 %v2884, %v2883
        %v2916 = vpack.c.b16 %v2886, %v2885
        %v2917 = vpack.c.b16 %v2888, %v2887
        %v2918 = vpack.c.b16 %v2890, %v2889
        %v2919 = vpack.c.b16 %v2892, %v2891
        %v2920 = vpack.c.b16 %v2894, %v2893
        %v2921 = vpack.c.b16 %v2896, %v2895
        %v2922 = vpack.c.b16 %v2898, %v2897
        %v2923 = vpack.c.b16 %v2900, %v2899
        %v2924 = vpack.c.b16 %v2902, %v2901
        %v2925 = vpack.c.b16 %v2904, %v2903
        %v2926 = vpack.c.b16 %v2906, %v2905
        %v2927 = vpack.c.b16 %v2908, %v2907
        %v2928 = vpack.c.b16 %v2910, %v2909
        %v2929 = vpack.c.b16 %v2912, %v2911
        %v2930 = vpack.c.b16 %v2914, %v2913
        %v2932 = vsel %vm657, %v2915, 0
        %v2935 = vsel %vm657, %v2916, 0
        %v2938 = vsel %vm657, %v2917, 0
        %v2941 = vsel %vm657, %v2918, 0
        %v2944 = vsel %vm657, %v2919, 0
        %v2947 = vsel %vm657, %v2920, 0
        %v2950 = vsel %vm657, %v2921, 0
        %v2953 = vsel %vm657, %v2922, 0
        %v2956 = vsel %vm657, %v2923, 0
        %v2959 = vsel %vm657, %v2924, 0
        %v2962 = vsel %vm657, %v2925, 0
        %v2965 = vsel %vm657, %v2926, 0
        %v2968 = vsel %vm657, %v2927, 0
        %v2971 = vsel %vm657, %v2928, 0
        %v2974 = vsel %vm657, %v2929, 0
        %v2977 = vsel %vm657, %v2930, 0
        %v2980 = vsel %vm706, %v2882, 0
        %2982 = vmatprep.subr.bf16.mxu0 0
        %2983 = vmatpush1.bf16.msra.mxu0 %v2980
        %2984 = vmatprep.subr.bf16.mxu0 0
        %2985 = vmatpush1.bf16.msra.mxu0 0
        %2986 = vmatprep.subr.bf16.mxu0 0
        %2987 = vmatpush1.bf16.msra.mxu0 0
        %2988 = vmatprep.subr.bf16.mxu0 0
        %2989 = vmatpush1.bf16.msra.mxu0 0
        %2990 = vmatprep.subr.bf16.mxu0 0
        %2991 = vmatpush1.bf16.msra.mxu0 0
        %2992 = vmatprep.subr.bf16.mxu0 0
        %2993 = vmatpush1.bf16.msra.mxu0 0
        %2994 = vmatprep.subr.bf16.mxu0 0
        %2995 = vmatpush1.bf16.msra.mxu0 0
        %2996 = vmatprep.subr.bf16.mxu0 0
        %2997 = vmatpush1.bf16.msra.mxu0 0
        %2998 = vmatprep.subr.bf16.mxu0 0
        %2999 = vmatpush1.bf16.msra.mxu0 0
        %3000 = vmatprep.subr.bf16.mxu0 0
        %3001 = vmatpush1.bf16.msra.mxu0 0
        %3002 = vmatprep.subr.bf16.mxu0 0
        %3003 = vmatpush1.bf16.msra.mxu0 0
        %3004 = vmatprep.subr.bf16.mxu0 0
        %3005 = vmatpush1.bf16.msra.mxu0 0
        %3006 = vmatprep.subr.bf16.mxu0 0
        %3007 = vmatpush1.bf16.msra.mxu0 0
        %3008 = vmatprep.subr.bf16.mxu0 0
        %3009 = vmatpush1.bf16.msra.mxu0 0
        %3010 = vmatprep.subr.bf16.mxu0 0
        %3011 = vmatpush1.bf16.msra.mxu0 0
        %3012 = vmatprep.subr.bf16.mxu0 0
        %3013 = vmatpush1.bf16.msra.mxu0 0
        %3014 = vmatprep.mubr.bf16.mxu0 0
        %3015 = vmatmul.mubr.bf16.gmra.mrb[0].mxu0 %v2932
        %v3016 = vpop.f32.mrb[0].mxu0
        %v3017 = vadd.f32 0.0, %v3016
        %v3018 = vpop.f32.mrb[0].mxu0
        %v3019 = vpop.f32.mrb[0].mxu0
        %v3020 = vadd.f32 0.0, %v3019
        %v3021 = vpop.f32.mrb[0].mxu0
        %3022 = vmatprep.mubr.bf16.mxu0 0
        %3023 = vmatmul.mubr.bf16.gmra.mrb[0].mxu0 %v2935
        %v3024 = vpop.f32.mrb[0].mxu0
        %v3025 = vadd.f32 0.0, %v3024
        %v3026 = vpop.f32.mrb[0].mxu0
        %v3027 = vpop.f32.mrb[0].mxu0
        %v3028 = vadd.f32 0.0, %v3027
        %v3029 = vpop.f32.mrb[0].mxu0
        %3030 = vmatprep.mubr.bf16.mxu0 0
        %3031 = vmatmul.mubr.bf16.gmra.mrb[0].mxu0 %v2938
        %v3032 = vpop.f32.mrb[0].mxu0
        %v3033 = vadd.f32 0.0, %v3032
        %v3034 = vpop.f32.mrb[0].mxu0
        %v3035 = vpop.f32.mrb[0].mxu0
        %v3036 = vadd.f32 0.0, %v3035
        %v3037 = vpop.f32.mrb[0].mxu0
        %3038 = vmatprep.mubr.bf16.mxu0 0
        %3039 = vmatmul.mubr.bf16.gmra.mrb[0].mxu0 %v2941
        %v3040 = vpop.f32.mrb[0].mxu0
        %v3041 = vadd.f32 0.0, %v3040
        %v3042 = vpop.f32.mrb[0].mxu0
        %v3043 = vpop.f32.mrb[0].mxu0
        %v3044 = vadd.f32 0.0, %v3043
        %v3045 = vpop.f32.mrb[0].mxu0
        %3046 = vmatprep.mubr.bf16.mxu0 0
        %3047 = vmatmul.mubr.bf16.gmra.mrb[0].mxu0 %v2944
        %v3048 = vpop.f32.mrb[0].mxu0
        %v3049 = vadd.f32 0.0, %v3048
        %v3050 = vpop.f32.mrb[0].mxu0
        %v3051 = vpop.f32.mrb[0].mxu0
        %v3052 = vadd.f32 0.0, %v3051
        %v3053 = vpop.f32.mrb[0].mxu0
        %3054 = vmatprep.mubr.bf16.mxu0 0
        %3055 = vmatmul.mubr.bf16.gmra.mrb[0].mxu0 %v2947
        %v3056 = vpop.f32.mrb[0].mxu0
        %v3057 = vadd.f32 0.0, %v3056
        %v3058 = vpop.f32.mrb[0].mxu0
        %v3059 = vpop.f32.mrb[0].mxu0
        %v3060 = vadd.f32 0.0, %v3059
        %v3061 = vpop.f32.mrb[0].mxu0
        %3062 = vmatprep.mubr.bf16.mxu0 0
        %3063 = vmatmul.mubr.bf16.gmra.mrb[0].mxu0 %v2950
        %v3064 = vpop.f32.mrb[0].mxu0
        %v3065 = vadd.f32 0.0, %v3064
        %v3066 = vpop.f32.mrb[0].mxu0
        %v3067 = vpop.f32.mrb[0].mxu0
        %v3068 = vadd.f32 0.0, %v3067
        %v3069 = vpop.f32.mrb[0].mxu0
        %3070 = vmatprep.mubr.bf16.mxu0 0
        %3071 = vmatmul.mubr.bf16.gmra.mrb[0].mxu0 %v2953
        %v3072 = vpop.f32.mrb[0].mxu0
        %v3073 = vadd.f32 0.0, %v3072
        %v3074 = vpop.f32.mrb[0].mxu0
        %v3075 = vpop.f32.mrb[0].mxu0
        %v3076 = vadd.f32 0.0, %v3075
        %v3077 = vpop.f32.mrb[0].mxu0
        %3078 = vmatprep.mubr.bf16.mxu0 0
        %3079 = vmatmul.mubr.bf16.gmra.mrb[0].mxu0 %v2956
        %v3080 = vpop.f32.mrb[0].mxu0
        %v3081 = vadd.f32 0.0, %v3080
        %v3082 = vpop.f32.mrb[0].mxu0
        %v3083 = vpop.f32.mrb[0].mxu0
        %v3084 = vadd.f32 0.0, %v3083
        %v3085 = vpop.f32.mrb[0].mxu0
        %3086 = vmatprep.mubr.bf16.mxu0 0
        %3087 = vmatmul.mubr.bf16.gmra.mrb[0].mxu0 %v2959
        %v3088 = vpop.f32.mrb[0].mxu0
        %v3089 = vadd.f32 0.0, %v3088
        %v3090 = vpop.f32.mrb[0].mxu0
        %v3091 = vpop.f32.mrb[0].mxu0
        %v3092 = vadd.f32 0.0, %v3091
        %v3093 = vpop.f32.mrb[0].mxu0
        %3094 = vmatprep.mubr.bf16.mxu0 0
        %3095 = vmatmul.mubr.bf16.gmra.mrb[0].mxu0 %v2962
        %v3096 = vpop.f32.mrb[0].mxu0
        %v3097 = vadd.f32 0.0, %v3096
        %v3098 = vpop.f32.mrb[0].mxu0
        %v3099 = vpop.f32.mrb[0].mxu0
        %v3100 = vadd.f32 0.0, %v3099
        %v3101 = vpop.f32.mrb[0].mxu0
        %3102 = vmatprep.mubr.bf16.mxu0 0
        %3103 = vmatmul.mubr.bf16.gmra.mrb[0].mxu0 %v2965
        %v3104 = vpop.f32.mrb[0].mxu0
        %v3105 = vadd.f32 0.0, %v3104
        %v3106 = vpop.f32.mrb[0].mxu0
        %v3107 = vpop.f32.mrb[0].mxu0
        %v3108 = vadd.f32 0.0, %v3107
        %v3109 = vpop.f32.mrb[0].mxu0
        %3110 = vmatprep.mubr.bf16.mxu0 0
        %3111 = vmatmul.mubr.bf16.gmra.mrb[0].mxu0 %v2968
        %v3112 = vpop.f32.mrb[0].mxu0
        %v3113 = vadd.f32 0.0, %v3112
        %v3114 = vpop.f32.mrb[0].mxu0
        %v3115 = vpop.f32.mrb[0].mxu0
        %v3116 = vadd.f32 0.0, %v3115
        %v3117 = vpop.f32.mrb[0].mxu0
        %3118 = vmatprep.mubr.bf16.mxu0 0
        %3119 = vmatmul.mubr.bf16.gmra.mrb[0].mxu0 %v2971
        %v3120 = vpop.f32.mrb[0].mxu0
        %v3121 = vadd.f32 0.0, %v3120
        %v3122 = vpop.f32.mrb[0].mxu0
        %v3123 = vpop.f32.mrb[0].mxu0
        %v3124 = vadd.f32 0.0, %v3123
        %v3125 = vpop.f32.mrb[0].mxu0
        %3126 = vmatprep.mubr.bf16.mxu0 0
        %3127 = vmatmul.mubr.bf16.gmra.mrb[0].mxu0 %v2974
        %v3128 = vpop.f32.mrb[0].mxu0
        %v3129 = vadd.f32 0.0, %v3128
        %v3130 = vpop.f32.mrb[0].mxu0
        %v3131 = vpop.f32.mrb[0].mxu0
        %v3132 = vadd.f32 0.0, %v3131
        %v3133 = vpop.f32.mrb[0].mxu0
        %3134 = vmatprep.mubr.bf16.mxu0 0
        %3135 = vmatmul.mubr.bf16.gmra.mrb[0].mxu0 %v2977
        %v3136 = vpop.f32.mrb[0].mxu0
        %v3137 = vadd.f32 0.0, %v3136
        %v3138 = vpop.f32.mrb[0].mxu0
        %v3139 = vpop.f32.mrb[0].mxu0
        %v3140 = vadd.f32 0.0, %v3139
        %v3141 = vpop.f32.mrb[0].mxu0
        %3142 = vdwg.mxu0
        %v3143 = vadd.f32 %v2673, %v3017
        %v3144 = vadd.f32 %v2674, %v3020
        %v3145 = vadd.f32 %v2675, %v3025
        %v3146 = vadd.f32 %v2676, %v3028
        %v3147 = vadd.f32 %v2677, %v3033
        %v3148 = vadd.f32 %v2678, %v3036
        %v3149 = vadd.f32 %v2679, %v3041
        %v3150 = vadd.f32 %v2680, %v3044
        %v3151 = vadd.f32 %v2681, %v3049
        %v3152 = vadd.f32 %v2682, %v3052
        %v3153 = vadd.f32 %v2683, %v3057
        %v3154 = vadd.f32 %v2684, %v3060
        %v3155 = vadd.f32 %v2685, %v3065
        %v3156 = vadd.f32 %v2686, %v3068
        %v3157 = vadd.f32 %v2687, %v3073
        %v3158 = vadd.f32 %v2688, %v3076
        %v3159 = vadd.f32 %v2689, %v3081
        %v3160 = vadd.f32 %v2690, %v3084
        %v3161 = vadd.f32 %v2691, %v3089
        %v3162 = vadd.f32 %v2692, %v3092
        %v3163 = vadd.f32 %v2693, %v3097
        %v3164 = vadd.f32 %v2694, %v3100
        %v3165 = vadd.f32 %v2695, %v3105
        %v3166 = vadd.f32 %v2696, %v3108
        %v3167 = vadd.f32 %v2697, %v3113
        %v3168 = vadd.f32 %v2698, %v3116
        %v3169 = vadd.f32 %v2699, %v3121
        %v3170 = vadd.f32 %v2700, %v3124
        %v3171 = vadd.f32 %v2701, %v3129
        %v3172 = vadd.f32 %v2702, %v3132
        %v3173 = vadd.f32 %v2703, %v3137
        %v3174 = vadd.f32 %v2704, %v3140
        %s3175 = scalar_lea.vmem %s168, 24
        %v3176 = vld [vmem:[%s3175] sm:$0xf]
        %v3177 = vld [vmem:[%s3175 + $0x4] sm:$0xf]
        %v3178 = vld [vmem:[%s3175 + $0xc] sm:$0xf]
        %v3179 = vld [vmem:[%s3175 + $0x10] sm:$0xf]
        %v3180 = vld [vmem:[%s3175 + $0x18] sm:$0xf]
        %v3181 = vld [vmem:[%s3175 + $0x1c] sm:$0xf]
        %v3182 = vld [vmem:[%s3175 + $0x24] sm:$0xf]
        %v3183 = vld [vmem:[%s3175 + $0x28] sm:$0xf]
        %v3184 = vld [vmem:[%s3175 + $0x30] sm:$0xf]
        %v3185 = vld [vmem:[%s3175 + $0x34] sm:$0xf]
        %v3186 = vld [vmem:[%s3175 + $0x3c] sm:$0xf]
        %v3187 = vld [vmem:[%s3175 + $0x40] sm:$0xf]
        %v3188 = vld [vmem:[%s3175 + $0x48] sm:$0xf]
        %v3189 = vld [vmem:[%s3175 + $0x4c] sm:$0xf]
        %v3190 = vld [vmem:[%s3175 + $0x54] sm:$0xf]
        %v3191 = vld [vmem:[%s3175 + $0x58] sm:$0xf]
        %v3192 = vld [vmem:[%s3175 + $0x60] sm:$0xf]
        %v3193 = vld [vmem:[%s3175 + $0x64] sm:$0xf]
        %v3194 = vld [vmem:[%s3175 + $0x6c] sm:$0xf]
        %v3195 = vld [vmem:[%s3175 + $0x70] sm:$0xf]
        %v3196 = vld [vmem:[%s3175 + $0x78] sm:$0xf]
        %v3197 = vld [vmem:[%s3175 + $0x7c] sm:$0xf]
        %v3198 = vld [vmem:[%s3175 + $0x84] sm:$0xf]
        %v3199 = vld [vmem:[%s3175 + $0x88] sm:$0xf]
        %v3200 = vld [vmem:[%s3175 + $0x90] sm:$0xf]
        %v3201 = vld [vmem:[%s3175 + $0x94] sm:$0xf]
        %v3202 = vld [vmem:[%s3175 + $0x9c] sm:$0xf]
        %v3203 = vld [vmem:[%s3175 + $0xa0] sm:$0xf]
        %v3204 = vld [vmem:[%s3175 + $0xa8] sm:$0xf]
        %v3205 = vld [vmem:[%s3175 + $0xac] sm:$0xf]
        %v3206 = vld [vmem:[%s3175 + $0xb4] sm:$0xf]
        %v3207 = vld [vmem:[%s3175 + $0xb8] sm:$0xf]
        %s3208 = scalar_lea.vmem %s1, 12
        %v3209 = vld [vmem:[%s3208] sm:$0x3]
        %v3242 = vunpack.c.l.b16 %v3176
        %v3243 = vunpack.c.l.b16 %v3177
        %v3244 = vunpack.c.l.b16 %v3178
        %v3245 = vunpack.c.l.b16 %v3179
        %v3246 = vunpack.c.l.b16 %v3180
        %v3247 = vunpack.c.l.b16 %v3181
        %v3248 = vunpack.c.l.b16 %v3182
        %v3249 = vunpack.c.l.b16 %v3183
        %v3250 = vunpack.c.l.b16 %v3184
        %v3251 = vunpack.c.l.b16 %v3185
        %v3252 = vunpack.c.l.b16 %v3186
        %v3253 = vunpack.c.l.b16 %v3187
        %v3254 = vunpack.c.l.b16 %v3188
        %v3255 = vunpack.c.l.b16 %v3189
        %v3256 = vunpack.c.l.b16 %v3190
        %v3257 = vunpack.c.l.b16 %v3191
        %v3258 = vunpack.c.l.b16 %v3192
        %v3259 = vunpack.c.l.b16 %v3193
        %v3260 = vunpack.c.l.b16 %v3194
        %v3261 = vunpack.c.l.b16 %v3195
        %v3262 = vunpack.c.l.b16 %v3196
        %v3263 = vunpack.c.l.b16 %v3197
        %v3264 = vunpack.c.l.b16 %v3198
        %v3265 = vunpack.c.l.b16 %v3199
        %v3266 = vunpack.c.l.b16 %v3200
        %v3267 = vunpack.c.l.b16 %v3201
        %v3268 = vunpack.c.l.b16 %v3202
        %v3269 = vunpack.c.l.b16 %v3203
        %v3270 = vunpack.c.l.b16 %v3204
        %v3271 = vunpack.c.l.b16 %v3205
        %v3272 = vunpack.c.l.b16 %v3206
        %v3273 = vunpack.c.l.b16 %v3207
        %v3274 = vpack.c.b16 %v3243, %v3242
        %v3275 = vpack.c.b16 %v3245, %v3244
        %v3276 = vpack.c.b16 %v3247, %v3246
        %v3277 = vpack.c.b16 %v3249, %v3248
        %v3278 = vpack.c.b16 %v3251, %v3250
        %v3279 = vpack.c.b16 %v3253, %v3252
        %v3280 = vpack.c.b16 %v3255, %v3254
        %v3281 = vpack.c.b16 %v3257, %v3256
        %v3282 = vpack.c.b16 %v3259, %v3258
        %v3283 = vpack.c.b16 %v3261, %v3260
        %v3284 = vpack.c.b16 %v3263, %v3262
        %v3285 = vpack.c.b16 %v3265, %v3264
        %v3286 = vpack.c.b16 %v3267, %v3266
        %v3287 = vpack.c.b16 %v3269, %v3268
        %v3288 = vpack.c.b16 %v3271, %v3270
        %v3289 = vpack.c.b16 %v3273, %v3272
        %v3291 = vsel %vm657, %v3274, 0
        %v3294 = vsel %vm657, %v3275, 0
        %v3297 = vsel %vm657, %v3276, 0
        %v3300 = vsel %vm657, %v3277, 0
        %v3303 = vsel %vm657, %v3278, 0
        %v3306 = vsel %vm657, %v3279, 0
        %v3309 = vsel %vm657, %v3280, 0
        %v3312 = vsel %vm657, %v3281, 0
        %v3315 = vsel %vm657, %v3282, 0
        %v3318 = vsel %vm657, %v3283, 0
        %v3321 = vsel %vm657, %v3284, 0
        %v3324 = vsel %vm657, %v3285, 0
        %v3327 = vsel %vm657, %v3286, 0
        %v3330 = vsel %vm657, %v3287, 0
        %v3333 = vsel %vm657, %v3288, 0
        %v3336 = vsel %vm657, %v3289, 0
        %v3339 = vsel %vm706, %v3209, 0
        %3341 = vmatprep.subr.bf16.mxu0 0
        %3342 = vmatpush1.bf16.msra.mxu0 %v3339
        %3343 = vmatprep.subr.bf16.mxu0 0
        %3344 = vmatpush1.bf16.msra.mxu0 0
        %3345 = vmatprep.subr.bf16.mxu0 0
        %3346 = vmatpush1.bf16.msra.mxu0 0
        %3347 = vmatprep.subr.bf16.mxu0 0
        %3348 = vmatpush1.bf16.msra.mxu0 0
        %3349 = vmatprep.subr.bf16.mxu0 0
        %3350 = vmatpush1.bf16.msra.mxu0 0
        %3351 = vmatprep.subr.bf16.mxu0 0
        %3352 = vmatpush1.bf16.msra.mxu0 0
        %3353 = vmatprep.subr.bf16.mxu0 0
        %3354 = vmatpush1.bf16.msra.mxu0 0
        %3355 = vmatprep.subr.bf16.mxu0 0
        %3356 = vmatpush1.bf16.msra.mxu0 0
        %3357 = vmatprep.subr.bf16.mxu0 0
        %3358 = vmatpush1.bf16.msra.mxu0 0
        %3359 = vmatprep.subr.bf16.mxu0 0
        %3360 = vmatpush1.bf16.msra.mxu0 0
        %3361 = vmatprep.subr.bf16.mxu0 0
        %3362 = vmatpush1.bf16.msra.mxu0 0
        %3363 = vmatprep.subr.bf16.mxu0 0
        %3364 = vmatpush1.bf16.msra.mxu0 0
        %3365 = vmatprep.subr.bf16.mxu0 0
        %3366 = vmatpush1.bf16.msra.mxu0 0
        %3367 = vmatprep.subr.bf16.mxu0 0
        %3368 = vmatpush1.bf16.msra.mxu0 0
        %3369 = vmatprep.subr.bf16.mxu0 0
        %3370 = vmatpush1.bf16.msra.mxu0 0
        %3371 = vmatprep.subr.bf16.mxu0 0
        %3372 = vmatpush1.bf16.msra.mxu0 0
        %3373 = vmatprep.mubr.bf16.mxu0 0
        %3374 = vmatmul.mubr.bf16.gmra.mrb[0].mxu0 %v3291
        %v3375 = vpop.f32.mrb[0].mxu0
        %v3376 = vadd.f32 0.0, %v3375
        %v3377 = vpop.f32.mrb[0].mxu0
        %v3378 = vpop.f32.mrb[0].mxu0
        %v3379 = vadd.f32 0.0, %v3378
        %v3380 = vpop.f32.mrb[0].mxu0
        %3381 = vmatprep.mubr.bf16.mxu0 0
        %3382 = vmatmul.mubr.bf16.gmra.mrb[0].mxu0 %v3294
        %v3383 = vpop.f32.mrb[0].mxu0
        %v3384 = vadd.f32 0.0, %v3383
        %v3385 = vpop.f32.mrb[0].mxu0
        %v3386 = vpop.f32.mrb[0].mxu0
        %v3387 = vadd.f32 0.0, %v3386
        %v3388 = vpop.f32.mrb[0].mxu0
        %3389 = vmatprep.mubr.bf16.mxu0 0
        %3390 = vmatmul.mubr.bf16.gmra.mrb[0].mxu0 %v3297
        %v3391 = vpop.f32.mrb[0].mxu0
        %v3392 = vadd.f32 0.0, %v3391
        %v3393 = vpop.f32.mrb[0].mxu0
        %v3394 = vpop.f32.mrb[0].mxu0
        %v3395 = vadd.f32 0.0, %v3394
        %v3396 = vpop.f32.mrb[0].mxu0
        %3397 = vmatprep.mubr.bf16.mxu0 0
        %3398 = vmatmul.mubr.bf16.gmra.mrb[0].mxu0 %v3300
        %v3399 = vpop.f32.mrb[0].mxu0
        %v3400 = vadd.f32 0.0, %v3399
        %v3401 = vpop.f32.mrb[0].mxu0
        %v3402 = vpop.f32.mrb[0].mxu0
        %v3403 = vadd.f32 0.0, %v3402
        %v3404 = vpop.f32.mrb[0].mxu0
        %3405 = vmatprep.mubr.bf16.mxu0 0
        %3406 = vmatmul.mubr.bf16.gmra.mrb[0].mxu0 %v3303
        %v3407 = vpop.f32.mrb[0].mxu0
        %v3408 = vadd.f32 0.0, %v3407
        %v3409 = vpop.f32.mrb[0].mxu0
        %v3410 = vpop.f32.mrb[0].mxu0
        %v3411 = vadd.f32 0.0, %v3410
        %v3412 = vpop.f32.mrb[0].mxu0
        %3413 = vmatprep.mubr.bf16.mxu0 0
        %3414 = vmatmul.mubr.bf16.gmra.mrb[0].mxu0 %v3306
        %v3415 = vpop.f32.mrb[0].mxu0
        %v3416 = vadd.f32 0.0, %v3415
        %v3417 = vpop.f32.mrb[0].mxu0
        %v3418 = vpop.f32.mrb[0].mxu0
        %v3419 = vadd.f32 0.0, %v3418
        %v3420 = vpop.f32.mrb[0].mxu0
        %3421 = vmatprep.mubr.bf16.mxu0 0
        %3422 = vmatmul.mubr.bf16.gmra.mrb[0].mxu0 %v3309
        %v3423 = vpop.f32.mrb[0].mxu0
        %v3424 = vadd.f32 0.0, %v3423
        %v3425 = vpop.f32.mrb[0].mxu0
        %v3426 = vpop.f32.mrb[0].mxu0
        %v3427 = vadd.f32 0.0, %v3426
        %v3428 = vpop.f32.mrb[0].mxu0
        %3429 = vmatprep.mubr.bf16.mxu0 0
        %3430 = vmatmul.mubr.bf16.gmra.mrb[0].mxu0 %v3312
        %v3431 = vpop.f32.mrb[0].mxu0
        %v3432 = vadd.f32 0.0, %v3431
        %v3433 = vpop.f32.mrb[0].mxu0
        %v3434 = vpop.f32.mrb[0].mxu0
        %v3435 = vadd.f32 0.0, %v3434
        %v3436 = vpop.f32.mrb[0].mxu0
        %3437 = vmatprep.mubr.bf16.mxu0 0
        %3438 = vmatmul.mubr.bf16.gmra.mrb[0].mxu0 %v3315
        %v3439 = vpop.f32.mrb[0].mxu0
        %v3440 = vadd.f32 0.0, %v3439
        %v3441 = vpop.f32.mrb[0].mxu0
        %v3442 = vpop.f32.mrb[0].mxu0
        %v3443 = vadd.f32 0.0, %v3442
        %v3444 = vpop.f32.mrb[0].mxu0
        %3445 = vmatprep.mubr.bf16.mxu0 0
        %3446 = vmatmul.mubr.bf16.gmra.mrb[0].mxu0 %v3318
        %v3447 = vpop.f32.mrb[0].mxu0
        %v3448 = vadd.f32 0.0, %v3447
        %v3449 = vpop.f32.mrb[0].mxu0
        %v3450 = vpop.f32.mrb[0].mxu0
        %v3451 = vadd.f32 0.0, %v3450
        %v3452 = vpop.f32.mrb[0].mxu0
        %3453 = vmatprep.mubr.bf16.mxu0 0
        %3454 = vmatmul.mubr.bf16.gmra.mrb[0].mxu0 %v3321
        %v3455 = vpop.f32.mrb[0].mxu0
        %v3456 = vadd.f32 0.0, %v3455
        %v3457 = vpop.f32.mrb[0].mxu0
        %v3458 = vpop.f32.mrb[0].mxu0
        %v3459 = vadd.f32 0.0, %v3458
        %v3460 = vpop.f32.mrb[0].mxu0
        %3461 = vmatprep.mubr.bf16.mxu0 0
        %3462 = vmatmul.mubr.bf16.gmra.mrb[0].mxu0 %v3324
        %v3463 = vpop.f32.mrb[0].mxu0
        %v3464 = vadd.f32 0.0, %v3463
        %v3465 = vpop.f32.mrb[0].mxu0
        %v3466 = vpop.f32.mrb[0].mxu0
        %v3467 = vadd.f32 0.0, %v3466
        %v3468 = vpop.f32.mrb[0].mxu0
        %3469 = vmatprep.mubr.bf16.mxu0 0
        %3470 = vmatmul.mubr.bf16.gmra.mrb[0].mxu0 %v3327
        %v3471 = vpop.f32.mrb[0].mxu0
        %v3472 = vadd.f32 0.0, %v3471
        %v3473 = vpop.f32.mrb[0].mxu0
        %v3474 = vpop.f32.mrb[0].mxu0
        %v3475 = vadd.f32 0.0, %v3474
        %v3476 = vpop.f32.mrb[0].mxu0
        %3477 = vmatprep.mubr.bf16.mxu0 0
        %3478 = vmatmul.mubr.bf16.gmra.mrb[0].mxu0 %v3330
        %v3479 = vpop.f32.mrb[0].mxu0
        %v3480 = vadd.f32 0.0, %v3479
        %v3481 = vpop.f32.mrb[0].mxu0
        %v3482 = vpop.f32.mrb[0].mxu0
        %v3483 = vadd.f32 0.0, %v3482
        %v3484 = vpop.f32.mrb[0].mxu0
        %3485 = vmatprep.mubr.bf16.mxu0 0
        %3486 = vmatmul.mubr.bf16.gmra.mrb[0].mxu0 %v3333
        %v3487 = vpop.f32.mrb[0].mxu0
        %v3488 = vadd.f32 0.0, %v3487
        %v3489 = vpop.f32.mrb[0].mxu0
        %v3490 = vpop.f32.mrb[0].mxu0
        %v3491 = vadd.f32 0.0, %v3490
        %v3492 = vpop.f32.mrb[0].mxu0
        %3493 = vmatprep.mubr.bf16.mxu0 0
        %3494 = vmatmul.mubr.bf16.gmra.mrb[0].mxu0 %v3336
        %v3495 = vpop.f32.mrb[0].mxu0
        %v3496 = vadd.f32 0.0, %v3495
        %v3497 = vpop.f32.mrb[0].mxu0
        %v3498 = vpop.f32.mrb[0].mxu0
        %v3499 = vadd.f32 0.0, %v3498
        %v3500 = vpop.f32.mrb[0].mxu0
        %3501 = vdwg.mxu0
        %v3502 = vadd.f32 %v3143, %v3376
        %v3503 = vadd.f32 %v3144, %v3379
        %v3504 = vadd.f32 %v3145, %v3384
        %v3505 = vadd.f32 %v3146, %v3387
        %v3506 = vadd.f32 %v3147, %v3392
        %v3507 = vadd.f32 %v3148, %v3395
        %v3508 = vadd.f32 %v3149, %v3400
        %v3509 = vadd.f32 %v3150, %v3403
        %v3510 = vadd.f32 %v3151, %v3408
        %v3511 = vadd.f32 %v3152, %v3411
        %v3512 = vadd.f32 %v3153, %v3416
        %v3513 = vadd.f32 %v3154, %v3419
        %v3514 = vadd.f32 %v3155, %v3424
        %v3515 = vadd.f32 %v3156, %v3427
        %v3516 = vadd.f32 %v3157, %v3432
        %v3517 = vadd.f32 %v3158, %v3435
        %v3518 = vadd.f32 %v3159, %v3440
        %v3519 = vadd.f32 %v3160, %v3443
        %v3520 = vadd.f32 %v3161, %v3448
        %v3521 = vadd.f32 %v3162, %v3451
        %v3522 = vadd.f32 %v3163, %v3456
        %v3523 = vadd.f32 %v3164, %v3459
        %v3524 = vadd.f32 %v3165, %v3464
        %v3525 = vadd.f32 %v3166, %v3467
        %v3526 = vadd.f32 %v3167, %v3472
        %v3527 = vadd.f32 %v3168, %v3475
        %v3528 = vadd.f32 %v3169, %v3480
        %v3529 = vadd.f32 %v3170, %v3483
        %v3530 = vadd.f32 %v3171, %v3488
        %v3531 = vadd.f32 %v3172, %v3491
        %v3532 = vadd.f32 %v3173, %v3496
        %v3533 = vadd.f32 %v3174, %v3499
        %v3534 = vld [vmem:[%s3175] sm:$0xf]
        %v3535 = vld [vmem:[%s3175 + $0x4] sm:$0xf]
        %v3536 = vld [vmem:[%s3175 + $0x8] sm:$0x1]
        %v3537 = vld [vmem:[%s3175 + $0xc] sm:$0xf]
        %v3538 = vld [vmem:[%s3175 + $0x10] sm:$0xf]
        %v3539 = vld [vmem:[%s3175 + $0x14] sm:$0x1]
        %v3540 = vld [vmem:[%s3175 + $0x18] sm:$0xf]
        %v3541 = vld [vmem:[%s3175 + $0x1c] sm:$0xf]
        %v3542 = vld [vmem:[%s3175 + $0x20] sm:$0x1]
        %v3543 = vld [vmem:[%s3175 + $0x24] sm:$0xf]
        %v3544 = vld [vmem:[%s3175 + $0x28] sm:$0xf]
        %v3545 = vld [vmem:[%s3175 + $0x2c] sm:$0x1]
        %v3546 = vld [vmem:[%s3175 + $0x30] sm:$0xf]
        %v3547 = vld [vmem:[%s3175 + $0x34] sm:$0xf]
        %v3548 = vld [vmem:[%s3175 + $0x38] sm:$0x1]
        %v3549 = vld [vmem:[%s3175 + $0x3c] sm:$0xf]
        %v3550 = vld [vmem:[%s3175 + $0x40] sm:$0xf]
        %v3551 = vld [vmem:[%s3175 + $0x44] sm:$0x1]
        %v3552 = vld [vmem:[%s3175 + $0x48] sm:$0xf]
        %v3553 = vld [vmem:[%s3175 + $0x4c] sm:$0xf]
        %v3554 = vld [vmem:[%s3175 + $0x50] sm:$0x1]
        %v3555 = vld [vmem:[%s3175 + $0x54] sm:$0xf]
        %v3556 = vld [vmem:[%s3175 + $0x58] sm:$0xf]
        %v3557 = vld [vmem:[%s3175 + $0x5c] sm:$0x1]
        %v3558 = vld [vmem:[%s3175 + $0x60] sm:$0xf]
        %v3559 = vld [vmem:[%s3175 + $0x64] sm:$0xf]
        %v3560 = vld [vmem:[%s3175 + $0x68] sm:$0x1]
        %v3561 = vld [vmem:[%s3175 + $0x6c] sm:$0xf]
        %v3562 = vld [vmem:[%s3175 + $0x70] sm:$0xf]
        %v3563 = vld [vmem:[%s3175 + $0x74] sm:$0x1]
        %v3564 = vld [vmem:[%s3175 + $0x78] sm:$0xf]
        %v3565 = vld [vmem:[%s3175 + $0x7c] sm:$0xf]
        %v3566 = vld [vmem:[%s3175 + $0x80] sm:$0x1]
        %v3567 = vld [vmem:[%s3175 + $0x84] sm:$0xf]
        %v3568 = vld [vmem:[%s3175 + $0x88] sm:$0xf]
        %v3569 = vld [vmem:[%s3175 + $0x8c] sm:$0x1]
        %v3570 = vld [vmem:[%s3175 + $0x90] sm:$0xf]
        %v3571 = vld [vmem:[%s3175 + $0x94] sm:$0xf]
        %v3572 = vld [vmem:[%s3175 + $0x98] sm:$0x1]
        %v3573 = vld [vmem:[%s3175 + $0x9c] sm:$0xf]
        %v3574 = vld [vmem:[%s3175 + $0xa0] sm:$0xf]
        %v3575 = vld [vmem:[%s3175 + $0xa4] sm:$0x1]
        %v3576 = vld [vmem:[%s3175 + $0xa8] sm:$0xf]
        %v3577 = vld [vmem:[%s3175 + $0xac] sm:$0xf]
        %v3578 = vld [vmem:[%s3175 + $0xb0] sm:$0x1]
        %v3579 = vld [vmem:[%s3175 + $0xb4] sm:$0xf]
        %v3580 = vld [vmem:[%s3175 + $0xb8] sm:$0xf]
        %v3581 = vld [vmem:[%s3175 + $0xbc] sm:$0x1]
        %v3583 = vshrl.u32 %v3534, 16
        %v3585 = vrot.slane %v3583, 4
        %v3586 = vshll.u32 %v3534, 16
        %v3588 = vrot.slane %v3586, 5
        %v3589 = vor.u32 %v3585, %v3588
        %v3590 = vrot.slane %v3589, 4
        %v3592 = vshll.u32 %v3535, 16
        %v3594 = vrot.slane %v3592, 5
        %v3595 = vsel %vm222, %v3590, %v3594
        %v3596 = vshrl.u32 %v3535, 16
        %v3598 = vrot.slane %v3596, 4
        %v3599 = vor.u32 %v3598, %v3594
        %v3600 = vrot.slane %v3599, 4
        %v3602 = vshll.u32 %v3536, 16
        %v3604 = vrot.slane %v3602, 5
        %v3605 = vsel %vm222, %v3600, %v3604
        %v3607 = vshrl.u32 %v3537, 16
        %v3609 = vrot.slane %v3607, 4
        %v3610 = vshll.u32 %v3537, 16
        %v3612 = vrot.slane %v3610, 5
        %v3613 = vor.u32 %v3609, %v3612
        %v3614 = vrot.slane %v3613, 4
        %v3616 = vshll.u32 %v3538, 16
        %v3618 = vrot.slane %v3616, 5
        %v3619 = vsel %vm222, %v3614, %v3618
        %v3620 = vshrl.u32 %v3538, 16
        %v3622 = vrot.slane %v3620, 4
        %v3623 = vor.u32 %v3622, %v3618
        %v3624 = vrot.slane %v3623, 4
        %v3626 = vshll.u32 %v3539, 16
        %v3628 = vrot.slane %v3626, 5
        %v3629 = vsel %vm222, %v3624, %v3628
        %v3631 = vshrl.u32 %v3540, 16
        %v3633 = vrot.slane %v3631, 4
        %v3634 = vshll.u32 %v3540, 16
        %v3636 = vrot.slane %v3634, 5
        %v3637 = vor.u32 %v3633, %v3636
        %v3638 = vrot.slane %v3637, 4
        %v3640 = vshll.u32 %v3541, 16
        %v3642 = vrot.slane %v3640, 5
        %v3643 = vsel %vm222, %v3638, %v3642
        %v3644 = vshrl.u32 %v3541, 16
        %v3646 = vrot.slane %v3644, 4
        %v3647 = vor.u32 %v3646, %v3642
        %v3648 = vrot.slane %v3647, 4
        %v3650 = vshll.u32 %v3542, 16
        %v3652 = vrot.slane %v3650, 5
        %v3653 = vsel %vm222, %v3648, %v3652
        %v3655 = vshrl.u32 %v3543, 16
        %v3657 = vrot.slane %v3655, 4
        %v3658 = vshll.u32 %v3543, 16
        %v3660 = vrot.slane %v3658, 5
        %v3661 = vor.u32 %v3657, %v3660
        %v3662 = vrot.slane %v3661, 4
        %v3664 = vshll.u32 %v3544, 16
        %v3666 = vrot.slane %v3664, 5
        %v3667 = vsel %vm222, %v3662, %v3666
        %v3668 = vshrl.u32 %v3544, 16
        %v3670 = vrot.slane %v3668, 4
        %v3671 = vor.u32 %v3670, %v3666
        %v3672 = vrot.slane %v3671, 4
        %v3674 = vshll.u32 %v3545, 16
        %v3676 = vrot.slane %v3674, 5
        %v3677 = vsel %vm222, %v3672, %v3676
        %v3679 = vshrl.u32 %v3546, 16
        %v3681 = vrot.slane %v3679, 4
        %v3682 = vshll.u32 %v3546, 16
        %v3684 = vrot.slane %v3682, 5
        %v3685 = vor.u32 %v3681, %v3684
        %v3686 = vrot.slane %v3685, 4
        %v3688 = vshll.u32 %v3547, 16
        %v3690 = vrot.slane %v3688, 5
        %v3691 = vsel %vm222, %v3686, %v3690
        %v3692 = vshrl.u32 %v3547, 16
        %v3694 = vrot.slane %v3692, 4
        %v3695 = vor.u32 %v3694, %v3690
        %v3696 = vrot.slane %v3695, 4
        %v3698 = vshll.u32 %v3548, 16
        %v3700 = vrot.slane %v3698, 5
        %v3701 = vsel %vm222, %v3696, %v3700
        %v3703 = vshrl.u32 %v3549, 16
        %v3705 = vrot.slane %v3703, 4
        %v3706 = vshll.u32 %v3549, 16
        %v3708 = vrot.slane %v3706, 5
        %v3709 = vor.u32 %v3705, %v3708
        %v3710 = vrot.slane %v3709, 4
        %v3712 = vshll.u32 %v3550, 16
        %v3714 = vrot.slane %v3712, 5
        %v3715 = vsel %vm222, %v3710, %v3714
        %v3716 = vshrl.u32 %v3550, 16
        %v3718 = vrot.slane %v3716, 4
        %v3719 = vor.u32 %v3718, %v3714
        %v3720 = vrot.slane %v3719, 4
        %v3722 = vshll.u32 %v3551, 16
        %v3724 = vrot.slane %v3722, 5
        %v3725 = vsel %vm222, %v3720, %v3724
        %v3727 = vshrl.u32 %v3552, 16
        %v3729 = vrot.slane %v3727, 4
        %v3730 = vshll.u32 %v3552, 16
        %v3732 = vrot.slane %v3730, 5
        %v3733 = vor.u32 %v3729, %v3732
        %v3734 = vrot.slane %v3733, 4
        %v3736 = vshll.u32 %v3553, 16
        %v3738 = vrot.slane %v3736, 5
        %v3739 = vsel %vm222, %v3734, %v3738
        %v3740 = vshrl.u32 %v3553, 16
        %v3742 = vrot.slane %v3740, 4
        %v3743 = vor.u32 %v3742, %v3738
        %v3744 = vrot.slane %v3743, 4
        %v3746 = vshll.u32 %v3554, 16
        %v3748 = vrot.slane %v3746, 5
        %v3749 = vsel %vm222, %v3744, %v3748
        %v3751 = vshrl.u32 %v3555, 16
        %v3753 = vrot.slane %v3751, 4
        %v3754 = vshll.u32 %v3555, 16
        %v3756 = vrot.slane %v3754, 5
        %v3757 = vor.u32 %v3753, %v3756
        %v3758 = vrot.slane %v3757, 4
        %v3760 = vshll.u32 %v3556, 16
        %v3762 = vrot.slane %v3760, 5
        %v3763 = vsel %vm222, %v3758, %v3762
        %v3764 = vshrl.u32 %v3556, 16
        %v3766 = vrot.slane %v3764, 4
        %v3767 = vor.u32 %v3766, %v3762
        %v3768 = vrot.slane %v3767, 4
        %v3770 = vshll.u32 %v3557, 16
        %v3772 = vrot.slane %v3770, 5
        %v3773 = vsel %vm222, %v3768, %v3772
        %v3775 = vshrl.u32 %v3558, 16
        %v3777 = vrot.slane %v3775, 4
        %v3778 = vshll.u32 %v3558, 16
        %v3780 = vrot.slane %v3778, 5
        %v3781 = vor.u32 %v3777, %v3780
        %v3782 = vrot.slane %v3781, 4
        %v3784 = vshll.u32 %v3559, 16
        %v3786 = vrot.slane %v3784, 5
        %v3787 = vsel %vm222, %v3782, %v3786
        %v3788 = vshrl.u32 %v3559, 16
        %v3790 = vrot.slane %v3788, 4
        %v3791 = vor.u32 %v3790, %v3786
        %v3792 = vrot.slane %v3791, 4
        %v3794 = vshll.u32 %v3560, 16
        %v3796 = vrot.slane %v3794, 5
        %v3797 = vsel %vm222, %v3792, %v3796
        %v3799 = vshrl.u32 %v3561, 16
        %v3801 = vrot.slane %v3799, 4
        %v3802 = vshll.u32 %v3561, 16
        %v3804 = vrot.slane %v3802, 5
        %v3805 = vor.u32 %v3801, %v3804
        %v3806 = vrot.slane %v3805, 4
        %v3808 = vshll.u32 %v3562, 16
        %v3810 = vrot.slane %v3808, 5
        %v3811 = vsel %vm222, %v3806, %v3810
        %v3812 = vshrl.u32 %v3562, 16
        %v3814 = vrot.slane %v3812, 4
        %v3815 = vor.u32 %v3814, %v3810
        %v3816 = vrot.slane %v3815, 4
        %v3818 = vshll.u32 %v3563, 16
        %v3820 = vrot.slane %v3818, 5
        %v3821 = vsel %vm222, %v3816, %v3820
        %v3823 = vshrl.u32 %v3564, 16
        %v3825 = vrot.slane %v3823, 4
        %v3826 = vshll.u32 %v3564, 16
        %v3828 = vrot.slane %v3826, 5
        %v3829 = vor.u32 %v3825, %v3828
        %v3830 = vrot.slane %v3829, 4
        %v3832 = vshll.u32 %v3565, 16
        %v3834 = vrot.slane %v3832, 5
        %v3835 = vsel %vm222, %v3830, %v3834
        %v3836 = vshrl.u32 %v3565, 16
        %v3838 = vrot.slane %v3836, 4
        %v3839 = vor.u32 %v3838, %v3834
        %v3840 = vrot.slane %v3839, 4
        %v3842 = vshll.u32 %v3566, 16
        %v3844 = vrot.slane %v3842, 5
        %v3845 = vsel %vm222, %v3840, %v3844
        %v3847 = vshrl.u32 %v3567, 16
        %v3849 = vrot.slane %v3847, 4
        %v3850 = vshll.u32 %v3567, 16
        %v3852 = vrot.slane %v3850, 5
        %v3853 = vor.u32 %v3849, %v3852
        %v3854 = vrot.slane %v3853, 4
        %v3856 = vshll.u32 %v3568, 16
        %v3858 = vrot.slane %v3856, 5
        %v3859 = vsel %vm222, %v3854, %v3858
        %v3860 = vshrl.u32 %v3568, 16
        %v3862 = vrot.slane %v3860, 4
        %v3863 = vor.u32 %v3862, %v3858
        %v3864 = vrot.slane %v3863, 4
        %v3866 = vshll.u32 %v3569, 16
        %v3868 = vrot.slane %v3866, 5
        %v3869 = vsel %vm222, %v3864, %v3868
        %v3871 = vshrl.u32 %v3570, 16
        %v3873 = vrot.slane %v3871, 4
        %v3874 = vshll.u32 %v3570, 16
        %v3876 = vrot.slane %v3874, 5
        %v3877 = vor.u32 %v3873, %v3876
        %v3878 = vrot.slane %v3877, 4
        %v3880 = vshll.u32 %v3571, 16
        %v3882 = vrot.slane %v3880, 5
        %v3883 = vsel %vm222, %v3878, %v3882
        %v3884 = vshrl.u32 %v3571, 16
        %v3886 = vrot.slane %v3884, 4
        %v3887 = vor.u32 %v3886, %v3882
        %v3888 = vrot.slane %v3887, 4
        %v3890 = vshll.u32 %v3572, 16
        %v3892 = vrot.slane %v3890, 5
        %v3893 = vsel %vm222, %v3888, %v3892
        %v3895 = vshrl.u32 %v3573, 16
        %v3897 = vrot.slane %v3895, 4
        %v3898 = vshll.u32 %v3573, 16
        %v3900 = vrot.slane %v3898, 5
        %v3901 = vor.u32 %v3897, %v3900
        %v3902 = vrot.slane %v3901, 4
        %v3904 = vshll.u32 %v3574, 16
        %v3906 = vrot.slane %v3904, 5
        %v3907 = vsel %vm222, %v3902, %v3906
        %v3908 = vshrl.u32 %v3574, 16
        %v3910 = vrot.slane %v3908, 4
        %v3911 = vor.u32 %v3910, %v3906
        %v3912 = vrot.slane %v3911, 4
        %v3914 = vshll.u32 %v3575, 16
        %v3916 = vrot.slane %v3914, 5
        %v3917 = vsel %vm222, %v3912, %v3916
        %v3919 = vshrl.u32 %v3576, 16
        %v3921 = vrot.slane %v3919, 4
        %v3922 = vshll.u32 %v3576, 16
        %v3924 = vrot.slane %v3922, 5
        %v3925 = vor.u32 %v3921, %v3924
        %v3926 = vrot.slane %v3925, 4
        %v3928 = vshll.u32 %v3577, 16
        %v3930 = vrot.slane %v3928, 5
        %v3931 = vsel %vm222, %v3926, %v3930
        %v3932 = vshrl.u32 %v3577, 16
        %v3934 = vrot.slane %v3932, 4
        %v3935 = vor.u32 %v3934, %v3930
        %v3936 = vrot.slane %v3935, 4
        %v3938 = vshll.u32 %v3578, 16
        %v3940 = vrot.slane %v3938, 5
        %v3941 = vsel %vm222, %v3936, %v3940
        %v3943 = vshrl.u32 %v3579, 16
        %v3945 = vrot.slane %v3943, 4
        %v3946 = vshll.u32 %v3579, 16
        %v3948 = vrot.slane %v3946, 5
        %v3949 = vor.u32 %v3945, %v3948
        %v3950 = vrot.slane %v3949, 4
        %v3952 = vshll.u32 %v3580, 16
        %v3954 = vrot.slane %v3952, 5
        %v3955 = vsel %vm222, %v3950, %v3954
        %v3956 = vshrl.u32 %v3580, 16
        %v3958 = vrot.slane %v3956, 4
        %v3959 = vor.u32 %v3958, %v3954
        %v3960 = vrot.slane %v3959, 4
        %v3962 = vshll.u32 %v3581, 16
        %v3964 = vrot.slane %v3962, 5
        %v3965 = vsel %vm222, %v3960, %v3964
        %s3966 = scalar_lea.vmem %s1, 14
        %v3967 = vld [vmem:[%s3966] sm:$0x3]
        %v3968 = vunpack.c.l.b16 %v3595
        %v3969 = vunpack.c.l.b16 %v3605
        %v3970 = vunpack.c.l.b16 %v3619
        %v3971 = vunpack.c.l.b16 %v3629
        %v3972 = vunpack.c.l.b16 %v3643
        %v3973 = vunpack.c.l.b16 %v3653
        %v3974 = vunpack.c.l.b16 %v3667
        %v3975 = vunpack.c.l.b16 %v3677
        %v3976 = vunpack.c.l.b16 %v3691
        %v3977 = vunpack.c.l.b16 %v3701
        %v3978 = vunpack.c.l.b16 %v3715
        %v3979 = vunpack.c.l.b16 %v3725
        %v3980 = vunpack.c.l.b16 %v3739
        %v3981 = vunpack.c.l.b16 %v3749
        %v3982 = vunpack.c.l.b16 %v3763
        %v3983 = vunpack.c.l.b16 %v3773
        %v3984 = vunpack.c.l.b16 %v3787
        %v3985 = vunpack.c.l.b16 %v3797
        %v3986 = vunpack.c.l.b16 %v3811
        %v3987 = vunpack.c.l.b16 %v3821
        %v3988 = vunpack.c.l.b16 %v3835
        %v3989 = vunpack.c.l.b16 %v3845
        %v3990 = vunpack.c.l.b16 %v3859
        %v3991 = vunpack.c.l.b16 %v3869
        %v3992 = vunpack.c.l.b16 %v3883
        %v3993 = vunpack.c.l.b16 %v3893
        %v3994 = vunpack.c.l.b16 %v3907
        %v3995 = vunpack.c.l.b16 %v3917
        %v3996 = vunpack.c.l.b16 %v3931
        %v3997 = vunpack.c.l.b16 %v3941
        %v3998 = vunpack.c.l.b16 %v3955
        %v3999 = vunpack.c.l.b16 %v3965
        %v4000 = vpack.c.b16 %v3969, %v3968
        %v4001 = vpack.c.b16 %v3971, %v3970
        %v4002 = vpack.c.b16 %v3973, %v3972
        %v4003 = vpack.c.b16 %v3975, %v3974
        %v4004 = vpack.c.b16 %v3977, %v3976
        %v4005 = vpack.c.b16 %v3979, %v3978
        %v4006 = vpack.c.b16 %v3981, %v3980
        %v4007 = vpack.c.b16 %v3983, %v3982
        %v4008 = vpack.c.b16 %v3985, %v3984
        %v4009 = vpack.c.b16 %v3987, %v3986
        %v4010 = vpack.c.b16 %v3989, %v3988
        %v4011 = vpack.c.b16 %v3991, %v3990
        %v4012 = vpack.c.b16 %v3993, %v3992
        %v4013 = vpack.c.b16 %v3995, %v3994
        %v4014 = vpack.c.b16 %v3997, %v3996
        %v4015 = vpack.c.b16 %v3999, %v3998
        %v4017 = vsel %vm657, %v4000, 0
        %v4020 = vsel %vm657, %v4001, 0
        %v4023 = vsel %vm657, %v4002, 0
        %v4026 = vsel %vm657, %v4003, 0
        %v4029 = vsel %vm657, %v4004, 0
        %v4032 = vsel %vm657, %v4005, 0
        %v4035 = vsel %vm657, %v4006, 0
        %v4038 = vsel %vm657, %v4007, 0
        %v4041 = vsel %vm657, %v4008, 0
        %v4044 = vsel %vm657, %v4009, 0
        %v4047 = vsel %vm657, %v4010, 0
        %v4050 = vsel %vm657, %v4011, 0
        %v4053 = vsel %vm657, %v4012, 0
        %v4056 = vsel %vm657, %v4013, 0
        %v4059 = vsel %vm657, %v4014, 0
        %v4062 = vsel %vm657, %v4015, 0
        %v4065 = vsel %vm706, %v3967, 0
        %4067 = vmatprep.subr.bf16.mxu0 0
        %4068 = vmatpush1.bf16.msra.mxu0 %v4065
        %4069 = vmatprep.subr.bf16.mxu0 0
        %4070 = vmatpush1.bf16.msra.mxu0 0
        %4071 = vmatprep.subr.bf16.mxu0 0
        %4072 = vmatpush1.bf16.msra.mxu0 0
        %4073 = vmatprep.subr.bf16.mxu0 0
        %4074 = vmatpush1.bf16.msra.mxu0 0
        %4075 = vmatprep.subr.bf16.mxu0 0
        %4076 = vmatpush1.bf16.msra.mxu0 0
        %4077 = vmatprep.subr.bf16.mxu0 0
        %4078 = vmatpush1.bf16.msra.mxu0 0
        %4079 = vmatprep.subr.bf16.mxu0 0
        %4080 = vmatpush1.bf16.msra.mxu0 0
        %4081 = vmatprep.subr.bf16.mxu0 0
        %4082 = vmatpush1.bf16.msra.mxu0 0
        %4083 = vmatprep.subr.bf16.mxu0 0
        %4084 = vmatpush1.bf16.msra.mxu0 0
        %4085 = vmatprep.subr.bf16.mxu0 0
        %4086 = vmatpush1.bf16.msra.mxu0 0
        %4087 = vmatprep.subr.bf16.mxu0 0
        %4088 = vmatpush1.bf16.msra.mxu0 0
        %4089 = vmatprep.subr.bf16.mxu0 0
        %4090 = vmatpush1.bf16.msra.mxu0 0
        %4091 = vmatprep.subr.bf16.mxu0 0
        %4092 = vmatpush1.bf16.msra.mxu0 0
        %4093 = vmatprep.subr.bf16.mxu0 0
        %4094 = vmatpush1.bf16.msra.mxu0 0
        %4095 = vmatprep.subr.bf16.mxu0 0
        %4096 = vmatpush1.bf16.msra.mxu0 0
        %4097 = vmatprep.subr.bf16.mxu0 0
        %4098 = vmatpush1.bf16.msra.mxu0 0
        %4099 = vmatprep.mubr.bf16.mxu0 0
        %4100 = vmatmul.mubr.bf16.gmra.mrb[0].mxu0 %v4017
        %v4101 = vpop.f32.mrb[0].mxu0
        %v4102 = vadd.f32 0.0, %v4101
        %v4103 = vpop.f32.mrb[0].mxu0
        %v4104 = vpop.f32.mrb[0].mxu0
        %v4105 = vadd.f32 0.0, %v4104
        %v4106 = vpop.f32.mrb[0].mxu0
        %4107 = vmatprep.mubr.bf16.mxu0 0
        %4108 = vmatmul.mubr.bf16.gmra.mrb[0].mxu0 %v4020
        %v4109 = vpop.f32.mrb[0].mxu0
        %v4110 = vadd.f32 0.0, %v4109
        %v4111 = vpop.f32.mrb[0].mxu0
        %v4112 = vpop.f32.mrb[0].mxu0
        %v4113 = vadd.f32 0.0, %v4112
        %v4114 = vpop.f32.mrb[0].mxu0
        %4115 = vmatprep.mubr.bf16.mxu0 0
        %4116 = vmatmul.mubr.bf16.gmra.mrb[0].mxu0 %v4023
        %v4117 = vpop.f32.mrb[0].mxu0
        %v4118 = vadd.f32 0.0, %v4117
        %v4119 = vpop.f32.mrb[0].mxu0
        %v4120 = vpop.f32.mrb[0].mxu0
        %v4121 = vadd.f32 0.0, %v4120
        %v4122 = vpop.f32.mrb[0].mxu0
        %4123 = vmatprep.mubr.bf16.mxu0 0
        %4124 = vmatmul.mubr.bf16.gmra.mrb[0].mxu0 %v4026
        %v4125 = vpop.f32.mrb[0].mxu0
        %v4126 = vadd.f32 0.0, %v4125
        %v4127 = vpop.f32.mrb[0].mxu0
        %v4128 = vpop.f32.mrb[0].mxu0
        %v4129 = vadd.f32 0.0, %v4128
        %v4130 = vpop.f32.mrb[0].mxu0
        %4131 = vmatprep.mubr.bf16.mxu0 0
        %4132 = vmatmul.mubr.bf16.gmra.mrb[0].mxu0 %v4029
        %v4133 = vpop.f32.mrb[0].mxu0
        %v4134 = vadd.f32 0.0, %v4133
        %v4135 = vpop.f32.mrb[0].mxu0
        %v4136 = vpop.f32.mrb[0].mxu0
        %v4137 = vadd.f32 0.0, %v4136
        %v4138 = vpop.f32.mrb[0].mxu0
        %4139 = vmatprep.mubr.bf16.mxu0 0
        %4140 = vmatmul.mubr.bf16.gmra.mrb[0].mxu0 %v4032
        %v4141 = vpop.f32.mrb[0].mxu0
        %v4142 = vadd.f32 0.0, %v4141
        %v4143 = vpop.f32.mrb[0].mxu0
        %v4144 = vpop.f32.mrb[0].mxu0
        %v4145 = vadd.f32 0.0, %v4144
        %v4146 = vpop.f32.mrb[0].mxu0
        %4147 = vmatprep.mubr.bf16.mxu0 0
        %4148 = vmatmul.mubr.bf16.gmra.mrb[0].mxu0 %v4035
        %v4149 = vpop.f32.mrb[0].mxu0
        %v4150 = vadd.f32 0.0, %v4149
        %v4151 = vpop.f32.mrb[0].mxu0
        %v4152 = vpop.f32.mrb[0].mxu0
        %v4153 = vadd.f32 0.0, %v4152
        %v4154 = vpop.f32.mrb[0].mxu0
        %4155 = vmatprep.mubr.bf16.mxu0 0
        %4156 = vmatmul.mubr.bf16.gmra.mrb[0].mxu0 %v4038
        %v4157 = vpop.f32.mrb[0].mxu0
        %v4158 = vadd.f32 0.0, %v4157
        %v4159 = vpop.f32.mrb[0].mxu0
        %v4160 = vpop.f32.mrb[0].mxu0
        %v4161 = vadd.f32 0.0, %v4160
        %v4162 = vpop.f32.mrb[0].mxu0
        %4163 = vmatprep.mubr.bf16.mxu0 0
        %4164 = vmatmul.mubr.bf16.gmra.mrb[0].mxu0 %v4041
        %v4165 = vpop.f32.mrb[0].mxu0
        %v4166 = vadd.f32 0.0, %v4165
        %v4167 = vpop.f32.mrb[0].mxu0
        %v4168 = vpop.f32.mrb[0].mxu0
        %v4169 = vadd.f32 0.0, %v4168
        %v4170 = vpop.f32.mrb[0].mxu0
        %4171 = vmatprep.mubr.bf16.mxu0 0
        %4172 = vmatmul.mubr.bf16.gmra.mrb[0].mxu0 %v4044
        %v4173 = vpop.f32.mrb[0].mxu0
        %v4174 = vadd.f32 0.0, %v4173
        %v4175 = vpop.f32.mrb[0].mxu0
        %v4176 = vpop.f32.mrb[0].mxu0
        %v4177 = vadd.f32 0.0, %v4176
        %v4178 = vpop.f32.mrb[0].mxu0
        %4179 = vmatprep.mubr.bf16.mxu0 0
        %4180 = vmatmul.mubr.bf16.gmra.mrb[0].mxu0 %v4047
        %v4181 = vpop.f32.mrb[0].mxu0
        %v4182 = vadd.f32 0.0, %v4181
        %v4183 = vpop.f32.mrb[0].mxu0
        %v4184 = vpop.f32.mrb[0].mxu0
        %v4185 = vadd.f32 0.0, %v4184
        %v4186 = vpop.f32.mrb[0].mxu0
        %4187 = vmatprep.mubr.bf16.mxu0 0
        %4188 = vmatmul.mubr.bf16.gmra.mrb[0].mxu0 %v4050
        %v4189 = vpop.f32.mrb[0].mxu0
        %v4190 = vadd.f32 0.0, %v4189
        %v4191 = vpop.f32.mrb[0].mxu0
        %v4192 = vpop.f32.mrb[0].mxu0
        %v4193 = vadd.f32 0.0, %v4192
        %v4194 = vpop.f32.mrb[0].mxu0
        %4195 = vmatprep.mubr.bf16.mxu0 0
        %4196 = vmatmul.mubr.bf16.gmra.mrb[0].mxu0 %v4053
        %v4197 = vpop.f32.mrb[0].mxu0
        %v4198 = vadd.f32 0.0, %v4197
        %v4199 = vpop.f32.mrb[0].mxu0
        %v4200 = vpop.f32.mrb[0].mxu0
        %v4201 = vadd.f32 0.0, %v4200
        %v4202 = vpop.f32.mrb[0].mxu0
        %4203 = vmatprep.mubr.bf16.mxu0 0
        %4204 = vmatmul.mubr.bf16.gmra.mrb[0].mxu0 %v4056
        %v4205 = vpop.f32.mrb[0].mxu0
        %v4206 = vadd.f32 0.0, %v4205
        %v4207 = vpop.f32.mrb[0].mxu0
        %v4208 = vpop.f32.mrb[0].mxu0
        %v4209 = vadd.f32 0.0, %v4208
        %v4210 = vpop.f32.mrb[0].mxu0
        %4211 = vmatprep.mubr.bf16.mxu0 0
        %4212 = vmatmul.mubr.bf16.gmra.mrb[0].mxu0 %v4059
        %v4213 = vpop.f32.mrb[0].mxu0
        %v4214 = vadd.f32 0.0, %v4213
        %v4215 = vpop.f32.mrb[0].mxu0
        %v4216 = vpop.f32.mrb[0].mxu0
        %v4217 = vadd.f32 0.0, %v4216
        %v4218 = vpop.f32.mrb[0].mxu0
        %4219 = vmatprep.mubr.bf16.mxu0 0
        %4220 = vmatmul.mubr.bf16.gmra.mrb[0].mxu0 %v4062
        %v4221 = vpop.f32.mrb[0].mxu0
        %v4222 = vadd.f32 0.0, %v4221
        %v4223 = vpop.f32.mrb[0].mxu0
        %v4224 = vpop.f32.mrb[0].mxu0
        %v4225 = vadd.f32 0.0, %v4224
        %v4226 = vpop.f32.mrb[0].mxu0
        %4227 = vdwg.mxu0
        %v4228 = vadd.f32 %v3502, %v4102
        %v4229 = vadd.f32 %v3503, %v4105
        %v4230 = vadd.f32 %v3504, %v4110
        %v4231 = vadd.f32 %v3505, %v4113
        %v4232 = vadd.f32 %v3506, %v4118
        %v4233 = vadd.f32 %v3507, %v4121
        %v4234 = vadd.f32 %v3508, %v4126
        %v4235 = vadd.f32 %v3509, %v4129
        %v4236 = vadd.f32 %v3510, %v4134
        %v4237 = vadd.f32 %v3511, %v4137
        %v4238 = vadd.f32 %v3512, %v4142
        %v4239 = vadd.f32 %v3513, %v4145
        %v4240 = vadd.f32 %v3514, %v4150
        %v4241 = vadd.f32 %v3515, %v4153
        %v4242 = vadd.f32 %v3516, %v4158
        %v4243 = vadd.f32 %v3517, %v4161
        %v4244 = vadd.f32 %v3518, %v4166
        %v4245 = vadd.f32 %v3519, %v4169
        %v4246 = vadd.f32 %v3520, %v4174
        %v4247 = vadd.f32 %v3521, %v4177
        %v4248 = vadd.f32 %v3522, %v4182
        %v4249 = vadd.f32 %v3523, %v4185
        %v4250 = vadd.f32 %v3524, %v4190
        %v4251 = vadd.f32 %v3525, %v4193
        %v4252 = vadd.f32 %v3526, %v4198
        %v4253 = vadd.f32 %v3527, %v4201
        %v4254 = vadd.f32 %v3528, %v4206
        %v4255 = vadd.f32 %v3529, %v4209
        %v4256 = vadd.f32 %v3530, %v4214
        %v4257 = vadd.f32 %v3531, %v4217
        %v4258 = vadd.f32 %v3532, %v4222
        %v4259 = vadd.f32 %v3533, %v4225
        %v4260 = vld [vmem:[%s3175] sm:$0xe]
        %v4261 = vld [vmem:[%s3175 + $0xc] sm:$0xe]
        %v4262 = vld [vmem:[%s3175 + $0x18] sm:$0xe]
        %v4263 = vld [vmem:[%s3175 + $0x24] sm:$0xe]
        %v4264 = vld [vmem:[%s3175 + $0x30] sm:$0xe]
        %v4265 = vld [vmem:[%s3175 + $0x3c] sm:$0xe]
        %v4266 = vld [vmem:[%s3175 + $0x48] sm:$0xe]
        %v4267 = vld [vmem:[%s3175 + $0x54] sm:$0xe]
        %v4268 = vld [vmem:[%s3175 + $0x60] sm:$0xe]
        %v4269 = vld [vmem:[%s3175 + $0x6c] sm:$0xe]
        %v4270 = vld [vmem:[%s3175 + $0x78] sm:$0xe]
        %v4271 = vld [vmem:[%s3175 + $0x84] sm:$0xe]
        %v4272 = vld [vmem:[%s3175 + $0x90] sm:$0xe]
        %v4273 = vld [vmem:[%s3175 + $0x9c] sm:$0xe]
        %v4274 = vld [vmem:[%s3175 + $0xa8] sm:$0xe]
        %v4275 = vld [vmem:[%s3175 + $0xb4] sm:$0xe]
        %v4324 = vrot.slane %v4260, 5
        %v4325 = vrot.slane %v4324, 4
        %v4326 = vrot.slane %v3535, 5
        %v4327 = vsel %vm1213, %v4325, %v4326
        %v4328 = vrot.slane %v4326, 4
        %v4329 = vrot.slane %v3536, 5
        %v4330 = vsel %vm1213, %v4328, %v4329
        %v4331 = vrot.slane %v4261, 5
        %v4332 = vrot.slane %v4331, 4
        %v4333 = vrot.slane %v3538, 5
        %v4334 = vsel %vm1213, %v4332, %v4333
        %v4335 = vrot.slane %v4333, 4
        %v4336 = vrot.slane %v3539, 5
        %v4337 = vsel %vm1213, %v4335, %v4336
        %v4338 = vrot.slane %v4262, 5
        %v4339 = vrot.slane %v4338, 4
        %v4340 = vrot.slane %v3541, 5
        %v4341 = vsel %vm1213, %v4339, %v4340
        %v4342 = vrot.slane %v4340, 4
        %v4343 = vrot.slane %v3542, 5
        %v4344 = vsel %vm1213, %v4342, %v4343
        %v4345 = vrot.slane %v4263, 5
        %v4346 = vrot.slane %v4345, 4
        %v4347 = vrot.slane %v3544, 5
        %v4348 = vsel %vm1213, %v4346, %v4347
        %v4349 = vrot.slane %v4347, 4
        %v4350 = vrot.slane %v3545, 5
        %v4351 = vsel %vm1213, %v4349, %v4350
        %v4352 = vrot.slane %v4264, 5
        %v4353 = vrot.slane %v4352, 4
        %v4354 = vrot.slane %v3547, 5
        %v4355 = vsel %vm1213, %v4353, %v4354
        %v4356 = vrot.slane %v4354, 4
        %v4357 = vrot.slane %v3548, 5
        %v4358 = vsel %vm1213, %v4356, %v4357
        %v4359 = vrot.slane %v4265, 5
        %v4360 = vrot.slane %v4359, 4
        %v4361 = vrot.slane %v3550, 5
        %v4362 = vsel %vm1213, %v4360, %v4361
        %v4363 = vrot.slane %v4361, 4
        %v4364 = vrot.slane %v3551, 5
        %v4365 = vsel %vm1213, %v4363, %v4364
        %v4366 = vrot.slane %v4266, 5
        %v4367 = vrot.slane %v4366, 4
        %v4368 = vrot.slane %v3553, 5
        %v4369 = vsel %vm1213, %v4367, %v4368
        %v4370 = vrot.slane %v4368, 4
        %v4371 = vrot.slane %v3554, 5
        %v4372 = vsel %vm1213, %v4370, %v4371
        %v4373 = vrot.slane %v4267, 5
        %v4374 = vrot.slane %v4373, 4
        %v4375 = vrot.slane %v3556, 5
        %v4376 = vsel %vm1213, %v4374, %v4375
        %v4377 = vrot.slane %v4375, 4
        %v4378 = vrot.slane %v3557, 5
        %v4379 = vsel %vm1213, %v4377, %v4378
        %v4380 = vrot.slane %v4268, 5
        %v4381 = vrot.slane %v4380, 4
        %v4382 = vrot.slane %v3559, 5
        %v4383 = vsel %vm1213, %v4381, %v4382
        %v4384 = vrot.slane %v4382, 4
        %v4385 = vrot.slane %v3560, 5
        %v4386 = vsel %vm1213, %v4384, %v4385
        %v4387 = vrot.slane %v4269, 5
        %v4388 = vrot.slane %v4387, 4
        %v4389 = vrot.slane %v3562, 5
        %v4390 = vsel %vm1213, %v4388, %v4389
        %v4391 = vrot.slane %v4389, 4
        %v4392 = vrot.slane %v3563, 5
        %v4393 = vsel %vm1213, %v4391, %v4392
        %v4394 = vrot.slane %v4270, 5
        %v4395 = vrot.slane %v4394, 4
        %v4396 = vrot.slane %v3565, 5
        %v4397 = vsel %vm1213, %v4395, %v4396
        %v4398 = vrot.slane %v4396, 4
        %v4399 = vrot.slane %v3566, 5
        %v4400 = vsel %vm1213, %v4398, %v4399
        %v4401 = vrot.slane %v4271, 5
        %v4402 = vrot.slane %v4401, 4
        %v4403 = vrot.slane %v3568, 5
        %v4404 = vsel %vm1213, %v4402, %v4403
        %v4405 = vrot.slane %v4403, 4
        %v4406 = vrot.slane %v3569, 5
        %v4407 = vsel %vm1213, %v4405, %v4406
        %v4408 = vrot.slane %v4272, 5
        %v4409 = vrot.slane %v4408, 4
        %v4410 = vrot.slane %v3571, 5
        %v4411 = vsel %vm1213, %v4409, %v4410
        %v4412 = vrot.slane %v4410, 4
        %v4413 = vrot.slane %v3572, 5
        %v4414 = vsel %vm1213, %v4412, %v4413
        %v4415 = vrot.slane %v4273, 5
        %v4416 = vrot.slane %v4415, 4
        %v4417 = vrot.slane %v3574, 5
        %v4418 = vsel %vm1213, %v4416, %v4417
        %v4419 = vrot.slane %v4417, 4
        %v4420 = vrot.slane %v3575, 5
        %v4421 = vsel %vm1213, %v4419, %v4420
        %v4422 = vrot.slane %v4274, 5
        %v4423 = vrot.slane %v4422, 4
        %v4424 = vrot.slane %v3577, 5
        %v4425 = vsel %vm1213, %v4423, %v4424
        %v4426 = vrot.slane %v4424, 4
        %v4427 = vrot.slane %v3578, 5
        %v4428 = vsel %vm1213, %v4426, %v4427
        %v4429 = vrot.slane %v4275, 5
        %v4430 = vrot.slane %v4429, 4
        %v4431 = vrot.slane %v3580, 5
        %v4432 = vsel %vm1213, %v4430, %v4431
        %v4433 = vrot.slane %v4431, 4
        %v4434 = vrot.slane %v3581, 5
        %v4435 = vsel %vm1213, %v4433, %v4434
        %s4436 = scalar_lea.vmem %s1, 16
        %v4437 = vld [vmem:[%s4436] sm:$0x3]
        %v4438 = vunpack.c.l.b16 %v4327
        %v4439 = vunpack.c.l.b16 %v4330
        %v4440 = vunpack.c.l.b16 %v4334
        %v4441 = vunpack.c.l.b16 %v4337
        %v4442 = vunpack.c.l.b16 %v4341
        %v4443 = vunpack.c.l.b16 %v4344
        %v4444 = vunpack.c.l.b16 %v4348
        %v4445 = vunpack.c.l.b16 %v4351
        %v4446 = vunpack.c.l.b16 %v4355
        %v4447 = vunpack.c.l.b16 %v4358
        %v4448 = vunpack.c.l.b16 %v4362
        %v4449 = vunpack.c.l.b16 %v4365
        %v4450 = vunpack.c.l.b16 %v4369
        %v4451 = vunpack.c.l.b16 %v4372
        %v4452 = vunpack.c.l.b16 %v4376
        %v4453 = vunpack.c.l.b16 %v4379
        %v4454 = vunpack.c.l.b16 %v4383
        %v4455 = vunpack.c.l.b16 %v4386
        %v4456 = vunpack.c.l.b16 %v4390
        %v4457 = vunpack.c.l.b16 %v4393
        %v4458 = vunpack.c.l.b16 %v4397
        %v4459 = vunpack.c.l.b16 %v4400
        %v4460 = vunpack.c.l.b16 %v4404
        %v4461 = vunpack.c.l.b16 %v4407
        %v4462 = vunpack.c.l.b16 %v4411
        %v4463 = vunpack.c.l.b16 %v4414
        %v4464 = vunpack.c.l.b16 %v4418
        %v4465 = vunpack.c.l.b16 %v4421
        %v4466 = vunpack.c.l.b16 %v4425
        %v4467 = vunpack.c.l.b16 %v4428
        %v4468 = vunpack.c.l.b16 %v4432
        %v4469 = vunpack.c.l.b16 %v4435
        %v4470 = vpack.c.b16 %v4439, %v4438
        %v4471 = vpack.c.b16 %v4441, %v4440
        %v4472 = vpack.c.b16 %v4443, %v4442
        %v4473 = vpack.c.b16 %v4445, %v4444
        %v4474 = vpack.c.b16 %v4447, %v4446
        %v4475 = vpack.c.b16 %v4449, %v4448
        %v4476 = vpack.c.b16 %v4451, %v4450
        %v4477 = vpack.c.b16 %v4453, %v4452
        %v4478 = vpack.c.b16 %v4455, %v4454
        %v4479 = vpack.c.b16 %v4457, %v4456
        %v4480 = vpack.c.b16 %v4459, %v4458
        %v4481 = vpack.c.b16 %v4461, %v4460
        %v4482 = vpack.c.b16 %v4463, %v4462
        %v4483 = vpack.c.b16 %v4465, %v4464
        %v4484 = vpack.c.b16 %v4467, %v4466
        %v4485 = vpack.c.b16 %v4469, %v4468
        %v4487 = vsel %vm657, %v4470, 0
        %v4490 = vsel %vm657, %v4471, 0
        %v4493 = vsel %vm657, %v4472, 0
        %v4496 = vsel %vm657, %v4473, 0
        %v4499 = vsel %vm657, %v4474, 0
        %v4502 = vsel %vm657, %v4475, 0
        %v4505 = vsel %vm657, %v4476, 0
        %v4508 = vsel %vm657, %v4477, 0
        %v4511 = vsel %vm657, %v4478, 0
        %v4514 = vsel %vm657, %v4479, 0
        %v4517 = vsel %vm657, %v4480, 0
        %v4520 = vsel %vm657, %v4481, 0
        %v4523 = vsel %vm657, %v4482, 0
        %v4526 = vsel %vm657, %v4483, 0
        %v4529 = vsel %vm657, %v4484, 0
        %v4532 = vsel %vm657, %v4485, 0
        %v4535 = vsel %vm706, %v4437, 0
        %4537 = vmatprep.subr.bf16.mxu0 0
        %4538 = vmatpush1.bf16.msra.mxu0 %v4535
        %4539 = vmatprep.subr.bf16.mxu0 0
        %4540 = vmatpush1.bf16.msra.mxu0 0
        %4541 = vmatprep.subr.bf16.mxu0 0
        %4542 = vmatpush1.bf16.msra.mxu0 0
        %4543 = vmatprep.subr.bf16.mxu0 0
        %4544 = vmatpush1.bf16.msra.mxu0 0
        %4545 = vmatprep.subr.bf16.mxu0 0
        %4546 = vmatpush1.bf16.msra.mxu0 0
        %4547 = vmatprep.subr.bf16.mxu0 0
        %4548 = vmatpush1.bf16.msra.mxu0 0
        %4549 = vmatprep.subr.bf16.mxu0 0
        %4550 = vmatpush1.bf16.msra.mxu0 0
        %4551 = vmatprep.subr.bf16.mxu0 0
        %4552 = vmatpush1.bf16.msra.mxu0 0
        %4553 = vmatprep.subr.bf16.mxu0 0
        %4554 = vmatpush1.bf16.msra.mxu0 0
        %4555 = vmatprep.subr.bf16.mxu0 0
        %4556 = vmatpush1.bf16.msra.mxu0 0
        %4557 = vmatprep.subr.bf16.mxu0 0
        %4558 = vmatpush1.bf16.msra.mxu0 0
        %4559 = vmatprep.subr.bf16.mxu0 0
        %4560 = vmatpush1.bf16.msra.mxu0 0
        %4561 = vmatprep.subr.bf16.mxu0 0
        %4562 = vmatpush1.bf16.msra.mxu0 0
        %4563 = vmatprep.subr.bf16.mxu0 0
        %4564 = vmatpush1.bf16.msra.mxu0 0
        %4565 = vmatprep.subr.bf16.mxu0 0
        %4566 = vmatpush1.bf16.msra.mxu0 0
        %4567 = vmatprep.subr.bf16.mxu0 0
        %4568 = vmatpush1.bf16.msra.mxu0 0
        %4569 = vmatprep.mubr.bf16.mxu0 0
        %4570 = vmatmul.mubr.bf16.gmra.mrb[0].mxu0 %v4487
        %v4571 = vpop.f32.mrb[0].mxu0
        %v4572 = vadd.f32 0.0, %v4571
        %v4573 = vpop.f32.mrb[0].mxu0
        %v4574 = vpop.f32.mrb[0].mxu0
        %v4575 = vadd.f32 0.0, %v4574
        %v4576 = vpop.f32.mrb[0].mxu0
        %4577 = vmatprep.mubr.bf16.mxu0 0
        %4578 = vmatmul.mubr.bf16.gmra.mrb[0].mxu0 %v4490
        %v4579 = vpop.f32.mrb[0].mxu0
        %v4580 = vadd.f32 0.0, %v4579
        %v4581 = vpop.f32.mrb[0].mxu0
        %v4582 = vpop.f32.mrb[0].mxu0
        %v4583 = vadd.f32 0.0, %v4582
        %v4584 = vpop.f32.mrb[0].mxu0
        %4585 = vmatprep.mubr.bf16.mxu0 0
        %4586 = vmatmul.mubr.bf16.gmra.mrb[0].mxu0 %v4493
        %v4587 = vpop.f32.mrb[0].mxu0
        %v4588 = vadd.f32 0.0, %v4587
        %v4589 = vpop.f32.mrb[0].mxu0
        %v4590 = vpop.f32.mrb[0].mxu0
        %v4591 = vadd.f32 0.0, %v4590
        %v4592 = vpop.f32.mrb[0].mxu0
        %4593 = vmatprep.mubr.bf16.mxu0 0
        %4594 = vmatmul.mubr.bf16.gmra.mrb[0].mxu0 %v4496
        %v4595 = vpop.f32.mrb[0].mxu0
        %v4596 = vadd.f32 0.0, %v4595
        %v4597 = vpop.f32.mrb[0].mxu0
        %v4598 = vpop.f32.mrb[0].mxu0
        %v4599 = vadd.f32 0.0, %v4598
        %v4600 = vpop.f32.mrb[0].mxu0
        %4601 = vmatprep.mubr.bf16.mxu0 0
        %4602 = vmatmul.mubr.bf16.gmra.mrb[0].mxu0 %v4499
        %v4603 = vpop.f32.mrb[0].mxu0
        %v4604 = vadd.f32 0.0, %v4603
        %v4605 = vpop.f32.mrb[0].mxu0
        %v4606 = vpop.f32.mrb[0].mxu0
        %v4607 = vadd.f32 0.0, %v4606
        %v4608 = vpop.f32.mrb[0].mxu0
        %4609 = vmatprep.mubr.bf16.mxu0 0
        %4610 = vmatmul.mubr.bf16.gmra.mrb[0].mxu0 %v4502
        %v4611 = vpop.f32.mrb[0].mxu0
        %v4612 = vadd.f32 0.0, %v4611
        %v4613 = vpop.f32.mrb[0].mxu0
        %v4614 = vpop.f32.mrb[0].mxu0
        %v4615 = vadd.f32 0.0, %v4614
        %v4616 = vpop.f32.mrb[0].mxu0
        %4617 = vmatprep.mubr.bf16.mxu0 0
        %4618 = vmatmul.mubr.bf16.gmra.mrb[0].mxu0 %v4505
        %v4619 = vpop.f32.mrb[0].mxu0
        %v4620 = vadd.f32 0.0, %v4619
        %v4621 = vpop.f32.mrb[0].mxu0
        %v4622 = vpop.f32.mrb[0].mxu0
        %v4623 = vadd.f32 0.0, %v4622
        %v4624 = vpop.f32.mrb[0].mxu0
        %4625 = vmatprep.mubr.bf16.mxu0 0
        %4626 = vmatmul.mubr.bf16.gmra.mrb[0].mxu0 %v4508
        %v4627 = vpop.f32.mrb[0].mxu0
        %v4628 = vadd.f32 0.0, %v4627
        %v4629 = vpop.f32.mrb[0].mxu0
        %v4630 = vpop.f32.mrb[0].mxu0
        %v4631 = vadd.f32 0.0, %v4630
        %v4632 = vpop.f32.mrb[0].mxu0
        %4633 = vmatprep.mubr.bf16.mxu0 0
        %4634 = vmatmul.mubr.bf16.gmra.mrb[0].mxu0 %v4511
        %v4635 = vpop.f32.mrb[0].mxu0
        %v4636 = vadd.f32 0.0, %v4635
        %v4637 = vpop.f32.mrb[0].mxu0
        %v4638 = vpop.f32.mrb[0].mxu0
        %v4639 = vadd.f32 0.0, %v4638
        %v4640 = vpop.f32.mrb[0].mxu0
        %4641 = vmatprep.mubr.bf16.mxu0 0
        %4642 = vmatmul.mubr.bf16.gmra.mrb[0].mxu0 %v4514
        %v4643 = vpop.f32.mrb[0].mxu0
        %v4644 = vadd.f32 0.0, %v4643
        %v4645 = vpop.f32.mrb[0].mxu0
        %v4646 = vpop.f32.mrb[0].mxu0
        %v4647 = vadd.f32 0.0, %v4646
        %v4648 = vpop.f32.mrb[0].mxu0
        %4649 = vmatprep.mubr.bf16.mxu0 0
        %4650 = vmatmul.mubr.bf16.gmra.mrb[0].mxu0 %v4517
        %v4651 = vpop.f32.mrb[0].mxu0
        %v4652 = vadd.f32 0.0, %v4651
        %v4653 = vpop.f32.mrb[0].mxu0
        %v4654 = vpop.f32.mrb[0].mxu0
        %v4655 = vadd.f32 0.0, %v4654
        %v4656 = vpop.f32.mrb[0].mxu0
        %4657 = vmatprep.mubr.bf16.mxu0 0
        %4658 = vmatmul.mubr.bf16.gmra.mrb[0].mxu0 %v4520
        %v4659 = vpop.f32.mrb[0].mxu0
        %v4660 = vadd.f32 0.0, %v4659
        %v4661 = vpop.f32.mrb[0].mxu0
        %v4662 = vpop.f32.mrb[0].mxu0
        %v4663 = vadd.f32 0.0, %v4662
        %v4664 = vpop.f32.mrb[0].mxu0
        %4665 = vmatprep.mubr.bf16.mxu0 0
        %4666 = vmatmul.mubr.bf16.gmra.mrb[0].mxu0 %v4523
        %v4667 = vpop.f32.mrb[0].mxu0
        %v4668 = vadd.f32 0.0, %v4667
        %v4669 = vpop.f32.mrb[0].mxu0
        %v4670 = vpop.f32.mrb[0].mxu0
        %v4671 = vadd.f32 0.0, %v4670
        %v4672 = vpop.f32.mrb[0].mxu0
        %4673 = vmatprep.mubr.bf16.mxu0 0
        %4674 = vmatmul.mubr.bf16.gmra.mrb[0].mxu0 %v4526
        %v4675 = vpop.f32.mrb[0].mxu0
        %v4676 = vadd.f32 0.0, %v4675
        %v4677 = vpop.f32.mrb[0].mxu0
        %v4678 = vpop.f32.mrb[0].mxu0
        %v4679 = vadd.f32 0.0, %v4678
        %v4680 = vpop.f32.mrb[0].mxu0
        %4681 = vmatprep.mubr.bf16.mxu0 0
        %4682 = vmatmul.mubr.bf16.gmra.mrb[0].mxu0 %v4529
        %v4683 = vpop.f32.mrb[0].mxu0
        %v4684 = vadd.f32 0.0, %v4683
        %v4685 = vpop.f32.mrb[0].mxu0
        %v4686 = vpop.f32.mrb[0].mxu0
        %v4687 = vadd.f32 0.0, %v4686
        %v4688 = vpop.f32.mrb[0].mxu0
        %4689 = vmatprep.mubr.bf16.mxu0 0
        %4690 = vmatmul.mubr.bf16.gmra.mrb[0].mxu0 %v4532
        %v4691 = vpop.f32.mrb[0].mxu0
        %v4692 = vadd.f32 0.0, %v4691
        %v4693 = vpop.f32.mrb[0].mxu0
        %v4694 = vpop.f32.mrb[0].mxu0
        %v4695 = vadd.f32 0.0, %v4694
        %v4696 = vpop.f32.mrb[0].mxu0
        %4697 = vdwg.mxu0
        %v4698 = vadd.f32 %v4228, %v4572
        %v4699 = vadd.f32 %v4229, %v4575
        %v4700 = vadd.f32 %v4230, %v4580
        %v4701 = vadd.f32 %v4231, %v4583
        %v4702 = vadd.f32 %v4232, %v4588
        %v4703 = vadd.f32 %v4233, %v4591
        %v4704 = vadd.f32 %v4234, %v4596
        %v4705 = vadd.f32 %v4235, %v4599
        %v4706 = vadd.f32 %v4236, %v4604
        %v4707 = vadd.f32 %v4237, %v4607
        %v4708 = vadd.f32 %v4238, %v4612
        %v4709 = vadd.f32 %v4239, %v4615
        %v4710 = vadd.f32 %v4240, %v4620
        %v4711 = vadd.f32 %v4241, %v4623
        %v4712 = vadd.f32 %v4242, %v4628
        %v4713 = vadd.f32 %v4243, %v4631
        %v4714 = vadd.f32 %v4244, %v4636
        %v4715 = vadd.f32 %v4245, %v4639
        %v4716 = vadd.f32 %v4246, %v4644
        %v4717 = vadd.f32 %v4247, %v4647
        %v4718 = vadd.f32 %v4248, %v4652
        %v4719 = vadd.f32 %v4249, %v4655
        %v4720 = vadd.f32 %v4250, %v4660
        %v4721 = vadd.f32 %v4251, %v4663
        %v4722 = vadd.f32 %v4252, %v4668
        %v4723 = vadd.f32 %v4253, %v4671
        %v4724 = vadd.f32 %v4254, %v4676
        %v4725 = vadd.f32 %v4255, %v4679
        %v4726 = vadd.f32 %v4256, %v4684
        %v4727 = vadd.f32 %v4257, %v4687
        %v4728 = vadd.f32 %v4258, %v4692
        %v4729 = vadd.f32 %v4259, %v4695
        %v4730 = vld [vmem:[%s2] sm:$0x1]
        %v4732 = vlaneseq
        %v4733 = vshrl.u32 %v4732, 7
        %v4734 = vsub.s32 0, %v4733
        %v4735 = vrot.slane %v4730, %v4734
        %v4737 = vadd.f32 %v4698, %v4735
        %v4738 = vadd.f32 %v4699, %v4735
        %v4739 = vadd.f32 %v4700, %v4735
        %v4740 = vadd.f32 %v4701, %v4735
        %v4741 = vadd.f32 %v4702, %v4735
        %v4742 = vadd.f32 %v4703, %v4735
        %v4743 = vadd.f32 %v4704, %v4735
        %v4744 = vadd.f32 %v4705, %v4735
        %v4745 = vadd.f32 %v4706, %v4735
        %v4746 = vadd.f32 %v4707, %v4735
        %v4747 = vadd.f32 %v4708, %v4735
        %v4748 = vadd.f32 %v4709, %v4735
        %v4749 = vadd.f32 %v4710, %v4735
        %v4750 = vadd.f32 %v4711, %v4735
        %v4751 = vadd.f32 %v4712, %v4735
        %v4752 = vadd.f32 %v4713, %v4735
        %v4753 = vadd.f32 %v4714, %v4735
        %v4754 = vadd.f32 %v4715, %v4735
        %v4755 = vadd.f32 %v4716, %v4735
        %v4756 = vadd.f32 %v4717, %v4735
        %v4757 = vadd.f32 %v4718, %v4735
        %v4758 = vadd.f32 %v4719, %v4735
        %v4759 = vadd.f32 %v4720, %v4735
        %v4760 = vadd.f32 %v4721, %v4735
        %v4761 = vadd.f32 %v4722, %v4735
        %v4762 = vadd.f32 %v4723, %v4735
        %v4763 = vadd.f32 %v4724, %v4735
        %v4764 = vadd.f32 %v4725, %v4735
        %v4765 = vadd.f32 %v4726, %v4735
        %v4766 = vadd.f32 %v4727, %v4735
        %v4767 = vadd.f32 %v4728, %v4735
        %v4768 = vadd.f32 %v4729, %v4735
        %v4769 = vmax.f32 %v4737, 0.0
        %v4770 = vmax.f32 %v4738, 0.0
        %v4771 = vmax.f32 %v4739, 0.0
        %v4772 = vmax.f32 %v4740, 0.0
        %v4773 = vmax.f32 %v4741, 0.0
        %v4774 = vmax.f32 %v4742, 0.0
        %v4775 = vmax.f32 %v4743, 0.0
        %v4776 = vmax.f32 %v4744, 0.0
        %v4777 = vmax.f32 %v4745, 0.0
        %v4778 = vmax.f32 %v4746, 0.0
        %v4779 = vmax.f32 %v4747, 0.0
        %v4780 = vmax.f32 %v4748, 0.0
        %v4781 = vmax.f32 %v4749, 0.0
        %v4782 = vmax.f32 %v4750, 0.0
        %v4783 = vmax.f32 %v4751, 0.0
        %v4784 = vmax.f32 %v4752, 0.0
        %v4785 = vmax.f32 %v4753, 0.0
        %v4786 = vmax.f32 %v4754, 0.0
        %v4787 = vmax.f32 %v4755, 0.0
        %v4788 = vmax.f32 %v4756, 0.0
        %v4789 = vmax.f32 %v4757, 0.0
        %v4790 = vmax.f32 %v4758, 0.0
        %v4791 = vmax.f32 %v4759, 0.0
        %v4792 = vmax.f32 %v4760, 0.0
        %v4793 = vmax.f32 %v4761, 0.0
        %v4794 = vmax.f32 %v4762, 0.0
        %v4795 = vmax.f32 %v4763, 0.0
        %v4796 = vmax.f32 %v4764, 0.0
        %v4797 = vmax.f32 %v4765, 0.0
        %v4798 = vmax.f32 %v4766, 0.0
        %v4799 = vmax.f32 %v4767, 0.0
        %v4800 = vmax.f32 %v4768, 0.0
        %4801 = vst [vmem:[%s163] sm:$0xff] %v4769
        %4802 = vst [vmem:[%s163 + $0x8] sm:$0xff] %v4770
        %4803 = vst [vmem:[%s163 + $0x10] sm:$0xff] %v4771
        %4804 = vst [vmem:[%s163 + $0x18] sm:$0xff] %v4772
        %4805 = vst [vmem:[%s163 + $0x20] sm:$0xff] %v4773
        %4806 = vst [vmem:[%s163 + $0x28] sm:$0xff] %v4774
        %4807 = vst [vmem:[%s163 + $0x30] sm:$0xff] %v4775
        %4808 = vst [vmem:[%s163 + $0x38] sm:$0xff] %v4776
        %4809 = vst [vmem:[%s163 + $0x40] sm:$0xff] %v4777
        %4810 = vst [vmem:[%s163 + $0x48] sm:$0xff] %v4778
        %4811 = vst [vmem:[%s163 + $0x50] sm:$0xff] %v4779
        %4812 = vst [vmem:[%s163 + $0x58] sm:$0xff] %v4780
        %4813 = vst [vmem:[%s163 + $0x60] sm:$0xff] %v4781
        %4814 = vst [vmem:[%s163 + $0x68] sm:$0xff] %v4782
        %4815 = vst [vmem:[%s163 + $0x70] sm:$0xff] %v4783
        %4816 = vst [vmem:[%s163 + $0x78] sm:$0xff] %v4784
        %4817 = vst [vmem:[%s163 + $0x80] sm:$0xff] %v4785
        %4818 = vst [vmem:[%s163 + $0x88] sm:$0xff] %v4786
        %4819 = vst [vmem:[%s163 + $0x90] sm:$0xff] %v4787
        %4820 = vst [vmem:[%s163 + $0x98] sm:$0xff] %v4788
        %4821 = vst [vmem:[%s163 + $0xa0] sm:$0xff] %v4789
        %4822 = vst [vmem:[%s163 + $0xa8] sm:$0xff] %v4790
        %4823 = vst [vmem:[%s163 + $0xb0] sm:$0xff] %v4791
        %4824 = vst [vmem:[%s163 + $0xb8] sm:$0xff] %v4792
        %4825 = vst [vmem:[%s163 + $0xc0] sm:$0xff] %v4793
        %4826 = vst [vmem:[%s163 + $0xc8] sm:$0xff] %v4794
        %4827 = vst [vmem:[%s163 + $0xd0] sm:$0xff] %v4795
        %4828 = vst [vmem:[%s163 + $0xd8] sm:$0xff] %v4796
        %4829 = vst [vmem:[%s163 + $0xe0] sm:$0xff] %v4797
        %4830 = vst [vmem:[%s163 + $0xe8] sm:$0xff] %v4798
        %4831 = vst [vmem:[%s163 + $0xf0] sm:$0xff] %v4799
        %4832 = vst [vmem:[%s163 + $0xf8] sm:$0xff] %v4800
        %s4833 = sand.u32 %s93, 1
        %s4834 = scalar_lea.sflag [#allocation3], %s4833
        %s4835 = sand.u32 %s93, 1
        %s4836 = smul.addr %s4835, 256
        %s4837 = scalar_lea.vmem [#allocation2], %s4836
        // Predicated region
        $region33: #{tpu_custom_call.1} parent=31 // pred_check
          %p4838 = pneg %p103
        $region34: #{tpu_custom_call.1} parent=31 // pred_check_branch
          %4840 = sbr.rel (%p4838) target = $region36
        $region35: #{tpu_custom_call.1} parent=31 // pred_region
          %s4841 = smul.u32 32, %s17
          %s4843 = ssub.s32 4096, 4096
          %4844 = vsyncadd %s4834, %s4843
          %s4845 = smul.addr %s4841, 128
          %s4846 = scalar_lea.hbm %s3, %s4845
          %s4847 = sshll.u32 %s4837, 4
          %s4848 = int_to_ptr.vmem [resolvable:$true] %s4847
          %4853 = dma.vmem_to_hbm [thread:$0]  %s4848, 4096, %s4846, %s4834, 128, 128, 8
        $region36: #{tpu_custom_call.1} parent=31 // pred_fallthru
          _
      $region32: #{tpu_custom_call.1} parent=5 // pred_fallthru
        _
      %p4854 = scmp.le.s32.totalorder 2, %s12
      // Predicated region
      $region37: #{tpu_custom_call.1} parent=5 // pred_check
        %p4855 = pneg %p4854
      $region38: #{tpu_custom_call.1} parent=5 // pred_check_branch
        %4857 = sbr.rel (%p4855) target = $region40
      $region39: #{tpu_custom_call.1} parent=5 // pred_region
        %s4858 = ssub.s32 %s12, 2
        // Predicated region
        $region41: #{tpu_custom_call.1} parent=39 // pred_check
          %p4859 = pneg %p109
        $region42: #{tpu_custom_call.1} parent=39 // pred_check_branch
          %4861 = sbr.rel (%p4859) target = $region44
        $region43: #{tpu_custom_call.1} parent=39 // pred_region
          %s4862 = sand.u32 %s94, 1
          %s4863 = scalar_lea.sflag [#allocation3], %s4862
          %s4864 = sand.u32 %s94, 1
          %s4865 = smul.addr %s4864, 256
          %s4866 = scalar_lea.vmem [#allocation2], %s4865
          %4867 = dma.done %s4863, 4096
        $region44: #{tpu_custom_call.1} parent=39 // pred_fallthru
          _
      $region40: #{tpu_custom_call.1} parent=5 // pred_fallthru
        _
    $region6: #{tpu_custom_call.1} parent=1 // loop_footer
      %s16 = sadd.s32 1, %s12
    $region7: #{tpu_custom_call.1} parent=1 // loop_footer_branch
      %11 = sbr.rel target = $region3
    $region8: #{tpu_custom_call.1} parent=1 // loop_exit
      _
    %4868 = vsyncpa [#allocation3], 1
    %s4869 = scalar_lea.sflag [#allocation3], 1
    %4870 = vsyncpa %s4869, 1

</llo_original>
